<compile_context>
chip_gen: v7x
topology: tpu7x:2x2x1
jax: 0.10.0
libtpu: 0.0.40
codegen_flags: <defaults>
</compile_context>

<pallas_src>
import functools

import jax
import jax.numpy as jnp
from jax.experimental import pallas as pl
from jax.experimental.pallas import tpu as pltpu

NEG_SLOPE = 0.01     # torch.nn.LeakyReLU default
LN_EPS = 1e-6        # LayerNorm eps used by the module
OUT_PAD = 128        # lane-dense width of the padded output slab
TARGET_ROWS = 2048   # ~rows (BT*N) per grid step: amortizes ~0.35us/step overhead
                     # while keeping live f32 intermediates ~15-20 MiB.


def _leaky(h):
    return jnp.where(h >= 0, h, NEG_SLOPE * h)


def _layernorm(h, gamma, beta):
    mu = jnp.mean(h, axis=-1, keepdims=True)
    var = jnp.mean((h - mu) ** 2, axis=-1, keepdims=True)
    return (h - mu) * jax.lax.rsqrt(var + LN_EPS) * gamma + beta


def _signnet_kernel(x_ref, pvec_ref, wmats_ref, wr_ref, wc1_ref, wc2_ref,
                    wclfn_ref, out_ref, *, n_set, n_ch, w1, w2, vec_base):
    N, C, W1, W2 = n_set, n_ch, w1, w2
    ENC1 = C * W1
    ROWS = x_ref.shape[0]          # rows (= BT*N) handled this grid step
    BT = ROWS // N

    x2d = x_ref[...]               # (ROWS, C)

    # ---- unpack the packed parameter slabs (static slices, fetched once) ---
    pv = pvec_ref[...]                         # (vec_base + 16, max(ENC1, 128))
    w1bd = pv[0:C, :ENC1]                      # block-diag Linear(1, W1), (C, ENC1)

    def vrow(i, width):                        # one packed row vector
        r = vec_base + i
        return pv[r:r + 1, :width]

    b1e_t = vrow(0, ENC1)                      # enc Linear(1,W1) bias, tiled per channel
    g1_t = vrow(1, ENC1)                       # enc LayerNorm gamma, tiled
    be1_t = vrow(2, ENC1)                      # enc LayerNorm beta, tiled
    b2e_t = vrow(3, ENC1)                      # enc Linear(W1,W2) bias, tiled (zero-padded)
    br = vrow(4, C)                            # rho bias
    bc1 = vrow(5, W1)                          # classifier lin1 bias
    gc = vrow(6, W1)                           # classifier LayerNorm gamma
    bec = vrow(7, W1)                          # classifier LayerNorm beta
    bc2 = vrow(8, W2)                          # classifier lin2 bias
    bclf = vrow(9, OUT_PAD)                    # classifier head bias (zero-padded)

    mavg = wmats_ref[0]                        # (ENC1, ENC1) block-diag group-averaging
    w2bd = wmats_ref[1]                        # (ENC1, ENC1) block-diag Linear(W1,W2),
                                               #   lanes >= C*W2 are zero

    # ---- enc(+x) and enc(-x), fused and lane-dense -------------------------
    v = jnp.concatenate([x2d, -x2d], axis=0)   # (2R, C) sign stack (rows [0:R]=+x)
    h = jnp.dot(v, w1bd, preferred_element_type=jnp.float32) + b1e_t   # (2R, ENC1)
    h = _leaky(h)
    # Per-channel LayerNorm over each W1-lane group: statistics via the MXU
    # block-averaging matmul (segmented means -- no cross-channel leakage).
    mu = jnp.dot(h, mavg, preferred_element_type=jnp.float32)
    d = h - mu
    var = jnp.dot(d * d, mavg, preferred_element_type=jnp.float32)
    h = d * jax.lax.rsqrt(var + LN_EPS) * g1_t + be1_t
    z = _leaky(jnp.dot(h, w2bd, preferred_element_type=jnp.float32) + b2e_t)  # (2R, ENC1)

    # enc(x) + enc(-x); lanes >= C*W2 are exactly zero (zero weight/bias -> leaky(0)=0).
    zsum = z[0:ROWS, :] + z[ROWS:2 * ROWS, :]                                 # (R, ENC1)

    # ---- rho: Linear(C*W2, C) + LeakyReLU, single matmul --------------------
    rho = _leaky(jnp.dot(zsum, wr_ref[...],
                         preferred_element_type=jnp.float32) + br)           # (R, C)

    # ---- DeepSets classifier (norm=True, dropout=0.0, readout='mean') ------
    hc = _leaky(jnp.dot(rho, wc1_ref[...],
                        preferred_element_type=jnp.float32) + bc1)           # (R, W1)
    hc = _layernorm(hc, gc, bec)
    hc = jnp.dot(hc, wc2_ref[...], preferred_element_type=jnp.float32) + bc2  # (R, W2)
    # Set readout: 1/N is folded into wclfn host-side, so only a segment-sum
    # over the N set rows remains (N=8 keeps the sublane reduce relayout-free).
    pooled = jnp.sum(hc.reshape(BT, N, W2), axis=1)                           # (BT, W2)
    out = jnp.dot(pooled, wclfn_ref[...],
                  preferred_element_type=jnp.float32) + bclf                  # (BT, 128)
    out_ref[...] = out                          # lane-dense store


def deepsets_signnet(x, p):
    B, N, C = x.shape
    W1 = p['w1e'].shape[1]
    W2 = p['w2e'].shape[1]
    OUT = p['wclf'].shape[1]
    ENC1 = C * W1
    assert W2 <= W1, "packing assumes width2 <= width1 (lane-pads W2 blocks into W1 blocks)"
    assert OUT <= OUT_PAD and C <= OUT_PAD

    # --- host-side block-diagonal / packed parameters (DMA'd once) ----------
    eye_c = jnp.eye(C, dtype=jnp.float32)
    w1bd = jnp.kron(eye_c, p['w1e'])                                   # (C, ENC1)
    mavg = jnp.kron(eye_c, jnp.full((W1, W1), 1.0 / W1, jnp.float32))  # (ENC1, ENC1)
    w2bd = jnp.kron(eye_c, p['w2e'])                                   # (ENC1, C*W2)
    w2bd = jnp.pad(w2bd, ((0, 0), (0, ENC1 - C * W2)))                 # lane-pad
    wmats = jnp.stack([mavg, w2bd], axis=0)                            # (2, ENC1, ENC1)
    wr_p = jnp.pad(p['wr'], ((0, ENC1 - C * W2), (0, 0)))              # (ENC1, C)
    wclfn = jnp.pad(p['wclf'] / N, ((0, 0), (0, OUT_PAD - OUT)))       # (W2, 128), 1/N folded

    # Row-vector slab: w1bd in the first (sublane-aligned) section, then all
    # bias / affine vectors, each zero-padded to the slab lane width.
    PW = max(ENC1, OUT_PAD)
    vec_base = ((C + 7) // 8) * 8
    pvec = jnp.zeros((vec_base + 16, PW), jnp.float32)
    pvec = pvec.at[0:C, 0:ENC1].set(w1bd)
    tile_c = lambda v: jnp.tile(v, (1, C))
    bclf_pad = jnp.pad(p['bclf'], ((0, 0), (0, OUT_PAD - OUT)))
    vec_rows = [tile_c(p['b1e']), tile_c(p['g1']), tile_c(p['be1']), tile_c(p['b2e']),
                p['br'], p['bc1'], p['gc'], p['bec'], p['bc2'], bclf_pad]
    for i, v in enumerate(vec_rows):
        pvec = pvec.at[vec_base + i, 0:v.shape[1]].set(v[0])

    # --- batch/row blocking --------------------------------------------------
    # x is flattened to (B*N, C) rows; each grid step takes BT whole batch
    # elements (BT*N rows) so the set readout never straddles a block.
    xr = x.reshape(B * N, C)
    if B >= 16:
        bt_target = max(8, (TARGET_ROWS // N) // 8 * 8)   # ~TARGET_ROWS rows, mult of 8
        bt_cap = max(8, (B // 2) // 8 * 8)                # >= 2 grid steps for v7x megacore
        BT = min(bt_target, bt_cap)
        Bp = pl.cdiv(B, BT) * BT
        if Bp != B:
            xr = jnp.pad(xr, ((0, (Bp - B) * N), (0, 0)))
    else:
        # Tiny batch: one full block (always layout-legal); nothing to gain
        # from splitting < 16 batch elements across cores.
        BT, Bp = B, B
    ROWS_T = BT * N
    steps = Bp // BT

    params = [pvec, wmats, wr_p, p['wc1'], p['wc2'], wclfn]
    in_specs = [pl.BlockSpec((ROWS_T, C), lambda b: (b, 0))]           # x: row-blocked
    for arr in params:                                                 # weights: full blocks,
        in_specs.append(pl.BlockSpec(arr.shape,                        # constant index -> one DMA
                                     lambda b, _nd=arr.ndim: (0,) * _nd))

    kern = functools.partial(_signnet_kernel, n_set=N, n_ch=C, w1=W1, w2=W2,
                             vec_base=vec_base)
    out = pl.pallas_call(
        kern,
        out_shape=jax.ShapeDtypeStruct((Bp, OUT_PAD), jnp.float32),
        grid_spec=pltpu.PrefetchScalarGridSpec(
            num_scalar_prefetch=0,
            grid=(steps,),
            in_specs=in_specs,
            out_specs=pl.BlockSpec((BT, OUT_PAD), lambda b: (b, 0)),
        ),
        compiler_params=pltpu.CompilerParams(
            dimension_semantics=("parallel",),      # batch axis: shard across v7x's 2 TCs
            vmem_limit_bytes=48 * 1024 * 1024,      # covers v5e's 16 MiB scoped default
        ),                                          # at ~2048-row blocks; < v7x's 64 MiB
    )(xr, *params)
    return out[:B, :OUT]


def reference(x, p):
    """Pure-JAX reference mirroring the PyTorch forward."""
    def leaky(v):
        return jnp.where(v >= 0, v, NEG_SLOPE * v)

    def ln(v, g, b):
        mu = jnp.mean(v, -1, keepdims=True)
        var = jnp.mean((v - mu) ** 2, -1, keepdims=True)
        return (v - mu) * jax.lax.rsqrt(var + LN_EPS) * g + b

    def enc(v):                                  # v: (B, N, C, 1)
        h = v * p['w1e'] + p['b1e']              # Linear(1, W1)
        h = leaky(h)
        h = ln(h, p['g1'], p['be1'])
        return leaky(h @ p['w2e'] + p['b2e'])    # Linear(W1, W2) + LeakyReLU

    B, N, C = x.shape
    x4 = x[..., None]
    z = enc(x4) + enc(-x4)                       # (B, N, C, W2)
    z2 = z.reshape(B, N, -1)                     # (B, N, C*W2)
    r = leaky(z2 @ p['wr'] + p['br'])            # rho -> (B, N, C)
    h = leaky(r @ p['wc1'] + p['bc1'])
    h = ln(h, p['gc'], p['bec'])
    h = h @ p['wc2'] + p['bc2']                  # (B, N, W2)
    pooled = jnp.mean(h, axis=1)                 # mean readout over set dim
    return pooled @ p['wclf'] + p['bclf']        # (B, OUT)


def init_params(key, C, W1, W2, OUT):
    ks = jax.random.split(key, 16)
    s = 0.1
    p = {
        'w1e':  jax.random.normal(ks[0], (1, W1)) * s,
        'b1e':  jax.random.normal(ks[1], (1, W1)) * s,
        'g1':   1.0 + jax.random.normal(ks[2], (1, W1)) * s,
        'be1':  jax.random.normal(ks[3], (1, W1)) * s,
        'w2e':  jax.random.normal(ks[4], (W1, W2)) * s,
        'b2e':  jax.random.normal(ks[5], (1, W2)) * s,
        'wr':   jax.random.normal(ks[6], (C * W2, C)) * s,
        'br':   jax.random.normal(ks[7], (1, C)) * s,
        'wc1':  jax.random.normal(ks[8], (C, W1)) * s,
        'bc1':  jax.random.normal(ks[9], (1, W1)) * s,
        'gc':   1.0 + jax.random.normal(ks[10], (1, W1)) * s,
        'bec':  jax.random.normal(ks[11], (1, W1)) * s,
        'wc2':  jax.random.normal(ks[12], (W1, W2)) * s,
        'bc2':  jax.random.normal(ks[13], (1, W2)) * s,
        'wclf': jax.random.normal(ks[14], (W2, OUT)) * s,
        'bclf': jax.random.normal(ks[15], (1, OUT)) * s,
    }
    return {k: v.astype(jnp.float32) for k, v in p.items()}


if __name__ == "__main__":
    # Small shapes: batch=32 (so the blocked, multi-step grid path is exercised:
    # BT=16, 2 grid steps), set size N=8, in_channels=4, width1=32, width2=16,
    # out_channels=3, norm=True, readout='mean'.
    B, N, C, W1, W2, OUT = 32, 8, 4, 32, 16, 3
    key = jax.random.PRNGKey(0)
    kx, kp = jax.random.split(key)
    x = jax.random.normal(kx, (B, N, C), dtype=jnp.float32)
    params = init_params(kp, C, W1, W2, OUT)

    out = deepsets_signnet(x, params)
    out = jax.block_until_ready(out)

    ref = reference(x, params)
    assert out.shape == (B, OUT)
    max_err = float(jnp.max(jnp.abs(out - ref)))
    # The kernel computes LayerNorm statistics on the MXU while the reference
    # uses exact vector means; depending on backend defaults, f32 MXU matmuls
    # may take a reduced-precision input pass, so allow 1e-3 (observed error
    # with full-f32 matmuls is ~1e-6).
    if max_err < 1e-3:
        print("KERNEL_OK")
    else:
        print(f"MISMATCH max_abs_err={max_err}")
</pallas_src>

<mosaic_0001>
module attributes {stable_mosaic.version = 11 : i64} {
  func.func @_signnet_kernel(%arg0: i32, %arg1: memref<128x4xf32, #tpu.memory_space<vmem>>, %arg2: memref<24x128xf32, #tpu.memory_space<vmem>>, %arg3: memref<2x128x128xf32, #tpu.memory_space<vmem>>, %arg4: memref<128x4xf32, #tpu.memory_space<vmem>>, %arg5: memref<4x32xf32, #tpu.memory_space<vmem>>, %arg6: memref<32x16xf32, #tpu.memory_space<vmem>>, %arg7: memref<16x128xf32, #tpu.memory_space<vmem>>, %arg8: memref<16x128xf32, #tpu.memory_space<vmem>>) attributes {dimension_semantics = [#tpu.dimension_semantics<parallel>], iteration_bounds = array<i64: 2>, scalar_prefetch = 0 : i64, scratch_operands = 0 : i64, tpu.core_type = #tpu.core_type<tc>, window_params = [{transform_indices = @transform_0, window_bounds = array<i64: 128, 4>}, {pipeline_mode = #tpu.pipeline_mode<synchronous>, transform_indices = @transform_1, window_bounds = array<i64: 24, 128>}, {pipeline_mode = #tpu.pipeline_mode<synchronous>, transform_indices = @transform_2, window_bounds = array<i64: 2, 128, 128>}, {pipeline_mode = #tpu.pipeline_mode<synchronous>, transform_indices = @transform_3, window_bounds = array<i64: 128, 4>}, {pipeline_mode = #tpu.pipeline_mode<synchronous>, transform_indices = @transform_4, window_bounds = array<i64: 4, 32>}, {pipeline_mode = #tpu.pipeline_mode<synchronous>, transform_indices = @transform_5, window_bounds = array<i64: 32, 16>}, {pipeline_mode = #tpu.pipeline_mode<synchronous>, transform_indices = @transform_6, window_bounds = array<i64: 16, 128>}, {transform_indices = @transform_7, window_bounds = array<i64: 16, 128>}]} {
    %c0 = arith.constant 0 : index
    %c0_0 = arith.constant 0 : index
    %0 = vector.load %arg1[%c0, %c0_0] : memref<128x4xf32, #tpu.memory_space<vmem>>, vector<128x4xf32>
    %c0_1 = arith.constant 0 : index
    %c0_2 = arith.constant 0 : index
    %1 = vector.load %arg2[%c0_1, %c0_2] : memref<24x128xf32, #tpu.memory_space<vmem>>, vector<24x128xf32>
    %2 = vector.extract_strided_slice %1 {offsets = [0, 0], sizes = [4, 128], strides = [1, 1]} : vector<24x128xf32> to vector<4x128xf32>
    %3 = vector.extract_strided_slice %1 {offsets = [8, 0], sizes = [1, 128], strides = [1, 1]} : vector<24x128xf32> to vector<1x128xf32>
    %4 = vector.extract_strided_slice %1 {offsets = [9, 0], sizes = [1, 128], strides = [1, 1]} : vector<24x128xf32> to vector<1x128xf32>
    %5 = vector.extract_strided_slice %1 {offsets = [10, 0], sizes = [1, 128], strides = [1, 1]} : vector<24x128xf32> to vector<1x128xf32>
    %6 = vector.extract_strided_slice %1 {offsets = [11, 0], sizes = [1, 128], strides = [1, 1]} : vector<24x128xf32> to vector<1x128xf32>
    %7 = vector.extract_strided_slice %1 {offsets = [12, 0], sizes = [1, 4], strides = [1, 1]} : vector<24x128xf32> to vector<1x4xf32>
    %8 = vector.extract_strided_slice %1 {offsets = [13, 0], sizes = [1, 32], strides = [1, 1]} : vector<24x128xf32> to vector<1x32xf32>
    %9 = vector.extract_strided_slice %1 {offsets = [14, 0], sizes = [1, 32], strides = [1, 1]} : vector<24x128xf32> to vector<1x32xf32>
    %10 = vector.extract_strided_slice %1 {offsets = [15, 0], sizes = [1, 32], strides = [1, 1]} : vector<24x128xf32> to vector<1x32xf32>
    %11 = vector.extract_strided_slice %1 {offsets = [16, 0], sizes = [1, 16], strides = [1, 1]} : vector<24x128xf32> to vector<1x16xf32>
    %12 = vector.extract_strided_slice %1 {offsets = [17, 0], sizes = [1, 128], strides = [1, 1]} : vector<24x128xf32> to vector<1x128xf32>
    %c0_3 = arith.constant 0 : index
    %c0_4 = arith.constant 0 : index
    %c0_5 = arith.constant 0 : index
    %13 = vector.load %arg3[%c0_3, %c0_4, %c0_5] : memref<2x128x128xf32, #tpu.memory_space<vmem>>, vector<1x128x128xf32>
    %14 = vector.shape_cast %13 : vector<1x128x128xf32> to vector<128x128xf32>
    %c1 = arith.constant 1 : index
    %c0_6 = arith.constant 0 : index
    %c0_7 = arith.constant 0 : index
    %15 = vector.load %arg3[%c1, %c0_6, %c0_7] : memref<2x128x128xf32, #tpu.memory_space<vmem>>, vector<1x128x128xf32>
    %16 = vector.shape_cast %15 : vector<1x128x128xf32> to vector<128x128xf32>
    %cst = arith.constant 0.000000e+00 : f32
    %17 = vector.broadcast %cst : f32 to vector<128x4xf32>
    %18 = arith.subf %17, %0 : vector<128x4xf32>
    %19 = tpu.concatenate %0, %18 in 0 : vector<128x4xf32>, vector<128x4xf32> -> vector<256x4xf32>
    %cst_8 = arith.constant dense<0.000000e+00> : vector<256x128xf32>
    %20 = tpu.matmul %19, %2, %cst_8 {dimension_numbers = #tpu.dot_dimension_numbers<[1], [0], [0], [1], [0, 0, 1, 1], [], []>} : vector<256x4xf32>, vector<4x128xf32>, vector<256x128xf32> -> vector<256x128xf32>
    %21 = vector.broadcast %3 : vector<1x128xf32> to vector<256x128xf32>
    %22 = arith.addf %20, %21 : vector<256x128xf32>
    %cst_9 = arith.constant 0.000000e+00 : f32
    %23 = vector.broadcast %cst_9 : f32 to vector<256x128xf32>
    %24 = arith.cmpf oge, %22, %23 : vector<256x128xf32>
    %cst_10 = arith.constant 0.00999999977 : f32
    %25 = vector.broadcast %cst_10 : f32 to vector<256x128xf32>
    %26 = arith.mulf %25, %22 : vector<256x128xf32>
    %27 = arith.select %24, %22, %26 : vector<256x128xi1>, vector<256x128xf32>
    %cst_11 = arith.constant dense<0.000000e+00> : vector<256x128xf32>
    %28 = tpu.matmul %27, %14, %cst_11 {dimension_numbers = #tpu.dot_dimension_numbers<[1], [0], [0], [1], [0, 0, 1, 1], [], []>} : vector<256x128xf32>, vector<128x128xf32>, vector<256x128xf32> -> vector<256x128xf32>
    %29 = arith.subf %27, %28 : vector<256x128xf32>
    %30 = arith.mulf %29, %29 : vector<256x128xf32>
    %cst_12 = arith.constant dense<0.000000e+00> : vector<256x128xf32>
    %31 = tpu.matmul %30, %14, %cst_12 {dimension_numbers = #tpu.dot_dimension_numbers<[1], [0], [0], [1], [0, 0, 1, 1], [], []>} : vector<256x128xf32>, vector<128x128xf32>, vector<256x128xf32> -> vector<256x128xf32>
    %cst_13 = arith.constant 9.99999997E-7 : f32
    %32 = vector.broadcast %cst_13 : f32 to vector<256x128xf32>
    %33 = arith.addf %31, %32 : vector<256x128xf32>
    %34 = math.rsqrt %33 : vector<256x128xf32>
    %35 = arith.mulf %29, %34 : vector<256x128xf32>
    %36 = vector.broadcast %4 : vector<1x128xf32> to vector<256x128xf32>
    %37 = arith.mulf %35, %36 : vector<256x128xf32>
    %38 = vector.broadcast %5 : vector<1x128xf32> to vector<256x128xf32>
    %39 = arith.addf %37, %38 : vector<256x128xf32>
    %cst_14 = arith.constant dense<0.000000e+00> : vector<256x128xf32>
    %40 = tpu.matmul %39, %16, %cst_14 {dimension_numbers = #tpu.dot_dimension_numbers<[1], [0], [0], [1], [0, 0, 1, 1], [], []>} : vector<256x128xf32>, vector<128x128xf32>, vector<256x128xf32> -> vector<256x128xf32>
    %41 = vector.broadcast %6 : vector<1x128xf32> to vector<256x128xf32>
    %42 = arith.addf %40, %41 : vector<256x128xf32>
    %cst_15 = arith.constant 0.000000e+00 : f32
    %43 = vector.broadcast %cst_15 : f32 to vector<256x128xf32>
    %44 = arith.cmpf oge, %42, %43 : vector<256x128xf32>
    %cst_16 = arith.constant 0.00999999977 : f32
    %45 = vector.broadcast %cst_16 : f32 to vector<256x128xf32>
    %46 = arith.mulf %45, %42 : vector<256x128xf32>
    %47 = arith.select %44, %42, %46 : vector<256x128xi1>, vector<256x128xf32>
    %48 = vector.extract_strided_slice %47 {offsets = [0, 0], sizes = [128, 128], strides = [1, 1]} : vector<256x128xf32> to vector<128x128xf32>
    %49 = vector.extract_strided_slice %47 {offsets = [128, 0], sizes = [128, 128], strides = [1, 1]} : vector<256x128xf32> to vector<128x128xf32>
    %50 = arith.addf %48, %49 : vector<128x128xf32>
    %c0_17 = arith.constant 0 : index
    %c0_18 = arith.constant 0 : index
    %51 = vector.load %arg4[%c0_17, %c0_18] : memref<128x4xf32, #tpu.memory_space<vmem>>, vector<128x4xf32>
    %cst_19 = arith.constant dense<0.000000e+00> : vector<128x4xf32>
    %52 = tpu.matmul %50, %51, %cst_19 {dimension_numbers = #tpu.dot_dimension_numbers<[1], [0], [0], [1], [0, 0, 1, 1], [], []>} : vector<128x128xf32>, vector<128x4xf32>, vector<128x4xf32> -> vector<128x4xf32>
    %53 = vector.broadcast %7 : vector<1x4xf32> to vector<128x4xf32>
    %54 = arith.addf %52, %53 : vector<128x4xf32>
    %cst_20 = arith.constant 0.000000e+00 : f32
    %55 = vector.broadcast %cst_20 : f32 to vector<128x4xf32>
    %56 = arith.cmpf oge, %54, %55 : vector<128x4xf32>
    %cst_21 = arith.constant 0.00999999977 : f32
    %57 = vector.broadcast %cst_21 : f32 to vector<128x4xf32>
    %58 = arith.mulf %57, %54 : vector<128x4xf32>
    %59 = arith.select %56, %54, %58 : vector<128x4xi1>, vector<128x4xf32>
    %c0_22 = arith.constant 0 : index
    %c0_23 = arith.constant 0 : index
    %60 = vector.load %arg5[%c0_22, %c0_23] : memref<4x32xf32, #tpu.memory_space<vmem>>, vector<4x32xf32>
    %cst_24 = arith.constant dense<0.000000e+00> : vector<128x32xf32>
    %61 = tpu.matmul %59, %60, %cst_24 {dimension_numbers = #tpu.dot_dimension_numbers<[1], [0], [0], [1], [0, 0, 1, 1], [], []>} : vector<128x4xf32>, vector<4x32xf32>, vector<128x32xf32> -> vector<128x32xf32>
    %62 = vector.broadcast %8 : vector<1x32xf32> to vector<128x32xf32>
    %63 = arith.addf %61, %62 : vector<128x32xf32>
    %cst_25 = arith.constant 0.000000e+00 : f32
    %64 = vector.broadcast %cst_25 : f32 to vector<128x32xf32>
    %65 = arith.cmpf oge, %63, %64 : vector<128x32xf32>
    %cst_26 = arith.constant 0.00999999977 : f32
    %66 = vector.broadcast %cst_26 : f32 to vector<128x32xf32>
    %67 = arith.mulf %66, %63 : vector<128x32xf32>
    %68 = arith.select %65, %63, %67 : vector<128x32xi1>, vector<128x32xf32>
    %cst_27 = arith.constant dense<0.000000e+00> : vector<128xf32>
    %69 = vector.multi_reduction <add>, %68, %cst_27 [1] : vector<128x32xf32> to vector<128xf32>
    %70 = vector.shape_cast %69 : vector<128xf32> to vector<128x1xf32>
    %cst_28 = arith.constant 3.200000e+01 : f32
    %71 = vector.broadcast %cst_28 : f32 to vector<128x1xf32>
    %72 = arith.divf %70, %71 : vector<128x1xf32>
    %73 = vector.broadcast %72 : vector<128x1xf32> to vector<128x32xf32>
    %74 = arith.subf %68, %73 : vector<128x32xf32>
    %75 = arith.mulf %74, %74 : vector<128x32xf32>
    %cst_29 = arith.constant dense<0.000000e+00> : vector<128xf32>
    %76 = vector.multi_reduction <add>, %75, %cst_29 [1] : vector<128x32xf32> to vector<128xf32>
    %77 = vector.shape_cast %76 : vector<128xf32> to vector<128x1xf32>
    %cst_30 = arith.constant 3.200000e+01 : f32
    %78 = vector.broadcast %cst_30 : f32 to vector<128x1xf32>
    %79 = arith.divf %77, %78 : vector<128x1xf32>
    %80 = vector.broadcast %72 : vector<128x1xf32> to vector<128x32xf32>
    %81 = arith.subf %68, %80 : vector<128x32xf32>
    %cst_31 = arith.constant 9.99999997E-7 : f32
    %82 = vector.broadcast %cst_31 : f32 to vector<128x1xf32>
    %83 = arith.addf %79, %82 : vector<128x1xf32>
    %84 = math.rsqrt %83 : vector<128x1xf32>
    %85 = vector.broadcast %84 : vector<128x1xf32> to vector<128x32xf32>
    %86 = arith.mulf %81, %85 : vector<128x32xf32>
    %87 = vector.broadcast %9 : vector<1x32xf32> to vector<128x32xf32>
    %88 = arith.mulf %86, %87 : vector<128x32xf32>
    %89 = vector.broadcast %10 : vector<1x32xf32> to vector<128x32xf32>
    %90 = arith.addf %88, %89 : vector<128x32xf32>
    %c0_32 = arith.constant 0 : index
    %c0_33 = arith.constant 0 : index
    %91 = vector.load %arg6[%c0_32, %c0_33] : memref<32x16xf32, #tpu.memory_space<vmem>>, vector<32x16xf32>
    %cst_34 = arith.constant dense<0.000000e+00> : vector<128x16xf32>
    %92 = tpu.matmul %90, %91, %cst_34 {dimension_numbers = #tpu.dot_dimension_numbers<[1], [0], [0], [1], [0, 0, 1, 1], [], []>} : vector<128x32xf32>, vector<32x16xf32>, vector<128x16xf32> -> vector<128x16xf32>
    %93 = vector.broadcast %11 : vector<1x16xf32> to vector<128x16xf32>
    %94 = arith.addf %92, %93 : vector<128x16xf32>
    %95 = vector.shape_cast %94 : vector<128x16xf32> to vector<16x8x16xf32>
    %cst_35 = arith.constant dense<0.000000e+00> : vector<16x16xf32>
    %96 = vector.multi_reduction <add>, %95, %cst_35 [1] : vector<16x8x16xf32> to vector<16x16xf32>
    %c0_36 = arith.constant 0 : index
    %c0_37 = arith.constant 0 : index
    %97 = vector.load %arg7[%c0_36, %c0_37] : memref<16x128xf32, #tpu.memory_space<vmem>>, vector<16x128xf32>
    %cst_38 = arith.constant dense<0.000000e+00> : vector<16x128xf32>
    %98 = tpu.matmul %96, %97, %cst_38 {dimension_numbers = #tpu.dot_dimension_numbers<[1], [0], [0], [1], [0, 0, 1, 1], [], []>} : vector<16x16xf32>, vector<16x128xf32>, vector<16x128xf32> -> vector<16x128xf32>
    %99 = vector.broadcast %12 : vector<1x128xf32> to vector<16x128xf32>
    %100 = arith.addf %98, %99 : vector<16x128xf32>
    %c0_39 = arith.constant 0 : index
    %c0_40 = arith.constant 0 : index
    %101 = vector.load %arg8[%c0_39, %c0_40] : memref<16x128xf32, #tpu.memory_space<vmem>>, vector<16x128xf32>
    tpu.vector_store %arg8[%c0_39, %c0_40], %100 {strides = array<i32>} : memref<16x128xf32, #tpu.memory_space<vmem>>, vector<16x128xf32>,
    return
  }
  func.func @transform_0(%arg0: i32) -> (i32, i32) {
    %c0_i32 = arith.constant 0 : i32
    %c0_i32_0 = arith.constant 0 : i32
    return %arg0, %c0_i32 : i32, i32
  }
  func.func @transform_1(%arg0: i32) -> (i32, i32) {
    %c0_i32 = arith.constant 0 : i32
    %c0_i32_0 = arith.constant 0 : i32
    %c0_i32_1 = arith.constant 0 : i32
    return %c0_i32, %c0_i32_0 : i32, i32
  }
  func.func @transform_2(%arg0: i32) -> (i32, i32, i32) {
    %c0_i32 = arith.constant 0 : i32
    %c0_i32_0 = arith.constant 0 : i32
    %c0_i32_1 = arith.constant 0 : i32
    %c0_i32_2 = arith.constant 0 : i32
    return %c0_i32, %c0_i32_0, %c0_i32_1 : i32, i32, i32
  }
  func.func @transform_3(%arg0: i32) -> (i32, i32) {
    %c0_i32 = arith.constant 0 : i32
    %c0_i32_0 = arith.constant 0 : i32
    %c0_i32_1 = arith.constant 0 : i32
    return %c0_i32, %c0_i32_0 : i32, i32
  }
  func.func @transform_4(%arg0: i32) -> (i32, i32) {
    %c0_i32 = arith.constant 0 : i32
    %c0_i32_0 = arith.constant 0 : i32
    %c0_i32_1 = arith.constant 0 : i32
    return %c0_i32, %c0_i32_0 : i32, i32
  }
  func.func @transform_5(%arg0: i32) -> (i32, i32) {
    %c0_i32 = arith.constant 0 : i32
    %c0_i32_0 = arith.constant 0 : i32
    %c0_i32_1 = arith.constant 0 : i32
    return %c0_i32, %c0_i32_0 : i32, i32
  }
  func.func @transform_6(%arg0: i32) -> (i32, i32) {
    %c0_i32 = arith.constant 0 : i32
    %c0_i32_0 = arith.constant 0 : i32
    %c0_i32_1 = arith.constant 0 : i32
    return %c0_i32, %c0_i32_0 : i32, i32
  }
  func.func @transform_7(%arg0: i32) -> (i32, i32) {
    %c0_i32 = arith.constant 0 : i32
    %c0_i32_0 = arith.constant 0 : i32
    return %arg0, %c0_i32 : i32, i32
  }
}

</mosaic_0001>

<llo_original>
// kernel: tpu_custom_call.1
$region0: #{tpu_custom_call.1}
  #allocation0 [shape = 'u32[]', space=smem, size = 0x4, offset = 0x4, fixed_abs, tag = 'smem constant byte address 0x4 - core index']
  #allocation1 [shape = 'u32[144,128]{1,0:T(1,128)}', space=vmem, size = 0x12000, scoped, tag = 'internal scratch']
  %s0 = inlined_call_operand.vmem [shape: f32[256,4], index: 0, kind: input, shape index: {}]
  %s1 = inlined_call_operand.vmem [shape: f32[24,128], index: 1, kind: input, shape index: {}]
  %s2 = inlined_call_operand.vmem [shape: f32[2,128,128], index: 2, kind: input, shape index: {}]
  %s3 = inlined_call_operand.vmem [shape: f32[128,4], index: 3, kind: input, shape index: {}]
  %s4 = inlined_call_operand.vmem [shape: f32[4,32], index: 4, kind: input, shape index: {}]
  %s5 = inlined_call_operand.vmem [shape: f32[32,16], index: 5, kind: input, shape index: {}]
  %s6 = inlined_call_operand.vmem [shape: f32[16,128], index: 6, kind: input, shape index: {}]
  %s7 = inlined_call_operand.hbm [shape: f32[32,128], index: 7, kind: output, shape index: {}]
  %s8 = sld [smem:[#allocation0]]
  $region61: #{tpu_custom_call.1} parent=0
    _
  %s10 = ssub.s32 1, %s8
  %s11 = scalar_select 0, %s10, %s8
  $region1: #{tpu_custom_call.1} parent=0
    #allocation2 [shape = 'u8[16384]{0}', space=vmem, size = 0x4000, scoped, tag = 'output window, operand 0']
    #allocation3 [shape = 's32[2]{0}', space=sflag, size = 0x8, scoped, tag = 'scoped memory for tpu_custom_call.1']
    %12 = vsyncpa [#allocation3], 0
    %s13 = scalar_lea.sflag [#allocation3], 1
    %14 = vsyncpa %s13, 0
    loop: start=0, step=1, limit=4
    $region2: #{tpu_custom_call.1} parent=1 // loop_pre_header
      _
    $region3: #{tpu_custom_call.1} parent=1 // loop_header
      %s16 = sphi 0, %s20
      %p17 = scmp.ge.s32.totalorder %s16, 4
      %s26 = sphi 0, %s28
      %s29 = sphi 0, %s26
      %s30 = sphi 0, %s29
      %s46 = sphi 0, %s30
      %s50 = sphi 0, %s50
      %s52 = sphi 0, %s50
      %s53 = sphi 0, %s52
      %s67 = sphi 0, %s53
      %s71 = sphi 0, %s71
      %s73 = sphi 0, %s71
      %s74 = sphi 0, %s73
      %s88 = sphi 0, %s74
      %s92 = sphi 0, %s92
      %s94 = sphi 0, %s92
      %s95 = sphi 0, %s94
      %s109 = sphi 0, %s95
      %s113 = sphi 0, %s113
      %s115 = sphi 0, %s113
      %s116 = sphi 0, %s115
      %s130 = sphi 0, %s116
      %s134 = sphi 0, %s134
      %s136 = sphi 0, %s134
      %s137 = sphi 0, %s136
      %s151 = sphi 0, %s137
      %s155 = sphi 0, %s155
      %s157 = sphi 0, %s155
      %s158 = sphi 0, %s157
      %s172 = sphi 0, %s158
      %s178 = sphi 0, %s180
      %s181 = sphi 0, %s178
      %s182 = sphi 0, %s181
      %s198 = sphi 0, %s182
    $region4: #{tpu_custom_call.1} parent=1 // loop_header_branch
      %19 = sbr.rel (%p17) target = $region8
    $region5: #{tpu_custom_call.1} parent=1 // loop_body
      %s21 = ssub.s32 %s16, 1
      %s22 = ssub.s32 %s16, 2
      %s23 = sadd.s32 %s16, 1
      %s24 = ssub.s32 %s16, %s23
      %p25 = scmp.eq.s32.totalorder %s24, 0
      %s27 = sadd.s32 %s26, 1
      %s28 = scalar_select %p25, %s26, %s27
      %p31 = pneg %p25
      %p32 = scmp.eq.s32.totalorder %s16, 1
      %p33 = por %p31, %p32
      %p34 = scmp.ne.s32.totalorder %s26, %s29
      %p35 = scmp.eq.s32.totalorder %s16, 0
      %p36 = por %p34, %p35
      %p37 = scmp.ne.s32.totalorder %s26, %s29
      %p38 = scmp.eq.s32.totalorder %s21, 1
      %p39 = por %p37, %p38
      %p40 = scmp.ne.s32.totalorder %s29, %s30
      %p41 = scmp.eq.s32.totalorder %s21, 0
      %p42 = por %p40, %p41
      %p43 = scmp.ne.s32.totalorder %s29, %s30
      %p44 = scmp.eq.s32.totalorder %s22, 1
      %p45 = por %p43, %p44
      %p47 = scmp.ne.s32.totalorder %s30, %s46
      %p48 = scmp.eq.s32.totalorder %s22, 0
      %p49 = por %p47, %p48
      %s51 = sadd.s32 %s50, 1
      %p54 = scmp.eq.s32.totalorder %s16, 1
      %p55 = scmp.ne.s32.totalorder %s50, %s52
      %p56 = scmp.eq.s32.totalorder %s16, 0
      %p57 = por %p55, %p56
      %p58 = scmp.ne.s32.totalorder %s50, %s52
      %p59 = scmp.eq.s32.totalorder %s21, 1
      %p60 = por %p58, %p59
      %p61 = scmp.ne.s32.totalorder %s52, %s53
      %p62 = scmp.eq.s32.totalorder %s21, 0
      %p63 = por %p61, %p62
      %p64 = scmp.ne.s32.totalorder %s52, %s53
      %p65 = scmp.eq.s32.totalorder %s22, 1
      %p66 = por %p64, %p65
      %p68 = scmp.ne.s32.totalorder %s53, %s67
      %p69 = scmp.eq.s32.totalorder %s22, 0
      %p70 = por %p68, %p69
      %s72 = sadd.s32 %s71, 1
      %p75 = scmp.eq.s32.totalorder %s16, 1
      %p76 = scmp.ne.s32.totalorder %s71, %s73
      %p77 = scmp.eq.s32.totalorder %s16, 0
      %p78 = por %p76, %p77
      %p79 = scmp.ne.s32.totalorder %s71, %s73
      %p80 = scmp.eq.s32.totalorder %s21, 1
      %p81 = por %p79, %p80
      %p82 = scmp.ne.s32.totalorder %s73, %s74
      %p83 = scmp.eq.s32.totalorder %s21, 0
      %p84 = por %p82, %p83
      %p85 = scmp.ne.s32.totalorder %s73, %s74
      %p86 = scmp.eq.s32.totalorder %s22, 1
      %p87 = por %p85, %p86
      %p89 = scmp.ne.s32.totalorder %s74, %s88
      %p90 = scmp.eq.s32.totalorder %s22, 0
      %p91 = por %p89, %p90
      %s93 = sadd.s32 %s92, 1
      %p96 = scmp.eq.s32.totalorder %s16, 1
      %p97 = scmp.ne.s32.totalorder %s92, %s94
      %p98 = scmp.eq.s32.totalorder %s16, 0
      %p99 = por %p97, %p98
      %p100 = scmp.ne.s32.totalorder %s92, %s94
      %p101 = scmp.eq.s32.totalorder %s21, 1
      %p102 = por %p100, %p101
      %p103 = scmp.ne.s32.totalorder %s94, %s95
      %p104 = scmp.eq.s32.totalorder %s21, 0
      %p105 = por %p103, %p104
      %p106 = scmp.ne.s32.totalorder %s94, %s95
      %p107 = scmp.eq.s32.totalorder %s22, 1
      %p108 = por %p106, %p107
      %p110 = scmp.ne.s32.totalorder %s95, %s109
      %p111 = scmp.eq.s32.totalorder %s22, 0
      %p112 = por %p110, %p111
      %s114 = sadd.s32 %s113, 1
      %p117 = scmp.eq.s32.totalorder %s16, 1
      %p118 = scmp.ne.s32.totalorder %s113, %s115
      %p119 = scmp.eq.s32.totalorder %s16, 0
      %p120 = por %p118, %p119
      %p121 = scmp.ne.s32.totalorder %s113, %s115
      %p122 = scmp.eq.s32.totalorder %s21, 1
      %p123 = por %p121, %p122
      %p124 = scmp.ne.s32.totalorder %s115, %s116
      %p125 = scmp.eq.s32.totalorder %s21, 0
      %p126 = por %p124, %p125
      %p127 = scmp.ne.s32.totalorder %s115, %s116
      %p128 = scmp.eq.s32.totalorder %s22, 1
      %p129 = por %p127, %p128
      %p131 = scmp.ne.s32.totalorder %s116, %s130
      %p132 = scmp.eq.s32.totalorder %s22, 0
      %p133 = por %p131, %p132
      %s135 = sadd.s32 %s134, 1
      %p138 = scmp.eq.s32.totalorder %s16, 1
      %p139 = scmp.ne.s32.totalorder %s134, %s136
      %p140 = scmp.eq.s32.totalorder %s16, 0
      %p141 = por %p139, %p140
      %p142 = scmp.ne.s32.totalorder %s134, %s136
      %p143 = scmp.eq.s32.totalorder %s21, 1
      %p144 = por %p142, %p143
      %p145 = scmp.ne.s32.totalorder %s136, %s137
      %p146 = scmp.eq.s32.totalorder %s21, 0
      %p147 = por %p145, %p146
      %p148 = scmp.ne.s32.totalorder %s136, %s137
      %p149 = scmp.eq.s32.totalorder %s22, 1
      %p150 = por %p148, %p149
      %p152 = scmp.ne.s32.totalorder %s137, %s151
      %p153 = scmp.eq.s32.totalorder %s22, 0
      %p154 = por %p152, %p153
      %s156 = sadd.s32 %s155, 1
      %p159 = scmp.eq.s32.totalorder %s16, 1
      %p160 = scmp.ne.s32.totalorder %s155, %s157
      %p161 = scmp.eq.s32.totalorder %s16, 0
      %p162 = por %p160, %p161
      %p163 = scmp.ne.s32.totalorder %s155, %s157
      %p164 = scmp.eq.s32.totalorder %s21, 1
      %p165 = por %p163, %p164
      %p166 = scmp.ne.s32.totalorder %s157, %s158
      %p167 = scmp.eq.s32.totalorder %s21, 0
      %p168 = por %p166, %p167
      %p169 = scmp.ne.s32.totalorder %s157, %s158
      %p170 = scmp.eq.s32.totalorder %s22, 1
      %p171 = por %p169, %p170
      %p173 = scmp.ne.s32.totalorder %s158, %s172
      %p174 = scmp.eq.s32.totalorder %s22, 0
      %p175 = por %p173, %p174
      %s176 = ssub.s32 %s16, %s23
      %p177 = scmp.eq.s32.totalorder %s176, 0
      %s179 = sadd.s32 %s178, 1
      %s180 = scalar_select %p177, %s178, %s179
      %p183 = pneg %p177
      %p184 = scmp.eq.s32.totalorder %s16, 1
      %p185 = por %p183, %p184
      %p186 = scmp.ne.s32.totalorder %s178, %s181
      %p187 = scmp.eq.s32.totalorder %s16, 0
      %p188 = por %p186, %p187
      %p189 = scmp.ne.s32.totalorder %s178, %s181
      %p190 = scmp.eq.s32.totalorder %s21, 1
      %p191 = por %p189, %p190
      %p192 = scmp.ne.s32.totalorder %s181, %s182
      %p193 = scmp.eq.s32.totalorder %s21, 0
      %p194 = por %p192, %p193
      %p195 = scmp.ne.s32.totalorder %s181, %s182
      %p196 = scmp.eq.s32.totalorder %s22, 1
      %p197 = por %p195, %p196
      %p199 = scmp.ne.s32.totalorder %s182, %s198
      %p200 = scmp.eq.s32.totalorder %s22, 0
      %p201 = por %p199, %p200
      %p202 = scmp.le.s32.totalorder 1, %s16
      %p203 = scmp.lt.s32.totalorder %s16, 3
      %p204 = pnand %p202, %p203
      %p205 = pneg %p204
      // Predicated region
      $region9: #{tpu_custom_call.1} parent=5 // pred_check
        _
      $region10: #{tpu_custom_call.1} parent=5 // pred_check_branch
        %207 = sbr.rel (%p204) target = $region12
      $region11: #{tpu_custom_call.1} parent=5 // pred_region
        %s208 = ssub.s32 %s16, 1
        // Predicated region
        $region13: #{tpu_custom_call.1} parent=11 // pred_check
          %p209 = pneg %p63
        $region14: #{tpu_custom_call.1} parent=11 // pred_check_branch
          %211 = sbr.rel (%p209) target = $region16
        $region15: #{tpu_custom_call.1} parent=11 // pred_region
          _
        $region16: #{tpu_custom_call.1} parent=11 // pred_fallthru
          _
        // Predicated region
        $region17: #{tpu_custom_call.1} parent=11 // pred_check
          %p212 = pneg %p84
        $region18: #{tpu_custom_call.1} parent=11 // pred_check_branch
          %214 = sbr.rel (%p212) target = $region20
        $region19: #{tpu_custom_call.1} parent=11 // pred_region
          _
        $region20: #{tpu_custom_call.1} parent=11 // pred_fallthru
          _
        // Predicated region
        $region21: #{tpu_custom_call.1} parent=11 // pred_check
          %p215 = pneg %p105
        $region22: #{tpu_custom_call.1} parent=11 // pred_check_branch
          %217 = sbr.rel (%p215) target = $region24
        $region23: #{tpu_custom_call.1} parent=11 // pred_region
          _
        $region24: #{tpu_custom_call.1} parent=11 // pred_fallthru
          _
        // Predicated region
        $region25: #{tpu_custom_call.1} parent=11 // pred_check
          %p218 = pneg %p126
        $region26: #{tpu_custom_call.1} parent=11 // pred_check_branch
          %220 = sbr.rel (%p218) target = $region28
        $region27: #{tpu_custom_call.1} parent=11 // pred_region
          _
        $region28: #{tpu_custom_call.1} parent=11 // pred_fallthru
          _
        // Predicated region
        $region29: #{tpu_custom_call.1} parent=11 // pred_check
          %p221 = pneg %p147
        $region30: #{tpu_custom_call.1} parent=11 // pred_check_branch
          %223 = sbr.rel (%p221) target = $region32
        $region31: #{tpu_custom_call.1} parent=11 // pred_region
          _
        $region32: #{tpu_custom_call.1} parent=11 // pred_fallthru
          _
        // Predicated region
        $region33: #{tpu_custom_call.1} parent=11 // pred_check
          %p224 = pneg %p168
        $region34: #{tpu_custom_call.1} parent=11 // pred_check_branch
          %226 = sbr.rel (%p224) target = $region36
        $region35: #{tpu_custom_call.1} parent=11 // pred_region
          _
        $region36: #{tpu_custom_call.1} parent=11 // pred_fallthru
          _
      $region12: #{tpu_custom_call.1} parent=5 // pred_fallthru
        _
      %p227 = scmp.lt.s32.totalorder %s16, 2
      // Predicated region
      $region37: #{tpu_custom_call.1} parent=5 // pred_check
        %p228 = pneg %p227
      $region38: #{tpu_custom_call.1} parent=5 // pred_check_branch
        %230 = sbr.rel (%p228) target = $region40
      $region39: #{tpu_custom_call.1} parent=5 // pred_region
        // Predicated region
        $region41: #{tpu_custom_call.1} parent=39 // pred_check
          %p231 = pneg %p36
        $region42: #{tpu_custom_call.1} parent=39 // pred_check_branch
          %233 = sbr.rel (%p231) target = $region44
        $region43: #{tpu_custom_call.1} parent=39 // pred_region
          %s234 = smul.u32 16, %s16
          %p235 = scmp.lt.s32.totalorder %s234, 31
          %s236 = scalar_select %p235, %s234, 31
          %s237 = smul.addr %s236, 8
          %s238 = scalar_lea.vmem %s0, %s237
          %s239 = smul.u32 16, %s16
        $region44: #{tpu_custom_call.1} parent=39 // pred_fallthru
          _
      $region40: #{tpu_custom_call.1} parent=5 // pred_fallthru
        _
      %p240 = scmp.le.s32.totalorder 1, %s16
      %p241 = scmp.lt.s32.totalorder %s16, 3
      %p242 = pnand %p240, %p241
      %p243 = pneg %p242
      // Predicated region
      $region45: #{tpu_custom_call.1} parent=5 // pred_check
        _
      $region46: #{tpu_custom_call.1} parent=5 // pred_check_branch
        %245 = sbr.rel (%p242) target = $region48
      $region47: #{tpu_custom_call.1} parent=5 // pred_region
        %s246 = ssub.s32 %s16, 1
        %s247 = smul.u32 16, %s21
        %p248 = scmp.lt.s32.totalorder %s247, 31
        %s249 = scalar_select %p248, %s247, 31
        %s250 = smul.addr %s249, 8
        %s251 = scalar_lea.vmem %s0, %s250
        %p252 = pneg %p42
        %p253 = pneg %p39
        %p254 = pneg %p63
        %p255 = pneg %p60
        %p256 = pneg %p84
        %p257 = pneg %p81
        %p258 = pneg %p105
        %p259 = pneg %p102
        %p260 = pneg %p126
        %p261 = pneg %p123
        %p262 = pneg %p147
        %p263 = pneg %p144
        %p264 = pneg %p168
        %p265 = pneg %p165
        %p266 = pneg %p194
        %p267 = pneg %p191
        %s268 = sand.u32 %s181, 1
        %s269 = scalar_lea.sflag [#allocation3], %s268
        %s270 = sand.u32 %s181, 1
        %s271 = smul.addr %s270, 16
        %s272 = scalar_lea.vmem [#allocation2], %s271
        %s273 = smul.u32 16, %s21
        %p274 = scmp.lt.s32.totalorder %s273, 31
        %s275 = scalar_select %p274, %s273, 31
        %s276 = smul.addr %s275, 8
        %s277 = scalar_lea.vmem %s0, %s276
        %s278 = smul.u32 16, %s21
        %s279 = smul.u32 2, %s21
        %v280 = vld [vmem:[%s277] sm:$0xff]
        %v281 = vld [vmem:[%s277 + $0x8] sm:$0xff]
        %v282 = vld [vmem:[%s277 + $0x10] sm:$0xff]
        %v283 = vld [vmem:[%s277 + $0x18] sm:$0xff]
        %v284 = vld [vmem:[%s277 + $0x20] sm:$0xff]
        %v285 = vld [vmem:[%s277 + $0x28] sm:$0xff]
        %v286 = vld [vmem:[%s277 + $0x30] sm:$0xff]
        %v287 = vld [vmem:[%s277 + $0x38] sm:$0xff]
        %v288 = vld [vmem:[%s277 + $0x40] sm:$0xff]
        %v289 = vld [vmem:[%s277 + $0x48] sm:$0xff]
        %v290 = vld [vmem:[%s277 + $0x50] sm:$0xff]
        %v291 = vld [vmem:[%s277 + $0x58] sm:$0xff]
        %v292 = vld [vmem:[%s277 + $0x60] sm:$0xff]
        %v293 = vld [vmem:[%s277 + $0x68] sm:$0xff]
        %v294 = vld [vmem:[%s277 + $0x70] sm:$0xff]
        %v295 = vld [vmem:[%s277 + $0x78] sm:$0xff]
        %v296 = vld [vmem:[%s1] sm:$0xff]
        %v297 = vld [vmem:[%s1 + $0x8] sm:$0xff]
        %v298 = vld [vmem:[%s1 + $0x10] sm:$0xff]
        %v299 = vld [vmem:[%s2] sm:$0xff]
        %v300 = vld [vmem:[%s2 + $0x8] sm:$0xff]
        %v301 = vld [vmem:[%s2 + $0x10] sm:$0xff]
        %v302 = vld [vmem:[%s2 + $0x18] sm:$0xff]
        %v303 = vld [vmem:[%s2 + $0x20] sm:$0xff]
        %v304 = vld [vmem:[%s2 + $0x28] sm:$0xff]
        %v305 = vld [vmem:[%s2 + $0x30] sm:$0xff]
        %v306 = vld [vmem:[%s2 + $0x38] sm:$0xff]
        %v307 = vld [vmem:[%s2 + $0x40] sm:$0xff]
        %v308 = vld [vmem:[%s2 + $0x48] sm:$0xff]
        %v309 = vld [vmem:[%s2 + $0x50] sm:$0xff]
        %v310 = vld [vmem:[%s2 + $0x58] sm:$0xff]
        %v311 = vld [vmem:[%s2 + $0x60] sm:$0xff]
        %v312 = vld [vmem:[%s2 + $0x68] sm:$0xff]
        %v313 = vld [vmem:[%s2 + $0x70] sm:$0xff]
        %v314 = vld [vmem:[%s2 + $0x78] sm:$0xff]
        %s315 = scalar_lea.vmem %s2, 128
        %v316 = vld [vmem:[%s315] sm:$0xff]
        %v317 = vld [vmem:[%s315 + $0x8] sm:$0xff]
        %v318 = vld [vmem:[%s315 + $0x10] sm:$0xff]
        %v319 = vld [vmem:[%s315 + $0x18] sm:$0xff]
        %v320 = vld [vmem:[%s315 + $0x20] sm:$0xff]
        %v321 = vld [vmem:[%s315 + $0x28] sm:$0xff]
        %v322 = vld [vmem:[%s315 + $0x30] sm:$0xff]
        %v323 = vld [vmem:[%s315 + $0x38] sm:$0xff]
        %v324 = vld [vmem:[%s315 + $0x40] sm:$0xff]
        %v325 = vld [vmem:[%s315 + $0x48] sm:$0xff]
        %v326 = vld [vmem:[%s315 + $0x50] sm:$0xff]
        %v327 = vld [vmem:[%s315 + $0x58] sm:$0xff]
        %v328 = vld [vmem:[%s315 + $0x60] sm:$0xff]
        %v329 = vld [vmem:[%s315 + $0x68] sm:$0xff]
        %v330 = vld [vmem:[%s315 + $0x70] sm:$0xff]
        %v331 = vld [vmem:[%s315 + $0x78] sm:$0xff]
        %v332 = vsub.f32 0.0, %v280
        %v333 = vsub.f32 0.0, %v281
        %v334 = vsub.f32 0.0, %v282
        %v335 = vsub.f32 0.0, %v283
        %v336 = vsub.f32 0.0, %v284
        %v337 = vsub.f32 0.0, %v285
        %v338 = vsub.f32 0.0, %v286
        %v339 = vsub.f32 0.0, %v287
        %v340 = vsub.f32 0.0, %v288
        %v341 = vsub.f32 0.0, %v289
        %v342 = vsub.f32 0.0, %v290
        %v343 = vsub.f32 0.0, %v291
        %v344 = vsub.f32 0.0, %v292
        %v345 = vsub.f32 0.0, %v293
        %v346 = vsub.f32 0.0, %v294
        %v347 = vsub.f32 0.0, %v295
        %v348 = vlaneseq
        %v349 = vshrl.u32 %v348, 7
        %v350 = vsub.s32 0, %v349
        %v351 = vrot.slane %v297, %v350
        %vm352 = vcmask 31744
        %v354 = vsel %vm352, %v280, 0
        %v357 = vsel %vm352, %v281, 0
        %v360 = vsel %vm352, %v282, 0
        %v363 = vsel %vm352, %v283, 0
        %v366 = vsel %vm352, %v284, 0
        %v369 = vsel %vm352, %v285, 0
        %v372 = vsel %vm352, %v286, 0
        %v375 = vsel %vm352, %v287, 0
        %v378 = vsel %vm352, %v288, 0
        %v381 = vsel %vm352, %v289, 0
        %v384 = vsel %vm352, %v290, 0
        %v387 = vsel %vm352, %v291, 0
        %v390 = vsel %vm352, %v292, 0
        %v393 = vsel %vm352, %v293, 0
        %v396 = vsel %vm352, %v294, 0
        %v399 = vsel %vm352, %v295, 0
        %v402 = vsel %vm352, %v332, 0
        %v405 = vsel %vm352, %v333, 0
        %v408 = vsel %vm352, %v334, 0
        %v411 = vsel %vm352, %v335, 0
        %v414 = vsel %vm352, %v336, 0
        %v417 = vsel %vm352, %v337, 0
        %v420 = vsel %vm352, %v338, 0
        %v423 = vsel %vm352, %v339, 0
        %v426 = vsel %vm352, %v340, 0
        %v429 = vsel %vm352, %v341, 0
        %v432 = vsel %vm352, %v342, 0
        %v435 = vsel %vm352, %v343, 0
        %v438 = vsel %vm352, %v344, 0
        %v441 = vsel %vm352, %v345, 0
        %v444 = vsel %vm352, %v346, 0
        %v447 = vsel %vm352, %v347, 0
        %vm449 = vcmask 1043456
        %v451 = vsel %vm449, %v296, 0
        %453 = vmatprep.subr.mxu0 0.0
        %454 = vmatpush1.msra.mxu0 %v451
        %455 = vmatprep.subr.mxu0 0.0
        %456 = vmatpush1.msra.mxu0 0.0
        %457 = vmatprep.subr.mxu0 0.0
        %458 = vmatpush1.msra.mxu0 0.0
        %459 = vmatprep.subr.mxu0 0.0
        %460 = vmatpush1.msra.mxu0 0.0
        %461 = vmatprep.subr.mxu0 0.0
        %462 = vmatpush1.msra.mxu0 0.0
        %463 = vmatprep.subr.mxu0 0.0
        %464 = vmatpush1.msra.mxu0 0.0
        %465 = vmatprep.subr.mxu0 0.0
        %466 = vmatpush1.msra.mxu0 0.0
        %467 = vmatprep.subr.mxu0 0.0
        %468 = vmatpush1.msra.mxu0 0.0
        %469 = vmatprep.subr.mxu0 0.0
        %470 = vmatpush1.msra.mxu0 0.0
        %471 = vmatprep.subr.mxu0 0.0
        %472 = vmatpush1.msra.mxu0 0.0
        %473 = vmatprep.subr.mxu0 0.0
        %474 = vmatpush1.msra.mxu0 0.0
        %475 = vmatprep.subr.mxu0 0.0
        %476 = vmatpush1.msra.mxu0 0.0
        %477 = vmatprep.subr.mxu0 0.0
        %478 = vmatpush1.msra.mxu0 0.0
        %479 = vmatprep.subr.mxu0 0.0
        %480 = vmatpush1.msra.mxu0 0.0
        %481 = vmatprep.subr.mxu0 0.0
        %482 = vmatpush1.msra.mxu0 0.0
        %483 = vmatprep.subr.mxu0 0.0
        %484 = vmatpush1.msra.mxu0 0.0
        %485 = vmatprep.subr.mxu0 0.0
        %486 = vmatpush1.msra.mxu0 0.0
        %487 = vmatprep.subr.mxu0 0.0
        %488 = vmatpush1.msra.mxu0 0.0
        %489 = vmatprep.subr.mxu0 0.0
        %490 = vmatpush1.msra.mxu0 0.0
        %491 = vmatprep.subr.mxu0 0.0
        %492 = vmatpush1.msra.mxu0 0.0
        %493 = vmatprep.subr.mxu0 0.0
        %494 = vmatpush1.msra.mxu0 0.0
        %495 = vmatprep.subr.mxu0 0.0
        %496 = vmatpush1.msra.mxu0 0.0
        %497 = vmatprep.subr.mxu0 0.0
        %498 = vmatpush1.msra.mxu0 0.0
        %499 = vmatprep.subr.mxu0 0.0
        %500 = vmatpush1.msra.mxu0 0.0
        %501 = vmatprep.subr.mxu0 0.0
        %502 = vmatpush1.msra.mxu0 0.0
        %503 = vmatprep.subr.mxu0 0.0
        %504 = vmatpush1.msra.mxu0 0.0
        %505 = vmatprep.subr.mxu0 0.0
        %506 = vmatpush1.msra.mxu0 0.0
        %507 = vmatprep.subr.mxu0 0.0
        %508 = vmatpush1.msra.mxu0 0.0
        %509 = vmatprep.subr.mxu0 0.0
        %510 = vmatpush1.msra.mxu0 0.0
        %511 = vmatprep.subr.mxu0 0.0
        %512 = vmatpush1.msra.mxu0 0.0
        %513 = vmatprep.subr.mxu0 0.0
        %514 = vmatpush1.msra.mxu0 0.0
        %515 = vmatprep.subr.mxu0 0.0
        %516 = vmatpush1.msra.mxu0 0.0
        %517 = vmatprep.mubr.f32.mxu0 0.0
        %518 = vmatmul.mubr.f32.gmra.mrb[0].mxu0 %v354
        %v519 = vpop.f32.mrb[0].mxu0
        %v520 = vadd.f32 %v351, %v519
        %v521 = vpop.f32.mrb[0].mxu0
        %522 = vmatprep.mubr.f32.mxu0 0.0
        %523 = vmatmul.mubr.f32.gmra.mrb[0].mxu0 %v357
        %v524 = vpop.f32.mrb[0].mxu0
        %v525 = vadd.f32 %v351, %v524
        %v526 = vpop.f32.mrb[0].mxu0
        %527 = vmatprep.mubr.f32.mxu0 0.0
        %528 = vmatmul.mubr.f32.gmra.mrb[0].mxu0 %v360
        %v529 = vpop.f32.mrb[0].mxu0
        %v530 = vadd.f32 %v351, %v529
        %v531 = vpop.f32.mrb[0].mxu0
        %532 = vmatprep.mubr.f32.mxu0 0.0
        %533 = vmatmul.mubr.f32.gmra.mrb[0].mxu0 %v363
        %v534 = vpop.f32.mrb[0].mxu0
        %v535 = vadd.f32 %v351, %v534
        %v536 = vpop.f32.mrb[0].mxu0
        %537 = vmatprep.mubr.f32.mxu0 0.0
        %538 = vmatmul.mubr.f32.gmra.mrb[0].mxu0 %v366
        %v539 = vpop.f32.mrb[0].mxu0
        %v540 = vadd.f32 %v351, %v539
        %v541 = vpop.f32.mrb[0].mxu0
        %542 = vmatprep.mubr.f32.mxu0 0.0
        %543 = vmatmul.mubr.f32.gmra.mrb[0].mxu0 %v369
        %v544 = vpop.f32.mrb[0].mxu0
        %v545 = vadd.f32 %v351, %v544
        %v546 = vpop.f32.mrb[0].mxu0
        %547 = vmatprep.mubr.f32.mxu0 0.0
        %548 = vmatmul.mubr.f32.gmra.mrb[0].mxu0 %v372
        %v549 = vpop.f32.mrb[0].mxu0
        %v550 = vadd.f32 %v351, %v549
        %v551 = vpop.f32.mrb[0].mxu0
        %552 = vmatprep.mubr.f32.mxu0 0.0
        %553 = vmatmul.mubr.f32.gmra.mrb[0].mxu0 %v375
        %v554 = vpop.f32.mrb[0].mxu0
        %v555 = vadd.f32 %v351, %v554
        %v556 = vpop.f32.mrb[0].mxu0
        %557 = vmatprep.mubr.f32.mxu0 0.0
        %558 = vmatmul.mubr.f32.gmra.mrb[0].mxu0 %v378
        %v559 = vpop.f32.mrb[0].mxu0
        %v560 = vadd.f32 %v351, %v559
        %v561 = vpop.f32.mrb[0].mxu0
        %562 = vmatprep.mubr.f32.mxu0 0.0
        %563 = vmatmul.mubr.f32.gmra.mrb[0].mxu0 %v381
        %v564 = vpop.f32.mrb[0].mxu0
        %v565 = vadd.f32 %v351, %v564
        %v566 = vpop.f32.mrb[0].mxu0
        %567 = vmatprep.mubr.f32.mxu0 0.0
        %568 = vmatmul.mubr.f32.gmra.mrb[0].mxu0 %v384
        %v569 = vpop.f32.mrb[0].mxu0
        %v570 = vadd.f32 %v351, %v569
        %v571 = vpop.f32.mrb[0].mxu0
        %572 = vmatprep.mubr.f32.mxu0 0.0
        %573 = vmatmul.mubr.f32.gmra.mrb[0].mxu0 %v387
        %v574 = vpop.f32.mrb[0].mxu0
        %v575 = vadd.f32 %v351, %v574
        %v576 = vpop.f32.mrb[0].mxu0
        %577 = vmatprep.mubr.f32.mxu0 0.0
        %578 = vmatmul.mubr.f32.gmra.mrb[0].mxu0 %v390
        %v579 = vpop.f32.mrb[0].mxu0
        %v580 = vadd.f32 %v351, %v579
        %v581 = vpop.f32.mrb[0].mxu0
        %582 = vmatprep.mubr.f32.mxu0 0.0
        %583 = vmatmul.mubr.f32.gmra.mrb[0].mxu0 %v393
        %v584 = vpop.f32.mrb[0].mxu0
        %v585 = vadd.f32 %v351, %v584
        %v586 = vpop.f32.mrb[0].mxu0
        %587 = vmatprep.mubr.f32.mxu0 0.0
        %588 = vmatmul.mubr.f32.gmra.mrb[0].mxu0 %v396
        %v589 = vpop.f32.mrb[0].mxu0
        %v590 = vadd.f32 %v351, %v589
        %v591 = vpop.f32.mrb[0].mxu0
        %592 = vmatprep.mubr.f32.mxu0 0.0
        %593 = vmatmul.mubr.f32.gmra.mrb[0].mxu0 %v399
        %v594 = vpop.f32.mrb[0].mxu0
        %v595 = vadd.f32 %v351, %v594
        %v596 = vpop.f32.mrb[0].mxu0
        %597 = vmatprep.mubr.f32.mxu0 0.0
        %598 = vmatmul.mubr.f32.gmra.mrb[0].mxu0 %v402
        %v599 = vpop.f32.mrb[0].mxu0
        %v600 = vadd.f32 %v351, %v599
        %v601 = vpop.f32.mrb[0].mxu0
        %602 = vmatprep.mubr.f32.mxu0 0.0
        %603 = vmatmul.mubr.f32.gmra.mrb[0].mxu0 %v405
        %v604 = vpop.f32.mrb[0].mxu0
        %v605 = vadd.f32 %v351, %v604
        %v606 = vpop.f32.mrb[0].mxu0
        %607 = vmatprep.mubr.f32.mxu0 0.0
        %608 = vmatmul.mubr.f32.gmra.mrb[0].mxu0 %v408
        %v609 = vpop.f32.mrb[0].mxu0
        %v610 = vadd.f32 %v351, %v609
        %v611 = vpop.f32.mrb[0].mxu0
        %612 = vmatprep.mubr.f32.mxu0 0.0
        %613 = vmatmul.mubr.f32.gmra.mrb[0].mxu0 %v411
        %v614 = vpop.f32.mrb[0].mxu0
        %v615 = vadd.f32 %v351, %v614
        %v616 = vpop.f32.mrb[0].mxu0
        %617 = vmatprep.mubr.f32.mxu0 0.0
        %618 = vmatmul.mubr.f32.gmra.mrb[0].mxu0 %v414
        %v619 = vpop.f32.mrb[0].mxu0
        %v620 = vadd.f32 %v351, %v619
        %v621 = vpop.f32.mrb[0].mxu0
        %622 = vmatprep.mubr.f32.mxu0 0.0
        %623 = vmatmul.mubr.f32.gmra.mrb[0].mxu0 %v417
        %v624 = vpop.f32.mrb[0].mxu0
        %v625 = vadd.f32 %v351, %v624
        %v626 = vpop.f32.mrb[0].mxu0
        %627 = vmatprep.mubr.f32.mxu0 0.0
        %628 = vmatmul.mubr.f32.gmra.mrb[0].mxu0 %v420
        %v629 = vpop.f32.mrb[0].mxu0
        %v630 = vadd.f32 %v351, %v629
        %v631 = vpop.f32.mrb[0].mxu0
        %632 = vmatprep.mubr.f32.mxu0 0.0
        %633 = vmatmul.mubr.f32.gmra.mrb[0].mxu0 %v423
        %v634 = vpop.f32.mrb[0].mxu0
        %v635 = vadd.f32 %v351, %v634
        %v636 = vpop.f32.mrb[0].mxu0
        %637 = vmatprep.mubr.f32.mxu0 0.0
        %638 = vmatmul.mubr.f32.gmra.mrb[0].mxu0 %v426
        %v639 = vpop.f32.mrb[0].mxu0
        %v640 = vadd.f32 %v351, %v639
        %v641 = vpop.f32.mrb[0].mxu0
        %642 = vmatprep.mubr.f32.mxu0 0.0
        %643 = vmatmul.mubr.f32.gmra.mrb[0].mxu0 %v429
        %v644 = vpop.f32.mrb[0].mxu0
        %v645 = vadd.f32 %v351, %v644
        %v646 = vpop.f32.mrb[0].mxu0
        %647 = vmatprep.mubr.f32.mxu0 0.0
        %648 = vmatmul.mubr.f32.gmra.mrb[0].mxu0 %v432
        %v649 = vpop.f32.mrb[0].mxu0
        %v650 = vadd.f32 %v351, %v649
        %v651 = vpop.f32.mrb[0].mxu0
        %652 = vmatprep.mubr.f32.mxu0 0.0
        %653 = vmatmul.mubr.f32.gmra.mrb[0].mxu0 %v435
        %v654 = vpop.f32.mrb[0].mxu0
        %v655 = vadd.f32 %v351, %v654
        %v656 = vpop.f32.mrb[0].mxu0
        %657 = vmatprep.mubr.f32.mxu0 0.0
        %658 = vmatmul.mubr.f32.gmra.mrb[0].mxu0 %v438
        %v659 = vpop.f32.mrb[0].mxu0
        %v660 = vadd.f32 %v351, %v659
        %v661 = vpop.f32.mrb[0].mxu0
        %662 = vmatprep.mubr.f32.mxu0 0.0
        %663 = vmatmul.mubr.f32.gmra.mrb[0].mxu0 %v441
        %v664 = vpop.f32.mrb[0].mxu0
        %v665 = vadd.f32 %v351, %v664
        %v666 = vpop.f32.mrb[0].mxu0
        %667 = vmatprep.mubr.f32.mxu0 0.0
        %668 = vmatmul.mubr.f32.gmra.mrb[0].mxu0 %v444
        %v669 = vpop.f32.mrb[0].mxu0
        %v670 = vadd.f32 %v351, %v669
        %v671 = vpop.f32.mrb[0].mxu0
        %672 = vmatprep.mubr.f32.mxu0 0.0
        %673 = vmatmul.mubr.f32.gmra.mrb[0].mxu0 %v447
        %v674 = vpop.f32.mrb[0].mxu0
        %v675 = vadd.f32 %v351, %v674
        %v676 = vpop.f32.mrb[0].mxu0
        %677 = vdwg.mxu0
        %vm678 = vcmp.ge.f32.partialorder %v520, 0.0
        %vm679 = vcmp.ge.f32.partialorder %v525, 0.0
        %vm680 = vcmp.ge.f32.partialorder %v530, 0.0
        %vm681 = vcmp.ge.f32.partialorder %v535, 0.0
        %vm682 = vcmp.ge.f32.partialorder %v540, 0.0
        %vm683 = vcmp.ge.f32.partialorder %v545, 0.0
        %vm684 = vcmp.ge.f32.partialorder %v550, 0.0
        %vm685 = vcmp.ge.f32.partialorder %v555, 0.0
        %vm686 = vcmp.ge.f32.partialorder %v560, 0.0
        %vm687 = vcmp.ge.f32.partialorder %v565, 0.0
        %vm688 = vcmp.ge.f32.partialorder %v570, 0.0
        %vm689 = vcmp.ge.f32.partialorder %v575, 0.0
        %vm690 = vcmp.ge.f32.partialorder %v580, 0.0
        %vm691 = vcmp.ge.f32.partialorder %v585, 0.0
        %vm692 = vcmp.ge.f32.partialorder %v590, 0.0
        %vm693 = vcmp.ge.f32.partialorder %v595, 0.0
        %vm694 = vcmp.ge.f32.partialorder %v600, 0.0
        %vm695 = vcmp.ge.f32.partialorder %v605, 0.0
        %vm696 = vcmp.ge.f32.partialorder %v610, 0.0
        %vm697 = vcmp.ge.f32.partialorder %v615, 0.0
        %vm698 = vcmp.ge.f32.partialorder %v620, 0.0
        %vm699 = vcmp.ge.f32.partialorder %v625, 0.0
        %vm700 = vcmp.ge.f32.partialorder %v630, 0.0
        %vm701 = vcmp.ge.f32.partialorder %v635, 0.0
        %vm702 = vcmp.ge.f32.partialorder %v640, 0.0
        %vm703 = vcmp.ge.f32.partialorder %v645, 0.0
        %vm704 = vcmp.ge.f32.partialorder %v650, 0.0
        %vm705 = vcmp.ge.f32.partialorder %v655, 0.0
        %vm706 = vcmp.ge.f32.partialorder %v660, 0.0
        %vm707 = vcmp.ge.f32.partialorder %v665, 0.0
        %vm708 = vcmp.ge.f32.partialorder %v670, 0.0
        %vm709 = vcmp.ge.f32.partialorder %v675, 0.0
        %v710 = vmul.f32 %v520, 0.01
        %v711 = vmul.f32 %v525, 0.01
        %v712 = vmul.f32 %v530, 0.01
        %v713 = vmul.f32 %v535, 0.01
        %v714 = vmul.f32 %v540, 0.01
        %v715 = vmul.f32 %v545, 0.01
        %v716 = vmul.f32 %v550, 0.01
        %v717 = vmul.f32 %v555, 0.01
        %v718 = vmul.f32 %v560, 0.01
        %v719 = vmul.f32 %v565, 0.01
        %v720 = vmul.f32 %v570, 0.01
        %v721 = vmul.f32 %v575, 0.01
        %v722 = vmul.f32 %v580, 0.01
        %v723 = vmul.f32 %v585, 0.01
        %v724 = vmul.f32 %v590, 0.01
        %v725 = vmul.f32 %v595, 0.01
        %v726 = vmul.f32 %v600, 0.01
        %v727 = vmul.f32 %v605, 0.01
        %v728 = vmul.f32 %v610, 0.01
        %v729 = vmul.f32 %v615, 0.01
        %v730 = vmul.f32 %v620, 0.01
        %v731 = vmul.f32 %v625, 0.01
        %v732 = vmul.f32 %v630, 0.01
        %v733 = vmul.f32 %v635, 0.01
        %v734 = vmul.f32 %v640, 0.01
        %v735 = vmul.f32 %v645, 0.01
        %v736 = vmul.f32 %v650, 0.01
        %v737 = vmul.f32 %v655, 0.01
        %v738 = vmul.f32 %v660, 0.01
        %v739 = vmul.f32 %v665, 0.01
        %v740 = vmul.f32 %v670, 0.01
        %v741 = vmul.f32 %v675, 0.01
        %v742 = vsel %vm678, %v520, %v710
        %v743 = vsel %vm679, %v525, %v711
        %v744 = vsel %vm680, %v530, %v712
        %v745 = vsel %vm681, %v535, %v713
        %v746 = vsel %vm682, %v540, %v714
        %v747 = vsel %vm683, %v545, %v715
        %v748 = vsel %vm684, %v550, %v716
        %v749 = vsel %vm685, %v555, %v717
        %v750 = vsel %vm686, %v560, %v718
        %v751 = vsel %vm687, %v565, %v719
        %v752 = vsel %vm688, %v570, %v720
        %v753 = vsel %vm689, %v575, %v721
        %v754 = vsel %vm690, %v580, %v722
        %v755 = vsel %vm691, %v585, %v723
        %v756 = vsel %vm692, %v590, %v724
        %v757 = vsel %vm693, %v595, %v725
        %v758 = vsel %vm694, %v600, %v726
        %v759 = vsel %vm695, %v605, %v727
        %v760 = vsel %vm696, %v610, %v728
        %v761 = vsel %vm697, %v615, %v729
        %v762 = vsel %vm698, %v620, %v730
        %v763 = vsel %vm699, %v625, %v731
        %v764 = vsel %vm700, %v630, %v732
        %v765 = vsel %vm701, %v635, %v733
        %v766 = vsel %vm702, %v640, %v734
        %v767 = vsel %vm703, %v645, %v735
        %v768 = vsel %vm704, %v650, %v736
        %v769 = vsel %vm705, %v655, %v737
        %v770 = vsel %vm706, %v660, %v738
        %v771 = vsel %vm707, %v665, %v739
        %v772 = vsel %vm708, %v670, %v740
        %v773 = vsel %vm709, %v675, %v741
        %774 = vmatprep.subr.mxu0 0.0
        %775 = vmatpush1.msra.mxu0 %v299
        %776 = vmatprep.subr.mxu0 0.0
        %777 = vmatpush1.msra.mxu0 %v300
        %778 = vmatprep.subr.mxu0 0.0
        %779 = vmatpush1.msra.mxu0 %v301
        %780 = vmatprep.subr.mxu0 0.0
        %781 = vmatpush1.msra.mxu0 %v302
        %782 = vmatprep.subr.mxu0 0.0
        %783 = vmatpush1.msra.mxu0 %v303
        %784 = vmatprep.subr.mxu0 0.0
        %785 = vmatpush1.msra.mxu0 %v304
        %786 = vmatprep.subr.mxu0 0.0
        %787 = vmatpush1.msra.mxu0 %v305
        %788 = vmatprep.subr.mxu0 0.0
        %789 = vmatpush1.msra.mxu0 %v306
        %790 = vmatprep.subr.mxu0 0.0
        %791 = vmatpush1.msra.mxu0 %v307
        %792 = vmatprep.subr.mxu0 0.0
        %793 = vmatpush1.msra.mxu0 %v308
        %794 = vmatprep.subr.mxu0 0.0
        %795 = vmatpush1.msra.mxu0 %v309
        %796 = vmatprep.subr.mxu0 0.0
        %797 = vmatpush1.msra.mxu0 %v310
        %798 = vmatprep.subr.mxu0 0.0
        %799 = vmatpush1.msra.mxu0 %v311
        %800 = vmatprep.subr.mxu0 0.0
        %801 = vmatpush1.msra.mxu0 %v312
        %802 = vmatprep.subr.mxu0 0.0
        %803 = vmatpush1.msra.mxu0 %v313
        %804 = vmatprep.subr.mxu0 0.0
        %805 = vmatpush1.msra.mxu0 %v314
        %806 = vmatprep.subr.mxu0 0.0
        %807 = vmatpush1.msra.mxu0 0.0
        %808 = vmatprep.subr.mxu0 0.0
        %809 = vmatpush1.msra.mxu0 0.0
        %810 = vmatprep.subr.mxu0 0.0
        %811 = vmatpush1.msra.mxu0 0.0
        %812 = vmatprep.subr.mxu0 0.0
        %813 = vmatpush1.msra.mxu0 0.0
        %814 = vmatprep.subr.mxu0 0.0
        %815 = vmatpush1.msra.mxu0 0.0
        %816 = vmatprep.subr.mxu0 0.0
        %817 = vmatpush1.msra.mxu0 0.0
        %818 = vmatprep.subr.mxu0 0.0
        %819 = vmatpush1.msra.mxu0 0.0
        %820 = vmatprep.subr.mxu0 0.0
        %821 = vmatpush1.msra.mxu0 0.0
        %822 = vmatprep.subr.mxu0 0.0
        %823 = vmatpush1.msra.mxu0 0.0
        %824 = vmatprep.subr.mxu0 0.0
        %825 = vmatpush1.msra.mxu0 0.0
        %826 = vmatprep.subr.mxu0 0.0
        %827 = vmatpush1.msra.mxu0 0.0
        %828 = vmatprep.subr.mxu0 0.0
        %829 = vmatpush1.msra.mxu0 0.0
        %830 = vmatprep.subr.mxu0 0.0
        %831 = vmatpush1.msra.mxu0 0.0
        %832 = vmatprep.subr.mxu0 0.0
        %833 = vmatpush1.msra.mxu0 0.0
        %834 = vmatprep.subr.mxu0 0.0
        %835 = vmatpush1.msra.mxu0 0.0
        %836 = vmatprep.subr.mxu0 0.0
        %837 = vmatpush1.msra.mxu0 0.0
        %838 = vmatprep.mubr.f32.mxu0 0.0
        %839 = vmatmul.mubr.f32.gmra.mrb[0].mxu0 %v742
        %v840 = vpop.f32.mrb[0].mxu0
        %v841 = vadd.f32 0.0, %v840
        %v842 = vpop.f32.mrb[0].mxu0
        %843 = vmatprep.mubr.f32.mxu0 0.0
        %844 = vmatmul.mubr.f32.gmra.mrb[0].mxu0 %v743
        %v845 = vpop.f32.mrb[0].mxu0
        %v846 = vadd.f32 0.0, %v845
        %v847 = vpop.f32.mrb[0].mxu0
        %848 = vmatprep.mubr.f32.mxu0 0.0
        %849 = vmatmul.mubr.f32.gmra.mrb[0].mxu0 %v744
        %v850 = vpop.f32.mrb[0].mxu0
        %v851 = vadd.f32 0.0, %v850
        %v852 = vpop.f32.mrb[0].mxu0
        %853 = vmatprep.mubr.f32.mxu0 0.0
        %854 = vmatmul.mubr.f32.gmra.mrb[0].mxu0 %v745
        %v855 = vpop.f32.mrb[0].mxu0
        %v856 = vadd.f32 0.0, %v855
        %v857 = vpop.f32.mrb[0].mxu0
        %858 = vmatprep.mubr.f32.mxu0 0.0
        %859 = vmatmul.mubr.f32.gmra.mrb[0].mxu0 %v746
        %v860 = vpop.f32.mrb[0].mxu0
        %v861 = vadd.f32 0.0, %v860
        %v862 = vpop.f32.mrb[0].mxu0
        %863 = vmatprep.mubr.f32.mxu0 0.0
        %864 = vmatmul.mubr.f32.gmra.mrb[0].mxu0 %v747
        %v865 = vpop.f32.mrb[0].mxu0
        %v866 = vadd.f32 0.0, %v865
        %v867 = vpop.f32.mrb[0].mxu0
        %868 = vmatprep.mubr.f32.mxu0 0.0
        %869 = vmatmul.mubr.f32.gmra.mrb[0].mxu0 %v748
        %v870 = vpop.f32.mrb[0].mxu0
        %v871 = vadd.f32 0.0, %v870
        %v872 = vpop.f32.mrb[0].mxu0
        %873 = vmatprep.mubr.f32.mxu0 0.0
        %874 = vmatmul.mubr.f32.gmra.mrb[0].mxu0 %v749
        %v875 = vpop.f32.mrb[0].mxu0
        %v876 = vadd.f32 0.0, %v875
        %v877 = vpop.f32.mrb[0].mxu0
        %878 = vmatprep.mubr.f32.mxu0 0.0
        %879 = vmatmul.mubr.f32.gmra.mrb[0].mxu0 %v750
        %v880 = vpop.f32.mrb[0].mxu0
        %v881 = vadd.f32 0.0, %v880
        %v882 = vpop.f32.mrb[0].mxu0
        %883 = vmatprep.mubr.f32.mxu0 0.0
        %884 = vmatmul.mubr.f32.gmra.mrb[0].mxu0 %v751
        %v885 = vpop.f32.mrb[0].mxu0
        %v886 = vadd.f32 0.0, %v885
        %v887 = vpop.f32.mrb[0].mxu0
        %888 = vmatprep.mubr.f32.mxu0 0.0
        %889 = vmatmul.mubr.f32.gmra.mrb[0].mxu0 %v752
        %v890 = vpop.f32.mrb[0].mxu0
        %v891 = vadd.f32 0.0, %v890
        %v892 = vpop.f32.mrb[0].mxu0
        %893 = vmatprep.mubr.f32.mxu0 0.0
        %894 = vmatmul.mubr.f32.gmra.mrb[0].mxu0 %v753
        %v895 = vpop.f32.mrb[0].mxu0
        %v896 = vadd.f32 0.0, %v895
        %v897 = vpop.f32.mrb[0].mxu0
        %898 = vmatprep.mubr.f32.mxu0 0.0
        %899 = vmatmul.mubr.f32.gmra.mrb[0].mxu0 %v754
        %v900 = vpop.f32.mrb[0].mxu0
        %v901 = vadd.f32 0.0, %v900
        %v902 = vpop.f32.mrb[0].mxu0
        %903 = vmatprep.mubr.f32.mxu0 0.0
        %904 = vmatmul.mubr.f32.gmra.mrb[0].mxu0 %v755
        %v905 = vpop.f32.mrb[0].mxu0
        %v906 = vadd.f32 0.0, %v905
        %v907 = vpop.f32.mrb[0].mxu0
        %908 = vmatprep.mubr.f32.mxu0 0.0
        %909 = vmatmul.mubr.f32.gmra.mrb[0].mxu0 %v756
        %v910 = vpop.f32.mrb[0].mxu0
        %v911 = vadd.f32 0.0, %v910
        %v912 = vpop.f32.mrb[0].mxu0
        %913 = vmatprep.mubr.f32.mxu0 0.0
        %914 = vmatmul.mubr.f32.gmra.mrb[0].mxu0 %v757
        %v915 = vpop.f32.mrb[0].mxu0
        %v916 = vadd.f32 0.0, %v915
        %v917 = vpop.f32.mrb[0].mxu0
        %918 = vmatprep.mubr.f32.mxu0 0.0
        %919 = vmatmul.mubr.f32.gmra.mrb[0].mxu0 %v758
        %v920 = vpop.f32.mrb[0].mxu0
        %v921 = vadd.f32 0.0, %v920
        %v922 = vpop.f32.mrb[0].mxu0
        %923 = vmatprep.mubr.f32.mxu0 0.0
        %924 = vmatmul.mubr.f32.gmra.mrb[0].mxu0 %v759
        %v925 = vpop.f32.mrb[0].mxu0
        %v926 = vadd.f32 0.0, %v925
        %v927 = vpop.f32.mrb[0].mxu0
        %928 = vmatprep.mubr.f32.mxu0 0.0
        %929 = vmatmul.mubr.f32.gmra.mrb[0].mxu0 %v760
        %v930 = vpop.f32.mrb[0].mxu0
        %v931 = vadd.f32 0.0, %v930
        %v932 = vpop.f32.mrb[0].mxu0
        %933 = vmatprep.mubr.f32.mxu0 0.0
        %934 = vmatmul.mubr.f32.gmra.mrb[0].mxu0 %v761
        %v935 = vpop.f32.mrb[0].mxu0
        %v936 = vadd.f32 0.0, %v935
        %v937 = vpop.f32.mrb[0].mxu0
        %938 = vmatprep.mubr.f32.mxu0 0.0
        %939 = vmatmul.mubr.f32.gmra.mrb[0].mxu0 %v762
        %v940 = vpop.f32.mrb[0].mxu0
        %v941 = vadd.f32 0.0, %v940
        %v942 = vpop.f32.mrb[0].mxu0
        %943 = vmatprep.mubr.f32.mxu0 0.0
        %944 = vmatmul.mubr.f32.gmra.mrb[0].mxu0 %v763
        %v945 = vpop.f32.mrb[0].mxu0
        %v946 = vadd.f32 0.0, %v945
        %v947 = vpop.f32.mrb[0].mxu0
        %948 = vmatprep.mubr.f32.mxu0 0.0
        %949 = vmatmul.mubr.f32.gmra.mrb[0].mxu0 %v764
        %v950 = vpop.f32.mrb[0].mxu0
        %v951 = vadd.f32 0.0, %v950
        %v952 = vpop.f32.mrb[0].mxu0
        %953 = vmatprep.mubr.f32.mxu0 0.0
        %954 = vmatmul.mubr.f32.gmra.mrb[0].mxu0 %v765
        %v955 = vpop.f32.mrb[0].mxu0
        %v956 = vadd.f32 0.0, %v955
        %v957 = vpop.f32.mrb[0].mxu0
        %958 = vmatprep.mubr.f32.mxu0 0.0
        %959 = vmatmul.mubr.f32.gmra.mrb[0].mxu0 %v766
        %v960 = vpop.f32.mrb[0].mxu0
        %v961 = vadd.f32 0.0, %v960
        %v962 = vpop.f32.mrb[0].mxu0
        %963 = vmatprep.mubr.f32.mxu0 0.0
        %964 = vmatmul.mubr.f32.gmra.mrb[0].mxu0 %v767
        %v965 = vpop.f32.mrb[0].mxu0
        %v966 = vadd.f32 0.0, %v965
        %v967 = vpop.f32.mrb[0].mxu0
        %968 = vmatprep.mubr.f32.mxu0 0.0
        %969 = vmatmul.mubr.f32.gmra.mrb[0].mxu0 %v768
        %v970 = vpop.f32.mrb[0].mxu0
        %v971 = vadd.f32 0.0, %v970
        %v972 = vpop.f32.mrb[0].mxu0
        %973 = vmatprep.mubr.f32.mxu0 0.0
        %974 = vmatmul.mubr.f32.gmra.mrb[0].mxu0 %v769
        %v975 = vpop.f32.mrb[0].mxu0
        %v976 = vadd.f32 0.0, %v975
        %v977 = vpop.f32.mrb[0].mxu0
        %978 = vmatprep.mubr.f32.mxu0 0.0
        %979 = vmatmul.mubr.f32.gmra.mrb[0].mxu0 %v770
        %v980 = vpop.f32.mrb[0].mxu0
        %v981 = vadd.f32 0.0, %v980
        %v982 = vpop.f32.mrb[0].mxu0
        %983 = vmatprep.mubr.f32.mxu0 0.0
        %984 = vmatmul.mubr.f32.gmra.mrb[0].mxu0 %v771
        %v985 = vpop.f32.mrb[0].mxu0
        %v986 = vadd.f32 0.0, %v985
        %v987 = vpop.f32.mrb[0].mxu0
        %988 = vmatprep.mubr.f32.mxu0 0.0
        %989 = vmatmul.mubr.f32.gmra.mrb[0].mxu0 %v772
        %v990 = vpop.f32.mrb[0].mxu0
        %v991 = vadd.f32 0.0, %v990
        %v992 = vpop.f32.mrb[0].mxu0
        %993 = vmatprep.mubr.f32.mxu0 0.0
        %994 = vmatmul.mubr.f32.gmra.mrb[0].mxu0 %v773
        %v995 = vpop.f32.mrb[0].mxu0
        %v996 = vadd.f32 0.0, %v995
        %v997 = vpop.f32.mrb[0].mxu0
        %998 = vdwg.mxu0
        %v999 = vsub.f32 %v742, %v841
        %v1000 = vsub.f32 %v743, %v846
        %v1001 = vsub.f32 %v744, %v851
        %v1002 = vsub.f32 %v745, %v856
        %v1003 = vsub.f32 %v746, %v861
        %v1004 = vsub.f32 %v747, %v866
        %v1005 = vsub.f32 %v748, %v871
        %v1006 = vsub.f32 %v749, %v876
        %v1007 = vsub.f32 %v750, %v881
        %v1008 = vsub.f32 %v751, %v886
        %v1009 = vsub.f32 %v752, %v891
        %v1010 = vsub.f32 %v753, %v896
        %v1011 = vsub.f32 %v754, %v901
        %v1012 = vsub.f32 %v755, %v906
        %v1013 = vsub.f32 %v756, %v911
        %v1014 = vsub.f32 %v757, %v916
        %v1015 = vsub.f32 %v758, %v921
        %v1016 = vsub.f32 %v759, %v926
        %v1017 = vsub.f32 %v760, %v931
        %v1018 = vsub.f32 %v761, %v936
        %v1019 = vsub.f32 %v762, %v941
        %v1020 = vsub.f32 %v763, %v946
        %v1021 = vsub.f32 %v764, %v951
        %v1022 = vsub.f32 %v765, %v956
        %v1023 = vsub.f32 %v766, %v961
        %v1024 = vsub.f32 %v767, %v966
        %v1025 = vsub.f32 %v768, %v971
        %v1026 = vsub.f32 %v769, %v976
        %v1027 = vsub.f32 %v770, %v981
        %v1028 = vsub.f32 %v771, %v986
        %v1029 = vsub.f32 %v772, %v991
        %v1030 = vsub.f32 %v773, %v996
        %v1031 = vmul.f32 %v999, %v999
        %v1032 = vmul.f32 %v1000, %v1000
        %v1033 = vmul.f32 %v1001, %v1001
        %v1034 = vmul.f32 %v1002, %v1002
        %v1035 = vmul.f32 %v1003, %v1003
        %v1036 = vmul.f32 %v1004, %v1004
        %v1037 = vmul.f32 %v1005, %v1005
        %v1038 = vmul.f32 %v1006, %v1006
        %v1039 = vmul.f32 %v1007, %v1007
        %v1040 = vmul.f32 %v1008, %v1008
        %v1041 = vmul.f32 %v1009, %v1009
        %v1042 = vmul.f32 %v1010, %v1010
        %v1043 = vmul.f32 %v1011, %v1011
        %v1044 = vmul.f32 %v1012, %v1012
        %v1045 = vmul.f32 %v1013, %v1013
        %v1046 = vmul.f32 %v1014, %v1014
        %v1047 = vmul.f32 %v1015, %v1015
        %v1048 = vmul.f32 %v1016, %v1016
        %v1049 = vmul.f32 %v1017, %v1017
        %v1050 = vmul.f32 %v1018, %v1018
        %v1051 = vmul.f32 %v1019, %v1019
        %v1052 = vmul.f32 %v1020, %v1020
        %v1053 = vmul.f32 %v1021, %v1021
        %v1054 = vmul.f32 %v1022, %v1022
        %v1055 = vmul.f32 %v1023, %v1023
        %v1056 = vmul.f32 %v1024, %v1024
        %v1057 = vmul.f32 %v1025, %v1025
        %v1058 = vmul.f32 %v1026, %v1026
        %v1059 = vmul.f32 %v1027, %v1027
        %v1060 = vmul.f32 %v1028, %v1028
        %v1061 = vmul.f32 %v1029, %v1029
        %v1062 = vmul.f32 %v1030, %v1030
        %1063 = vmatprep.subr.mxu0 0.0
        %1064 = vmatpush1.msra.mxu0 %v299
        %1065 = vmatprep.subr.mxu0 0.0
        %1066 = vmatpush1.msra.mxu0 %v300
        %1067 = vmatprep.subr.mxu0 0.0
        %1068 = vmatpush1.msra.mxu0 %v301
        %1069 = vmatprep.subr.mxu0 0.0
        %1070 = vmatpush1.msra.mxu0 %v302
        %1071 = vmatprep.subr.mxu0 0.0
        %1072 = vmatpush1.msra.mxu0 %v303
        %1073 = vmatprep.subr.mxu0 0.0
        %1074 = vmatpush1.msra.mxu0 %v304
        %1075 = vmatprep.subr.mxu0 0.0
        %1076 = vmatpush1.msra.mxu0 %v305
        %1077 = vmatprep.subr.mxu0 0.0
        %1078 = vmatpush1.msra.mxu0 %v306
        %1079 = vmatprep.subr.mxu0 0.0
        %1080 = vmatpush1.msra.mxu0 %v307
        %1081 = vmatprep.subr.mxu0 0.0
        %1082 = vmatpush1.msra.mxu0 %v308
        %1083 = vmatprep.subr.mxu0 0.0
        %1084 = vmatpush1.msra.mxu0 %v309
        %1085 = vmatprep.subr.mxu0 0.0
        %1086 = vmatpush1.msra.mxu0 %v310
        %1087 = vmatprep.subr.mxu0 0.0
        %1088 = vmatpush1.msra.mxu0 %v311
        %1089 = vmatprep.subr.mxu0 0.0
        %1090 = vmatpush1.msra.mxu0 %v312
        %1091 = vmatprep.subr.mxu0 0.0
        %1092 = vmatpush1.msra.mxu0 %v313
        %1093 = vmatprep.subr.mxu0 0.0
        %1094 = vmatpush1.msra.mxu0 %v314
        %1095 = vmatprep.subr.mxu0 0.0
        %1096 = vmatpush1.msra.mxu0 0.0
        %1097 = vmatprep.subr.mxu0 0.0
        %1098 = vmatpush1.msra.mxu0 0.0
        %1099 = vmatprep.subr.mxu0 0.0
        %1100 = vmatpush1.msra.mxu0 0.0
        %1101 = vmatprep.subr.mxu0 0.0
        %1102 = vmatpush1.msra.mxu0 0.0
        %1103 = vmatprep.subr.mxu0 0.0
        %1104 = vmatpush1.msra.mxu0 0.0
        %1105 = vmatprep.subr.mxu0 0.0
        %1106 = vmatpush1.msra.mxu0 0.0
        %1107 = vmatprep.subr.mxu0 0.0
        %1108 = vmatpush1.msra.mxu0 0.0
        %1109 = vmatprep.subr.mxu0 0.0
        %1110 = vmatpush1.msra.mxu0 0.0
        %1111 = vmatprep.subr.mxu0 0.0
        %1112 = vmatpush1.msra.mxu0 0.0
        %1113 = vmatprep.subr.mxu0 0.0
        %1114 = vmatpush1.msra.mxu0 0.0
        %1115 = vmatprep.subr.mxu0 0.0
        %1116 = vmatpush1.msra.mxu0 0.0
        %1117 = vmatprep.subr.mxu0 0.0
        %1118 = vmatpush1.msra.mxu0 0.0
        %1119 = vmatprep.subr.mxu0 0.0
        %1120 = vmatpush1.msra.mxu0 0.0
        %1121 = vmatprep.subr.mxu0 0.0
        %1122 = vmatpush1.msra.mxu0 0.0
        %1123 = vmatprep.subr.mxu0 0.0
        %1124 = vmatpush1.msra.mxu0 0.0
        %1125 = vmatprep.subr.mxu0 0.0
        %1126 = vmatpush1.msra.mxu0 0.0
        %1127 = vmatprep.mubr.f32.mxu0 0.0
        %1128 = vmatmul.mubr.f32.gmra.mrb[0].mxu0 %v1031
        %v1129 = vpop.f32.mrb[0].mxu0
        %v1130 = vadd.f32 1e-06, %v1129
        %v1131 = vpop.f32.mrb[0].mxu0
        %1132 = vmatprep.mubr.f32.mxu0 0.0
        %1133 = vmatmul.mubr.f32.gmra.mrb[0].mxu0 %v1032
        %v1134 = vpop.f32.mrb[0].mxu0
        %v1135 = vadd.f32 1e-06, %v1134
        %v1136 = vpop.f32.mrb[0].mxu0
        %1137 = vmatprep.mubr.f32.mxu0 0.0
        %1138 = vmatmul.mubr.f32.gmra.mrb[0].mxu0 %v1033
        %v1139 = vpop.f32.mrb[0].mxu0
        %v1140 = vadd.f32 1e-06, %v1139
        %v1141 = vpop.f32.mrb[0].mxu0
        %1142 = vmatprep.mubr.f32.mxu0 0.0
        %1143 = vmatmul.mubr.f32.gmra.mrb[0].mxu0 %v1034
        %v1144 = vpop.f32.mrb[0].mxu0
        %v1145 = vadd.f32 1e-06, %v1144
        %v1146 = vpop.f32.mrb[0].mxu0
        %1147 = vmatprep.mubr.f32.mxu0 0.0
        %1148 = vmatmul.mubr.f32.gmra.mrb[0].mxu0 %v1035
        %v1149 = vpop.f32.mrb[0].mxu0
        %v1150 = vadd.f32 1e-06, %v1149
        %v1151 = vpop.f32.mrb[0].mxu0
        %1152 = vmatprep.mubr.f32.mxu0 0.0
        %1153 = vmatmul.mubr.f32.gmra.mrb[0].mxu0 %v1036
        %v1154 = vpop.f32.mrb[0].mxu0
        %v1155 = vadd.f32 1e-06, %v1154
        %v1156 = vpop.f32.mrb[0].mxu0
        %1157 = vmatprep.mubr.f32.mxu0 0.0
        %1158 = vmatmul.mubr.f32.gmra.mrb[0].mxu0 %v1037
        %v1159 = vpop.f32.mrb[0].mxu0
        %v1160 = vadd.f32 1e-06, %v1159
        %v1161 = vpop.f32.mrb[0].mxu0
        %1162 = vmatprep.mubr.f32.mxu0 0.0
        %1163 = vmatmul.mubr.f32.gmra.mrb[0].mxu0 %v1038
        %v1164 = vpop.f32.mrb[0].mxu0
        %v1165 = vadd.f32 1e-06, %v1164
        %v1166 = vpop.f32.mrb[0].mxu0
        %1167 = vmatprep.mubr.f32.mxu0 0.0
        %1168 = vmatmul.mubr.f32.gmra.mrb[0].mxu0 %v1039
        %v1169 = vpop.f32.mrb[0].mxu0
        %v1170 = vadd.f32 1e-06, %v1169
        %v1171 = vpop.f32.mrb[0].mxu0
        %1172 = vmatprep.mubr.f32.mxu0 0.0
        %1173 = vmatmul.mubr.f32.gmra.mrb[0].mxu0 %v1040
        %v1174 = vpop.f32.mrb[0].mxu0
        %v1175 = vadd.f32 1e-06, %v1174
        %v1176 = vpop.f32.mrb[0].mxu0
        %1177 = vmatprep.mubr.f32.mxu0 0.0
        %1178 = vmatmul.mubr.f32.gmra.mrb[0].mxu0 %v1041
        %v1179 = vpop.f32.mrb[0].mxu0
        %v1180 = vadd.f32 1e-06, %v1179
        %v1181 = vpop.f32.mrb[0].mxu0
        %1182 = vmatprep.mubr.f32.mxu0 0.0
        %1183 = vmatmul.mubr.f32.gmra.mrb[0].mxu0 %v1042
        %v1184 = vpop.f32.mrb[0].mxu0
        %v1185 = vadd.f32 1e-06, %v1184
        %v1186 = vpop.f32.mrb[0].mxu0
        %1187 = vmatprep.mubr.f32.mxu0 0.0
        %1188 = vmatmul.mubr.f32.gmra.mrb[0].mxu0 %v1043
        %v1189 = vpop.f32.mrb[0].mxu0
        %v1190 = vadd.f32 1e-06, %v1189
        %v1191 = vpop.f32.mrb[0].mxu0
        %1192 = vmatprep.mubr.f32.mxu0 0.0
        %1193 = vmatmul.mubr.f32.gmra.mrb[0].mxu0 %v1044
        %v1194 = vpop.f32.mrb[0].mxu0
        %v1195 = vadd.f32 1e-06, %v1194
        %v1196 = vpop.f32.mrb[0].mxu0
        %1197 = vmatprep.mubr.f32.mxu0 0.0
        %1198 = vmatmul.mubr.f32.gmra.mrb[0].mxu0 %v1045
        %v1199 = vpop.f32.mrb[0].mxu0
        %v1200 = vadd.f32 1e-06, %v1199
        %v1201 = vpop.f32.mrb[0].mxu0
        %1202 = vmatprep.mubr.f32.mxu0 0.0
        %1203 = vmatmul.mubr.f32.gmra.mrb[0].mxu0 %v1046
        %v1204 = vpop.f32.mrb[0].mxu0
        %v1205 = vadd.f32 1e-06, %v1204
        %v1206 = vpop.f32.mrb[0].mxu0
        %1207 = vmatprep.mubr.f32.mxu0 0.0
        %1208 = vmatmul.mubr.f32.gmra.mrb[0].mxu0 %v1047
        %v1209 = vpop.f32.mrb[0].mxu0
        %v1210 = vadd.f32 1e-06, %v1209
        %v1211 = vpop.f32.mrb[0].mxu0
        %1212 = vmatprep.mubr.f32.mxu0 0.0
        %1213 = vmatmul.mubr.f32.gmra.mrb[0].mxu0 %v1048
        %v1214 = vpop.f32.mrb[0].mxu0
        %v1215 = vadd.f32 1e-06, %v1214
        %v1216 = vpop.f32.mrb[0].mxu0
        %1217 = vmatprep.mubr.f32.mxu0 0.0
        %1218 = vmatmul.mubr.f32.gmra.mrb[0].mxu0 %v1049
        %v1219 = vpop.f32.mrb[0].mxu0
        %v1220 = vadd.f32 1e-06, %v1219
        %v1221 = vpop.f32.mrb[0].mxu0
        %1222 = vmatprep.mubr.f32.mxu0 0.0
        %1223 = vmatmul.mubr.f32.gmra.mrb[0].mxu0 %v1050
        %v1224 = vpop.f32.mrb[0].mxu0
        %v1225 = vadd.f32 1e-06, %v1224
        %v1226 = vpop.f32.mrb[0].mxu0
        %1227 = vmatprep.mubr.f32.mxu0 0.0
        %1228 = vmatmul.mubr.f32.gmra.mrb[0].mxu0 %v1051
        %v1229 = vpop.f32.mrb[0].mxu0
        %v1230 = vadd.f32 1e-06, %v1229
        %v1231 = vpop.f32.mrb[0].mxu0
        %1232 = vmatprep.mubr.f32.mxu0 0.0
        %1233 = vmatmul.mubr.f32.gmra.mrb[0].mxu0 %v1052
        %v1234 = vpop.f32.mrb[0].mxu0
        %v1235 = vadd.f32 1e-06, %v1234
        %v1236 = vpop.f32.mrb[0].mxu0
        %1237 = vmatprep.mubr.f32.mxu0 0.0
        %1238 = vmatmul.mubr.f32.gmra.mrb[0].mxu0 %v1053
        %v1239 = vpop.f32.mrb[0].mxu0
        %v1240 = vadd.f32 1e-06, %v1239
        %v1241 = vpop.f32.mrb[0].mxu0
        %1242 = vmatprep.mubr.f32.mxu0 0.0
        %1243 = vmatmul.mubr.f32.gmra.mrb[0].mxu0 %v1054
        %v1244 = vpop.f32.mrb[0].mxu0
        %v1245 = vadd.f32 1e-06, %v1244
        %v1246 = vpop.f32.mrb[0].mxu0
        %1247 = vmatprep.mubr.f32.mxu0 0.0
        %1248 = vmatmul.mubr.f32.gmra.mrb[0].mxu0 %v1055
        %v1249 = vpop.f32.mrb[0].mxu0
        %v1250 = vadd.f32 1e-06, %v1249
        %v1251 = vpop.f32.mrb[0].mxu0
        %1252 = vmatprep.mubr.f32.mxu0 0.0
        %1253 = vmatmul.mubr.f32.gmra.mrb[0].mxu0 %v1056
        %v1254 = vpop.f32.mrb[0].mxu0
        %v1255 = vadd.f32 1e-06, %v1254
        %v1256 = vpop.f32.mrb[0].mxu0
        %1257 = vmatprep.mubr.f32.mxu0 0.0
        %1258 = vmatmul.mubr.f32.gmra.mrb[0].mxu0 %v1057
        %v1259 = vpop.f32.mrb[0].mxu0
        %v1260 = vadd.f32 1e-06, %v1259
        %v1261 = vpop.f32.mrb[0].mxu0
        %1262 = vmatprep.mubr.f32.mxu0 0.0
        %1263 = vmatmul.mubr.f32.gmra.mrb[0].mxu0 %v1058
        %v1264 = vpop.f32.mrb[0].mxu0
        %v1265 = vadd.f32 1e-06, %v1264
        %v1266 = vpop.f32.mrb[0].mxu0
        %1267 = vmatprep.mubr.f32.mxu0 0.0
        %1268 = vmatmul.mubr.f32.gmra.mrb[0].mxu0 %v1059
        %v1269 = vpop.f32.mrb[0].mxu0
        %v1270 = vadd.f32 1e-06, %v1269
        %v1271 = vpop.f32.mrb[0].mxu0
        %1272 = vmatprep.mubr.f32.mxu0 0.0
        %1273 = vmatmul.mubr.f32.gmra.mrb[0].mxu0 %v1060
        %v1274 = vpop.f32.mrb[0].mxu0
        %v1275 = vadd.f32 1e-06, %v1274
        %v1276 = vpop.f32.mrb[0].mxu0
        %1277 = vmatprep.mubr.f32.mxu0 0.0
        %1278 = vmatmul.mubr.f32.gmra.mrb[0].mxu0 %v1061
        %v1279 = vpop.f32.mrb[0].mxu0
        %v1280 = vadd.f32 1e-06, %v1279
        %v1281 = vpop.f32.mrb[0].mxu0
        %1282 = vmatprep.mubr.f32.mxu0 0.0
        %1283 = vmatmul.mubr.f32.gmra.mrb[0].mxu0 %v1062
        %v1284 = vpop.f32.mrb[0].mxu0
        %v1285 = vadd.f32 1e-06, %v1284
        %v1286 = vpop.f32.mrb[0].mxu0
        %1287 = vdwg.mxu0
        %v1288 = vrsqrt.pop %v1130
        %v1289 = vrsqrt.pop %v1135
        %v1290 = vrsqrt.pop %v1140
        %v1291 = vrsqrt.pop %v1145
        %v1292 = vrsqrt.pop %v1150
        %v1293 = vrsqrt.pop %v1155
        %v1294 = vrsqrt.pop %v1160
        %v1295 = vrsqrt.pop %v1165
        %v1296 = vrsqrt.pop %v1170
        %v1297 = vrsqrt.pop %v1175
        %v1298 = vrsqrt.pop %v1180
        %v1299 = vrsqrt.pop %v1185
        %v1300 = vrsqrt.pop %v1190
        %v1301 = vrsqrt.pop %v1195
        %v1302 = vrsqrt.pop %v1200
        %v1303 = vrsqrt.pop %v1205
        %v1304 = vrsqrt.pop %v1210
        %v1305 = vrsqrt.pop %v1215
        %v1306 = vrsqrt.pop %v1220
        %v1307 = vrsqrt.pop %v1225
        %v1308 = vrsqrt.pop %v1230
        %v1309 = vrsqrt.pop %v1235
        %v1310 = vrsqrt.pop %v1240
        %v1311 = vrsqrt.pop %v1245
        %v1312 = vrsqrt.pop %v1250
        %v1313 = vrsqrt.pop %v1255
        %v1314 = vrsqrt.pop %v1260
        %v1315 = vrsqrt.pop %v1265
        %v1316 = vrsqrt.pop %v1270
        %v1317 = vrsqrt.pop %v1275
        %v1318 = vrsqrt.pop %v1280
        %v1319 = vrsqrt.pop %v1285
        %v1320 = vmul.f32 %v999, %v1288
        %v1321 = vmul.f32 %v1000, %v1289
        %v1322 = vmul.f32 %v1001, %v1290
        %v1323 = vmul.f32 %v1002, %v1291
        %v1324 = vmul.f32 %v1003, %v1292
        %v1325 = vmul.f32 %v1004, %v1293
        %v1326 = vmul.f32 %v1005, %v1294
        %v1327 = vmul.f32 %v1006, %v1295
        %v1328 = vmul.f32 %v1007, %v1296
        %v1329 = vmul.f32 %v1008, %v1297
        %v1330 = vmul.f32 %v1009, %v1298
        %v1331 = vmul.f32 %v1010, %v1299
        %v1332 = vmul.f32 %v1011, %v1300
        %v1333 = vmul.f32 %v1012, %v1301
        %v1334 = vmul.f32 %v1013, %v1302
        %v1335 = vmul.f32 %v1014, %v1303
        %v1336 = vmul.f32 %v1015, %v1304
        %v1337 = vmul.f32 %v1016, %v1305
        %v1338 = vmul.f32 %v1017, %v1306
        %v1339 = vmul.f32 %v1018, %v1307
        %v1340 = vmul.f32 %v1019, %v1308
        %v1341 = vmul.f32 %v1020, %v1309
        %v1342 = vmul.f32 %v1021, %v1310
        %v1343 = vmul.f32 %v1022, %v1311
        %v1344 = vmul.f32 %v1023, %v1312
        %v1345 = vmul.f32 %v1024, %v1313
        %v1346 = vmul.f32 %v1025, %v1314
        %v1347 = vmul.f32 %v1026, %v1315
        %v1348 = vmul.f32 %v1027, %v1316
        %v1349 = vmul.f32 %v1028, %v1317
        %v1350 = vmul.f32 %v1029, %v1318
        %v1351 = vmul.f32 %v1030, %v1319
        %v1352 = vlaneseq
        %v1353 = vshrl.u32 %v1352, 7
        %v1354 = vsub.s32 1, %v1353
        %v1355 = vrot.slane %v297, %v1354
        %v1356 = vmul.f32 %v1320, %v1355
        %v1357 = vmul.f32 %v1321, %v1355
        %v1358 = vmul.f32 %v1322, %v1355
        %v1359 = vmul.f32 %v1323, %v1355
        %v1360 = vmul.f32 %v1324, %v1355
        %v1361 = vmul.f32 %v1325, %v1355
        %v1362 = vmul.f32 %v1326, %v1355
        %v1363 = vmul.f32 %v1327, %v1355
        %v1364 = vmul.f32 %v1328, %v1355
        %v1365 = vmul.f32 %v1329, %v1355
        %v1366 = vmul.f32 %v1330, %v1355
        %v1367 = vmul.f32 %v1331, %v1355
        %v1368 = vmul.f32 %v1332, %v1355
        %v1369 = vmul.f32 %v1333, %v1355
        %v1370 = vmul.f32 %v1334, %v1355
        %v1371 = vmul.f32 %v1335, %v1355
        %v1372 = vmul.f32 %v1336, %v1355
        %v1373 = vmul.f32 %v1337, %v1355
        %v1374 = vmul.f32 %v1338, %v1355
        %v1375 = vmul.f32 %v1339, %v1355
        %v1376 = vmul.f32 %v1340, %v1355
        %v1377 = vmul.f32 %v1341, %v1355
        %v1378 = vmul.f32 %v1342, %v1355
        %v1379 = vmul.f32 %v1343, %v1355
        %v1380 = vmul.f32 %v1344, %v1355
        %v1381 = vmul.f32 %v1345, %v1355
        %v1382 = vmul.f32 %v1346, %v1355
        %v1383 = vmul.f32 %v1347, %v1355
        %v1384 = vmul.f32 %v1348, %v1355
        %v1385 = vmul.f32 %v1349, %v1355
        %v1386 = vmul.f32 %v1350, %v1355
        %v1387 = vmul.f32 %v1351, %v1355
        %v1388 = vlaneseq
        %v1389 = vshrl.u32 %v1388, 7
        %v1390 = vsub.s32 2, %v1389
        %v1391 = vrot.slane %v297, %v1390
        %v1392 = vadd.f32 %v1356, %v1391
        %v1393 = vadd.f32 %v1357, %v1391
        %v1394 = vadd.f32 %v1358, %v1391
        %v1395 = vadd.f32 %v1359, %v1391
        %v1396 = vadd.f32 %v1360, %v1391
        %v1397 = vadd.f32 %v1361, %v1391
        %v1398 = vadd.f32 %v1362, %v1391
        %v1399 = vadd.f32 %v1363, %v1391
        %v1400 = vadd.f32 %v1364, %v1391
        %v1401 = vadd.f32 %v1365, %v1391
        %v1402 = vadd.f32 %v1366, %v1391
        %v1403 = vadd.f32 %v1367, %v1391
        %v1404 = vadd.f32 %v1368, %v1391
        %v1405 = vadd.f32 %v1369, %v1391
        %v1406 = vadd.f32 %v1370, %v1391
        %v1407 = vadd.f32 %v1371, %v1391
        %v1408 = vadd.f32 %v1372, %v1391
        %v1409 = vadd.f32 %v1373, %v1391
        %v1410 = vadd.f32 %v1374, %v1391
        %v1411 = vadd.f32 %v1375, %v1391
        %v1412 = vadd.f32 %v1376, %v1391
        %v1413 = vadd.f32 %v1377, %v1391
        %v1414 = vadd.f32 %v1378, %v1391
        %v1415 = vadd.f32 %v1379, %v1391
        %v1416 = vadd.f32 %v1380, %v1391
        %v1417 = vadd.f32 %v1381, %v1391
        %v1418 = vadd.f32 %v1382, %v1391
        %v1419 = vadd.f32 %v1383, %v1391
        %v1420 = vadd.f32 %v1384, %v1391
        %v1421 = vadd.f32 %v1385, %v1391
        %v1422 = vadd.f32 %v1386, %v1391
        %v1423 = vadd.f32 %v1387, %v1391
        %v1424 = vlaneseq
        %v1425 = vshrl.u32 %v1424, 7
        %v1426 = vsub.s32 3, %v1425
        %v1427 = vrot.slane %v297, %v1426
        %1428 = vmatprep.subr.mxu0 0.0
        %1429 = vmatpush1.msra.mxu0 %v316
        %1430 = vmatprep.subr.mxu0 0.0
        %1431 = vmatpush1.msra.mxu0 %v317
        %1432 = vmatprep.subr.mxu0 0.0
        %1433 = vmatpush1.msra.mxu0 %v318
        %1434 = vmatprep.subr.mxu0 0.0
        %1435 = vmatpush1.msra.mxu0 %v319
        %1436 = vmatprep.subr.mxu0 0.0
        %1437 = vmatpush1.msra.mxu0 %v320
        %1438 = vmatprep.subr.mxu0 0.0
        %1439 = vmatpush1.msra.mxu0 %v321
        %1440 = vmatprep.subr.mxu0 0.0
        %1441 = vmatpush1.msra.mxu0 %v322
        %1442 = vmatprep.subr.mxu0 0.0
        %1443 = vmatpush1.msra.mxu0 %v323
        %1444 = vmatprep.subr.mxu0 0.0
        %1445 = vmatpush1.msra.mxu0 %v324
        %1446 = vmatprep.subr.mxu0 0.0
        %1447 = vmatpush1.msra.mxu0 %v325
        %1448 = vmatprep.subr.mxu0 0.0
        %1449 = vmatpush1.msra.mxu0 %v326
        %1450 = vmatprep.subr.mxu0 0.0
        %1451 = vmatpush1.msra.mxu0 %v327
        %1452 = vmatprep.subr.mxu0 0.0
        %1453 = vmatpush1.msra.mxu0 %v328
        %1454 = vmatprep.subr.mxu0 0.0
        %1455 = vmatpush1.msra.mxu0 %v329
        %1456 = vmatprep.subr.mxu0 0.0
        %1457 = vmatpush1.msra.mxu0 %v330
        %1458 = vmatprep.subr.mxu0 0.0
        %1459 = vmatpush1.msra.mxu0 %v331
        %1460 = vmatprep.subr.mxu0 0.0
        %1461 = vmatpush1.msra.mxu0 0.0
        %1462 = vmatprep.subr.mxu0 0.0
        %1463 = vmatpush1.msra.mxu0 0.0
        %1464 = vmatprep.subr.mxu0 0.0
        %1465 = vmatpush1.msra.mxu0 0.0
        %1466 = vmatprep.subr.mxu0 0.0
        %1467 = vmatpush1.msra.mxu0 0.0
        %1468 = vmatprep.subr.mxu0 0.0
        %1469 = vmatpush1.msra.mxu0 0.0
        %1470 = vmatprep.subr.mxu0 0.0
        %1471 = vmatpush1.msra.mxu0 0.0
        %1472 = vmatprep.subr.mxu0 0.0
        %1473 = vmatpush1.msra.mxu0 0.0
        %1474 = vmatprep.subr.mxu0 0.0
        %1475 = vmatpush1.msra.mxu0 0.0
        %1476 = vmatprep.subr.mxu0 0.0
        %1477 = vmatpush1.msra.mxu0 0.0
        %1478 = vmatprep.subr.mxu0 0.0
        %1479 = vmatpush1.msra.mxu0 0.0
        %1480 = vmatprep.subr.mxu0 0.0
        %1481 = vmatpush1.msra.mxu0 0.0
        %1482 = vmatprep.subr.mxu0 0.0
        %1483 = vmatpush1.msra.mxu0 0.0
        %1484 = vmatprep.subr.mxu0 0.0
        %1485 = vmatpush1.msra.mxu0 0.0
        %1486 = vmatprep.subr.mxu0 0.0
        %1487 = vmatpush1.msra.mxu0 0.0
        %1488 = vmatprep.subr.mxu0 0.0
        %1489 = vmatpush1.msra.mxu0 0.0
        %1490 = vmatprep.subr.mxu0 0.0
        %1491 = vmatpush1.msra.mxu0 0.0
        %1492 = vmatprep.mubr.f32.mxu0 0.0
        %1493 = vmatmul.mubr.f32.gmra.mrb[0].mxu0 %v1392
        %v1494 = vpop.f32.mrb[0].mxu0
        %v1495 = vadd.f32 %v1427, %v1494
        %v1496 = vpop.f32.mrb[0].mxu0
        %1497 = vmatprep.mubr.f32.mxu0 0.0
        %1498 = vmatmul.mubr.f32.gmra.mrb[0].mxu0 %v1393
        %v1499 = vpop.f32.mrb[0].mxu0
        %v1500 = vadd.f32 %v1427, %v1499
        %v1501 = vpop.f32.mrb[0].mxu0
        %1502 = vmatprep.mubr.f32.mxu0 0.0
        %1503 = vmatmul.mubr.f32.gmra.mrb[0].mxu0 %v1394
        %v1504 = vpop.f32.mrb[0].mxu0
        %v1505 = vadd.f32 %v1427, %v1504
        %v1506 = vpop.f32.mrb[0].mxu0
        %1507 = vmatprep.mubr.f32.mxu0 0.0
        %1508 = vmatmul.mubr.f32.gmra.mrb[0].mxu0 %v1395
        %v1509 = vpop.f32.mrb[0].mxu0
        %v1510 = vadd.f32 %v1427, %v1509
        %v1511 = vpop.f32.mrb[0].mxu0
        %1512 = vmatprep.mubr.f32.mxu0 0.0
        %1513 = vmatmul.mubr.f32.gmra.mrb[0].mxu0 %v1396
        %v1514 = vpop.f32.mrb[0].mxu0
        %v1515 = vadd.f32 %v1427, %v1514
        %v1516 = vpop.f32.mrb[0].mxu0
        %1517 = vmatprep.mubr.f32.mxu0 0.0
        %1518 = vmatmul.mubr.f32.gmra.mrb[0].mxu0 %v1397
        %v1519 = vpop.f32.mrb[0].mxu0
        %v1520 = vadd.f32 %v1427, %v1519
        %v1521 = vpop.f32.mrb[0].mxu0
        %1522 = vmatprep.mubr.f32.mxu0 0.0
        %1523 = vmatmul.mubr.f32.gmra.mrb[0].mxu0 %v1398
        %v1524 = vpop.f32.mrb[0].mxu0
        %v1525 = vadd.f32 %v1427, %v1524
        %v1526 = vpop.f32.mrb[0].mxu0
        %1527 = vmatprep.mubr.f32.mxu0 0.0
        %1528 = vmatmul.mubr.f32.gmra.mrb[0].mxu0 %v1399
        %v1529 = vpop.f32.mrb[0].mxu0
        %v1530 = vadd.f32 %v1427, %v1529
        %v1531 = vpop.f32.mrb[0].mxu0
        %1532 = vmatprep.mubr.f32.mxu0 0.0
        %1533 = vmatmul.mubr.f32.gmra.mrb[0].mxu0 %v1400
        %v1534 = vpop.f32.mrb[0].mxu0
        %v1535 = vadd.f32 %v1427, %v1534
        %v1536 = vpop.f32.mrb[0].mxu0
        %1537 = vmatprep.mubr.f32.mxu0 0.0
        %1538 = vmatmul.mubr.f32.gmra.mrb[0].mxu0 %v1401
        %v1539 = vpop.f32.mrb[0].mxu0
        %v1540 = vadd.f32 %v1427, %v1539
        %v1541 = vpop.f32.mrb[0].mxu0
        %1542 = vmatprep.mubr.f32.mxu0 0.0
        %1543 = vmatmul.mubr.f32.gmra.mrb[0].mxu0 %v1402
        %v1544 = vpop.f32.mrb[0].mxu0
        %v1545 = vadd.f32 %v1427, %v1544
        %v1546 = vpop.f32.mrb[0].mxu0
        %1547 = vmatprep.mubr.f32.mxu0 0.0
        %1548 = vmatmul.mubr.f32.gmra.mrb[0].mxu0 %v1403
        %v1549 = vpop.f32.mrb[0].mxu0
        %v1550 = vadd.f32 %v1427, %v1549
        %v1551 = vpop.f32.mrb[0].mxu0
        %1552 = vmatprep.mubr.f32.mxu0 0.0
        %1553 = vmatmul.mubr.f32.gmra.mrb[0].mxu0 %v1404
        %v1554 = vpop.f32.mrb[0].mxu0
        %v1555 = vadd.f32 %v1427, %v1554
        %v1556 = vpop.f32.mrb[0].mxu0
        %1557 = vmatprep.mubr.f32.mxu0 0.0
        %1558 = vmatmul.mubr.f32.gmra.mrb[0].mxu0 %v1405
        %v1559 = vpop.f32.mrb[0].mxu0
        %v1560 = vadd.f32 %v1427, %v1559
        %v1561 = vpop.f32.mrb[0].mxu0
        %1562 = vmatprep.mubr.f32.mxu0 0.0
        %1563 = vmatmul.mubr.f32.gmra.mrb[0].mxu0 %v1406
        %v1564 = vpop.f32.mrb[0].mxu0
        %v1565 = vadd.f32 %v1427, %v1564
        %v1566 = vpop.f32.mrb[0].mxu0
        %1567 = vmatprep.mubr.f32.mxu0 0.0
        %1568 = vmatmul.mubr.f32.gmra.mrb[0].mxu0 %v1407
        %v1569 = vpop.f32.mrb[0].mxu0
        %v1570 = vadd.f32 %v1427, %v1569
        %v1571 = vpop.f32.mrb[0].mxu0
        %1572 = vmatprep.mubr.f32.mxu0 0.0
        %1573 = vmatmul.mubr.f32.gmra.mrb[0].mxu0 %v1408
        %v1574 = vpop.f32.mrb[0].mxu0
        %v1575 = vadd.f32 %v1427, %v1574
        %v1576 = vpop.f32.mrb[0].mxu0
        %1577 = vmatprep.mubr.f32.mxu0 0.0
        %1578 = vmatmul.mubr.f32.gmra.mrb[0].mxu0 %v1409
        %v1579 = vpop.f32.mrb[0].mxu0
        %v1580 = vadd.f32 %v1427, %v1579
        %v1581 = vpop.f32.mrb[0].mxu0
        %1582 = vmatprep.mubr.f32.mxu0 0.0
        %1583 = vmatmul.mubr.f32.gmra.mrb[0].mxu0 %v1410
        %v1584 = vpop.f32.mrb[0].mxu0
        %v1585 = vadd.f32 %v1427, %v1584
        %v1586 = vpop.f32.mrb[0].mxu0
        %1587 = vmatprep.mubr.f32.mxu0 0.0
        %1588 = vmatmul.mubr.f32.gmra.mrb[0].mxu0 %v1411
        %v1589 = vpop.f32.mrb[0].mxu0
        %v1590 = vadd.f32 %v1427, %v1589
        %v1591 = vpop.f32.mrb[0].mxu0
        %1592 = vmatprep.mubr.f32.mxu0 0.0
        %1593 = vmatmul.mubr.f32.gmra.mrb[0].mxu0 %v1412
        %v1594 = vpop.f32.mrb[0].mxu0
        %v1595 = vadd.f32 %v1427, %v1594
        %v1596 = vpop.f32.mrb[0].mxu0
        %1597 = vmatprep.mubr.f32.mxu0 0.0
        %1598 = vmatmul.mubr.f32.gmra.mrb[0].mxu0 %v1413
        %v1599 = vpop.f32.mrb[0].mxu0
        %v1600 = vadd.f32 %v1427, %v1599
        %v1601 = vpop.f32.mrb[0].mxu0
        %1602 = vmatprep.mubr.f32.mxu0 0.0
        %1603 = vmatmul.mubr.f32.gmra.mrb[0].mxu0 %v1414
        %v1604 = vpop.f32.mrb[0].mxu0
        %v1605 = vadd.f32 %v1427, %v1604
        %v1606 = vpop.f32.mrb[0].mxu0
        %1607 = vmatprep.mubr.f32.mxu0 0.0
        %1608 = vmatmul.mubr.f32.gmra.mrb[0].mxu0 %v1415
        %v1609 = vpop.f32.mrb[0].mxu0
        %v1610 = vadd.f32 %v1427, %v1609
        %v1611 = vpop.f32.mrb[0].mxu0
        %1612 = vmatprep.mubr.f32.mxu0 0.0
        %1613 = vmatmul.mubr.f32.gmra.mrb[0].mxu0 %v1416
        %v1614 = vpop.f32.mrb[0].mxu0
        %v1615 = vadd.f32 %v1427, %v1614
        %v1616 = vpop.f32.mrb[0].mxu0
        %1617 = vmatprep.mubr.f32.mxu0 0.0
        %1618 = vmatmul.mubr.f32.gmra.mrb[0].mxu0 %v1417
        %v1619 = vpop.f32.mrb[0].mxu0
        %v1620 = vadd.f32 %v1427, %v1619
        %v1621 = vpop.f32.mrb[0].mxu0
        %1622 = vmatprep.mubr.f32.mxu0 0.0
        %1623 = vmatmul.mubr.f32.gmra.mrb[0].mxu0 %v1418
        %v1624 = vpop.f32.mrb[0].mxu0
        %v1625 = vadd.f32 %v1427, %v1624
        %v1626 = vpop.f32.mrb[0].mxu0
        %1627 = vmatprep.mubr.f32.mxu0 0.0
        %1628 = vmatmul.mubr.f32.gmra.mrb[0].mxu0 %v1419
        %v1629 = vpop.f32.mrb[0].mxu0
        %v1630 = vadd.f32 %v1427, %v1629
        %v1631 = vpop.f32.mrb[0].mxu0
        %1632 = vmatprep.mubr.f32.mxu0 0.0
        %1633 = vmatmul.mubr.f32.gmra.mrb[0].mxu0 %v1420
        %v1634 = vpop.f32.mrb[0].mxu0
        %v1635 = vadd.f32 %v1427, %v1634
        %v1636 = vpop.f32.mrb[0].mxu0
        %1637 = vmatprep.mubr.f32.mxu0 0.0
        %1638 = vmatmul.mubr.f32.gmra.mrb[0].mxu0 %v1421
        %v1639 = vpop.f32.mrb[0].mxu0
        %v1640 = vadd.f32 %v1427, %v1639
        %v1641 = vpop.f32.mrb[0].mxu0
        %1642 = vmatprep.mubr.f32.mxu0 0.0
        %1643 = vmatmul.mubr.f32.gmra.mrb[0].mxu0 %v1422
        %v1644 = vpop.f32.mrb[0].mxu0
        %v1645 = vadd.f32 %v1427, %v1644
        %v1646 = vpop.f32.mrb[0].mxu0
        %1647 = vmatprep.mubr.f32.mxu0 0.0
        %1648 = vmatmul.mubr.f32.gmra.mrb[0].mxu0 %v1423
        %v1649 = vpop.f32.mrb[0].mxu0
        %v1650 = vadd.f32 %v1427, %v1649
        %v1651 = vpop.f32.mrb[0].mxu0
        %1652 = vdwg.mxu0
        %vm1653 = vcmp.ge.f32.partialorder %v1495, 0.0
        %vm1654 = vcmp.ge.f32.partialorder %v1500, 0.0
        %vm1655 = vcmp.ge.f32.partialorder %v1505, 0.0
        %vm1656 = vcmp.ge.f32.partialorder %v1510, 0.0
        %vm1657 = vcmp.ge.f32.partialorder %v1515, 0.0
        %vm1658 = vcmp.ge.f32.partialorder %v1520, 0.0
        %vm1659 = vcmp.ge.f32.partialorder %v1525, 0.0
        %vm1660 = vcmp.ge.f32.partialorder %v1530, 0.0
        %vm1661 = vcmp.ge.f32.partialorder %v1535, 0.0
        %vm1662 = vcmp.ge.f32.partialorder %v1540, 0.0
        %vm1663 = vcmp.ge.f32.partialorder %v1545, 0.0
        %vm1664 = vcmp.ge.f32.partialorder %v1550, 0.0
        %vm1665 = vcmp.ge.f32.partialorder %v1555, 0.0
        %vm1666 = vcmp.ge.f32.partialorder %v1560, 0.0
        %vm1667 = vcmp.ge.f32.partialorder %v1565, 0.0
        %vm1668 = vcmp.ge.f32.partialorder %v1570, 0.0
        %vm1669 = vcmp.ge.f32.partialorder %v1575, 0.0
        %vm1670 = vcmp.ge.f32.partialorder %v1580, 0.0
        %vm1671 = vcmp.ge.f32.partialorder %v1585, 0.0
        %vm1672 = vcmp.ge.f32.partialorder %v1590, 0.0
        %vm1673 = vcmp.ge.f32.partialorder %v1595, 0.0
        %vm1674 = vcmp.ge.f32.partialorder %v1600, 0.0
        %vm1675 = vcmp.ge.f32.partialorder %v1605, 0.0
        %vm1676 = vcmp.ge.f32.partialorder %v1610, 0.0
        %vm1677 = vcmp.ge.f32.partialorder %v1615, 0.0
        %vm1678 = vcmp.ge.f32.partialorder %v1620, 0.0
        %vm1679 = vcmp.ge.f32.partialorder %v1625, 0.0
        %vm1680 = vcmp.ge.f32.partialorder %v1630, 0.0
        %vm1681 = vcmp.ge.f32.partialorder %v1635, 0.0
        %vm1682 = vcmp.ge.f32.partialorder %v1640, 0.0
        %vm1683 = vcmp.ge.f32.partialorder %v1645, 0.0
        %vm1684 = vcmp.ge.f32.partialorder %v1650, 0.0
        %v1685 = vmul.f32 %v1495, 0.01
        %v1686 = vmul.f32 %v1500, 0.01
        %v1687 = vmul.f32 %v1505, 0.01
        %v1688 = vmul.f32 %v1510, 0.01
        %v1689 = vmul.f32 %v1515, 0.01
        %v1690 = vmul.f32 %v1520, 0.01
        %v1691 = vmul.f32 %v1525, 0.01
        %v1692 = vmul.f32 %v1530, 0.01
        %v1693 = vmul.f32 %v1535, 0.01
        %v1694 = vmul.f32 %v1540, 0.01
        %v1695 = vmul.f32 %v1545, 0.01
        %v1696 = vmul.f32 %v1550, 0.01
        %v1697 = vmul.f32 %v1555, 0.01
        %v1698 = vmul.f32 %v1560, 0.01
        %v1699 = vmul.f32 %v1565, 0.01
        %v1700 = vmul.f32 %v1570, 0.01
        %v1701 = vmul.f32 %v1575, 0.01
        %v1702 = vmul.f32 %v1580, 0.01
        %v1703 = vmul.f32 %v1585, 0.01
        %v1704 = vmul.f32 %v1590, 0.01
        %v1705 = vmul.f32 %v1595, 0.01
        %v1706 = vmul.f32 %v1600, 0.01
        %v1707 = vmul.f32 %v1605, 0.01
        %v1708 = vmul.f32 %v1610, 0.01
        %v1709 = vmul.f32 %v1615, 0.01
        %v1710 = vmul.f32 %v1620, 0.01
        %v1711 = vmul.f32 %v1625, 0.01
        %v1712 = vmul.f32 %v1630, 0.01
        %v1713 = vmul.f32 %v1635, 0.01
        %v1714 = vmul.f32 %v1640, 0.01
        %v1715 = vmul.f32 %v1645, 0.01
        %v1716 = vmul.f32 %v1650, 0.01
        %v1717 = vsel %vm1653, %v1495, %v1685
        %v1718 = vsel %vm1654, %v1500, %v1686
        %v1719 = vsel %vm1655, %v1505, %v1687
        %v1720 = vsel %vm1656, %v1510, %v1688
        %v1721 = vsel %vm1657, %v1515, %v1689
        %v1722 = vsel %vm1658, %v1520, %v1690
        %v1723 = vsel %vm1659, %v1525, %v1691
        %v1724 = vsel %vm1660, %v1530, %v1692
        %v1725 = vsel %vm1661, %v1535, %v1693
        %v1726 = vsel %vm1662, %v1540, %v1694
        %v1727 = vsel %vm1663, %v1545, %v1695
        %v1728 = vsel %vm1664, %v1550, %v1696
        %v1729 = vsel %vm1665, %v1555, %v1697
        %v1730 = vsel %vm1666, %v1560, %v1698
        %v1731 = vsel %vm1667, %v1565, %v1699
        %v1732 = vsel %vm1668, %v1570, %v1700
        %v1733 = vsel %vm1669, %v1575, %v1701
        %v1734 = vsel %vm1670, %v1580, %v1702
        %v1735 = vsel %vm1671, %v1585, %v1703
        %v1736 = vsel %vm1672, %v1590, %v1704
        %v1737 = vsel %vm1673, %v1595, %v1705
        %v1738 = vsel %vm1674, %v1600, %v1706
        %v1739 = vsel %vm1675, %v1605, %v1707
        %v1740 = vsel %vm1676, %v1610, %v1708
        %v1741 = vsel %vm1677, %v1615, %v1709
        %v1742 = vsel %vm1678, %v1620, %v1710
        %v1743 = vsel %vm1679, %v1625, %v1711
        %v1744 = vsel %vm1680, %v1630, %v1712
        %v1745 = vsel %vm1681, %v1635, %v1713
        %v1746 = vsel %vm1682, %v1640, %v1714
        %v1747 = vsel %vm1683, %v1645, %v1715
        %v1748 = vsel %vm1684, %v1650, %v1716
        %v1749 = vadd.f32 %v1717, %v1733
        %v1750 = vadd.f32 %v1718, %v1734
        %v1751 = vadd.f32 %v1719, %v1735
        %v1752 = vadd.f32 %v1720, %v1736
        %v1753 = vadd.f32 %v1721, %v1737
        %v1754 = vadd.f32 %v1722, %v1738
        %v1755 = vadd.f32 %v1723, %v1739
        %v1756 = vadd.f32 %v1724, %v1740
        %v1757 = vadd.f32 %v1725, %v1741
        %v1758 = vadd.f32 %v1726, %v1742
        %v1759 = vadd.f32 %v1727, %v1743
        %v1760 = vadd.f32 %v1728, %v1744
        %v1761 = vadd.f32 %v1729, %v1745
        %v1762 = vadd.f32 %v1730, %v1746
        %v1763 = vadd.f32 %v1731, %v1747
        %v1764 = vadd.f32 %v1732, %v1748
        %v1765 = vld [vmem:[%s3] sm:$0xff]
        %v1766 = vld [vmem:[%s3 + $0x8] sm:$0xff]
        %v1767 = vld [vmem:[%s3 + $0x10] sm:$0xff]
        %v1768 = vld [vmem:[%s3 + $0x18] sm:$0xff]
        %v1769 = vld [vmem:[%s3 + $0x20] sm:$0xff]
        %v1770 = vld [vmem:[%s3 + $0x28] sm:$0xff]
        %v1771 = vld [vmem:[%s3 + $0x30] sm:$0xff]
        %v1772 = vld [vmem:[%s3 + $0x38] sm:$0xff]
        %v1773 = vld [vmem:[%s3 + $0x40] sm:$0xff]
        %v1774 = vld [vmem:[%s3 + $0x48] sm:$0xff]
        %v1775 = vld [vmem:[%s3 + $0x50] sm:$0xff]
        %v1776 = vld [vmem:[%s3 + $0x58] sm:$0xff]
        %v1777 = vld [vmem:[%s3 + $0x60] sm:$0xff]
        %v1778 = vld [vmem:[%s3 + $0x68] sm:$0xff]
        %v1779 = vld [vmem:[%s3 + $0x70] sm:$0xff]
        %v1780 = vld [vmem:[%s3 + $0x78] sm:$0xff]
        %v1781 = vlaneseq
        %v1782 = vshrl.u32 %v1781, 7
        %v1783 = vsub.s32 4, %v1782
        %v1784 = vrot.slane %v297, %v1783
        %1785 = vmatprep.subr.mxu0 0.0
        %1786 = vmatpush1.msra.mxu0 %v1765
        %1787 = vmatprep.subr.mxu0 0.0
        %1788 = vmatpush1.msra.mxu0 %v1766
        %1789 = vmatprep.subr.mxu0 0.0
        %1790 = vmatpush1.msra.mxu0 %v1767
        %1791 = vmatprep.subr.mxu0 0.0
        %1792 = vmatpush1.msra.mxu0 %v1768
        %1793 = vmatprep.subr.mxu0 0.0
        %1794 = vmatpush1.msra.mxu0 %v1769
        %1795 = vmatprep.subr.mxu0 0.0
        %1796 = vmatpush1.msra.mxu0 %v1770
        %1797 = vmatprep.subr.mxu0 0.0
        %1798 = vmatpush1.msra.mxu0 %v1771
        %1799 = vmatprep.subr.mxu0 0.0
        %1800 = vmatpush1.msra.mxu0 %v1772
        %1801 = vmatprep.subr.mxu0 0.0
        %1802 = vmatpush1.msra.mxu0 %v1773
        %1803 = vmatprep.subr.mxu0 0.0
        %1804 = vmatpush1.msra.mxu0 %v1774
        %1805 = vmatprep.subr.mxu0 0.0
        %1806 = vmatpush1.msra.mxu0 %v1775
        %1807 = vmatprep.subr.mxu0 0.0
        %1808 = vmatpush1.msra.mxu0 %v1776
        %1809 = vmatprep.subr.mxu0 0.0
        %1810 = vmatpush1.msra.mxu0 %v1777
        %1811 = vmatprep.subr.mxu0 0.0
        %1812 = vmatpush1.msra.mxu0 %v1778
        %1813 = vmatprep.subr.mxu0 0.0
        %1814 = vmatpush1.msra.mxu0 %v1779
        %1815 = vmatprep.subr.mxu0 0.0
        %1816 = vmatpush1.msra.mxu0 %v1780
        %1817 = vmatprep.subr.mxu0 0.0
        %1818 = vmatpush1.msra.mxu0 0.0
        %1819 = vmatprep.subr.mxu0 0.0
        %1820 = vmatpush1.msra.mxu0 0.0
        %1821 = vmatprep.subr.mxu0 0.0
        %1822 = vmatpush1.msra.mxu0 0.0
        %1823 = vmatprep.subr.mxu0 0.0
        %1824 = vmatpush1.msra.mxu0 0.0
        %1825 = vmatprep.subr.mxu0 0.0
        %1826 = vmatpush1.msra.mxu0 0.0
        %1827 = vmatprep.subr.mxu0 0.0
        %1828 = vmatpush1.msra.mxu0 0.0
        %1829 = vmatprep.subr.mxu0 0.0
        %1830 = vmatpush1.msra.mxu0 0.0
        %1831 = vmatprep.subr.mxu0 0.0
        %1832 = vmatpush1.msra.mxu0 0.0
        %1833 = vmatprep.subr.mxu0 0.0
        %1834 = vmatpush1.msra.mxu0 0.0
        %1835 = vmatprep.subr.mxu0 0.0
        %1836 = vmatpush1.msra.mxu0 0.0
        %1837 = vmatprep.subr.mxu0 0.0
        %1838 = vmatpush1.msra.mxu0 0.0
        %1839 = vmatprep.subr.mxu0 0.0
        %1840 = vmatpush1.msra.mxu0 0.0
        %1841 = vmatprep.subr.mxu0 0.0
        %1842 = vmatpush1.msra.mxu0 0.0
        %1843 = vmatprep.subr.mxu0 0.0
        %1844 = vmatpush1.msra.mxu0 0.0
        %1845 = vmatprep.subr.mxu0 0.0
        %1846 = vmatpush1.msra.mxu0 0.0
        %1847 = vmatprep.subr.mxu0 0.0
        %1848 = vmatpush1.msra.mxu0 0.0
        %1849 = vmatprep.mubr.f32.mxu0 0.0
        %1850 = vmatmul.mubr.f32.gmra.mrb[0].mxu0 %v1749
        %v1851 = vpop.f32.mrb[0].mxu0
        %v1852 = vadd.f32 %v1784, %v1851
        %v1853 = vpop.f32.mrb[0].mxu0
        %1854 = vmatprep.mubr.f32.mxu0 0.0
        %1855 = vmatmul.mubr.f32.gmra.mrb[0].mxu0 %v1750
        %v1856 = vpop.f32.mrb[0].mxu0
        %v1857 = vadd.f32 %v1784, %v1856
        %v1858 = vpop.f32.mrb[0].mxu0
        %1859 = vmatprep.mubr.f32.mxu0 0.0
        %1860 = vmatmul.mubr.f32.gmra.mrb[0].mxu0 %v1751
        %v1861 = vpop.f32.mrb[0].mxu0
        %v1862 = vadd.f32 %v1784, %v1861
        %v1863 = vpop.f32.mrb[0].mxu0
        %1864 = vmatprep.mubr.f32.mxu0 0.0
        %1865 = vmatmul.mubr.f32.gmra.mrb[0].mxu0 %v1752
        %v1866 = vpop.f32.mrb[0].mxu0
        %v1867 = vadd.f32 %v1784, %v1866
        %v1868 = vpop.f32.mrb[0].mxu0
        %1869 = vmatprep.mubr.f32.mxu0 0.0
        %1870 = vmatmul.mubr.f32.gmra.mrb[0].mxu0 %v1753
        %v1871 = vpop.f32.mrb[0].mxu0
        %v1872 = vadd.f32 %v1784, %v1871
        %v1873 = vpop.f32.mrb[0].mxu0
        %1874 = vmatprep.mubr.f32.mxu0 0.0
        %1875 = vmatmul.mubr.f32.gmra.mrb[0].mxu0 %v1754
        %v1876 = vpop.f32.mrb[0].mxu0
        %v1877 = vadd.f32 %v1784, %v1876
        %v1878 = vpop.f32.mrb[0].mxu0
        %1879 = vmatprep.mubr.f32.mxu0 0.0
        %1880 = vmatmul.mubr.f32.gmra.mrb[0].mxu0 %v1755
        %v1881 = vpop.f32.mrb[0].mxu0
        %v1882 = vadd.f32 %v1784, %v1881
        %v1883 = vpop.f32.mrb[0].mxu0
        %1884 = vmatprep.mubr.f32.mxu0 0.0
        %1885 = vmatmul.mubr.f32.gmra.mrb[0].mxu0 %v1756
        %v1886 = vpop.f32.mrb[0].mxu0
        %v1887 = vadd.f32 %v1784, %v1886
        %v1888 = vpop.f32.mrb[0].mxu0
        %1889 = vmatprep.mubr.f32.mxu0 0.0
        %1890 = vmatmul.mubr.f32.gmra.mrb[0].mxu0 %v1757
        %v1891 = vpop.f32.mrb[0].mxu0
        %v1892 = vadd.f32 %v1784, %v1891
        %v1893 = vpop.f32.mrb[0].mxu0
        %1894 = vmatprep.mubr.f32.mxu0 0.0
        %1895 = vmatmul.mubr.f32.gmra.mrb[0].mxu0 %v1758
        %v1896 = vpop.f32.mrb[0].mxu0
        %v1897 = vadd.f32 %v1784, %v1896
        %v1898 = vpop.f32.mrb[0].mxu0
        %1899 = vmatprep.mubr.f32.mxu0 0.0
        %1900 = vmatmul.mubr.f32.gmra.mrb[0].mxu0 %v1759
        %v1901 = vpop.f32.mrb[0].mxu0
        %v1902 = vadd.f32 %v1784, %v1901
        %v1903 = vpop.f32.mrb[0].mxu0
        %1904 = vmatprep.mubr.f32.mxu0 0.0
        %1905 = vmatmul.mubr.f32.gmra.mrb[0].mxu0 %v1760
        %v1906 = vpop.f32.mrb[0].mxu0
        %v1907 = vadd.f32 %v1784, %v1906
        %v1908 = vpop.f32.mrb[0].mxu0
        %1909 = vmatprep.mubr.f32.mxu0 0.0
        %1910 = vmatmul.mubr.f32.gmra.mrb[0].mxu0 %v1761
        %v1911 = vpop.f32.mrb[0].mxu0
        %v1912 = vadd.f32 %v1784, %v1911
        %v1913 = vpop.f32.mrb[0].mxu0
        %1914 = vmatprep.mubr.f32.mxu0 0.0
        %1915 = vmatmul.mubr.f32.gmra.mrb[0].mxu0 %v1762
        %v1916 = vpop.f32.mrb[0].mxu0
        %v1917 = vadd.f32 %v1784, %v1916
        %v1918 = vpop.f32.mrb[0].mxu0
        %1919 = vmatprep.mubr.f32.mxu0 0.0
        %1920 = vmatmul.mubr.f32.gmra.mrb[0].mxu0 %v1763
        %v1921 = vpop.f32.mrb[0].mxu0
        %v1922 = vadd.f32 %v1784, %v1921
        %v1923 = vpop.f32.mrb[0].mxu0
        %1924 = vmatprep.mubr.f32.mxu0 0.0
        %1925 = vmatmul.mubr.f32.gmra.mrb[0].mxu0 %v1764
        %v1926 = vpop.f32.mrb[0].mxu0
        %v1927 = vadd.f32 %v1784, %v1926
        %v1928 = vpop.f32.mrb[0].mxu0
        %1929 = vdwg.mxu0
        %vm1930 = vcmp.ge.f32.partialorder %v1852, 0.0
        %vm1931 = vcmp.ge.f32.partialorder %v1857, 0.0
        %vm1932 = vcmp.ge.f32.partialorder %v1862, 0.0
        %vm1933 = vcmp.ge.f32.partialorder %v1867, 0.0
        %vm1934 = vcmp.ge.f32.partialorder %v1872, 0.0
        %vm1935 = vcmp.ge.f32.partialorder %v1877, 0.0
        %vm1936 = vcmp.ge.f32.partialorder %v1882, 0.0
        %vm1937 = vcmp.ge.f32.partialorder %v1887, 0.0
        %vm1938 = vcmp.ge.f32.partialorder %v1892, 0.0
        %vm1939 = vcmp.ge.f32.partialorder %v1897, 0.0
        %vm1940 = vcmp.ge.f32.partialorder %v1902, 0.0
        %vm1941 = vcmp.ge.f32.partialorder %v1907, 0.0
        %vm1942 = vcmp.ge.f32.partialorder %v1912, 0.0
        %vm1943 = vcmp.ge.f32.partialorder %v1917, 0.0
        %vm1944 = vcmp.ge.f32.partialorder %v1922, 0.0
        %vm1945 = vcmp.ge.f32.partialorder %v1927, 0.0
        %v1946 = vmul.f32 %v1852, 0.01
        %v1947 = vmul.f32 %v1857, 0.01
        %v1948 = vmul.f32 %v1862, 0.01
        %v1949 = vmul.f32 %v1867, 0.01
        %v1950 = vmul.f32 %v1872, 0.01
        %v1951 = vmul.f32 %v1877, 0.01
        %v1952 = vmul.f32 %v1882, 0.01
        %v1953 = vmul.f32 %v1887, 0.01
        %v1954 = vmul.f32 %v1892, 0.01
        %v1955 = vmul.f32 %v1897, 0.01
        %v1956 = vmul.f32 %v1902, 0.01
        %v1957 = vmul.f32 %v1907, 0.01
        %v1958 = vmul.f32 %v1912, 0.01
        %v1959 = vmul.f32 %v1917, 0.01
        %v1960 = vmul.f32 %v1922, 0.01
        %v1961 = vmul.f32 %v1927, 0.01
        %v1962 = vsel %vm1930, %v1852, %v1946
        %v1963 = vsel %vm1931, %v1857, %v1947
        %v1964 = vsel %vm1932, %v1862, %v1948
        %v1965 = vsel %vm1933, %v1867, %v1949
        %v1966 = vsel %vm1934, %v1872, %v1950
        %v1967 = vsel %vm1935, %v1877, %v1951
        %v1968 = vsel %vm1936, %v1882, %v1952
        %v1969 = vsel %vm1937, %v1887, %v1953
        %v1970 = vsel %vm1938, %v1892, %v1954
        %v1971 = vsel %vm1939, %v1897, %v1955
        %v1972 = vsel %vm1940, %v1902, %v1956
        %v1973 = vsel %vm1941, %v1907, %v1957
        %v1974 = vsel %vm1942, %v1912, %v1958
        %v1975 = vsel %vm1943, %v1917, %v1959
        %v1976 = vsel %vm1944, %v1922, %v1960
        %v1977 = vsel %vm1945, %v1927, %v1961
        %v1978 = vld [vmem:[%s4] sm:$0xf]
        %v1979 = vlaneseq
        %v1980 = vshrl.u32 %v1979, 7
        %v1981 = vsub.s32 5, %v1980
        %v1982 = vrot.slane %v297, %v1981
        %v1984 = vsel %vm352, %v1962, 0
        %v1987 = vsel %vm352, %v1963, 0
        %v1990 = vsel %vm352, %v1964, 0
        %v1993 = vsel %vm352, %v1965, 0
        %v1996 = vsel %vm352, %v1966, 0
        %v1999 = vsel %vm352, %v1967, 0
        %v2002 = vsel %vm352, %v1968, 0
        %v2005 = vsel %vm352, %v1969, 0
        %v2008 = vsel %vm352, %v1970, 0
        %v2011 = vsel %vm352, %v1971, 0
        %v2014 = vsel %vm352, %v1972, 0
        %v2017 = vsel %vm352, %v1973, 0
        %v2020 = vsel %vm352, %v1974, 0
        %v2023 = vsel %vm352, %v1975, 0
        %v2026 = vsel %vm352, %v1976, 0
        %v2029 = vsel %vm352, %v1977, 0
        %v2032 = vsel %vm449, %v1978, 0
        %2034 = vmatprep.subr.mxu0 0.0
        %2035 = vmatpush1.msra.mxu0 %v2032
        %2036 = vmatprep.subr.mxu0 0.0
        %2037 = vmatpush1.msra.mxu0 0.0
        %2038 = vmatprep.subr.mxu0 0.0
        %2039 = vmatpush1.msra.mxu0 0.0
        %2040 = vmatprep.subr.mxu0 0.0
        %2041 = vmatpush1.msra.mxu0 0.0
        %2042 = vmatprep.subr.mxu0 0.0
        %2043 = vmatpush1.msra.mxu0 0.0
        %2044 = vmatprep.subr.mxu0 0.0
        %2045 = vmatpush1.msra.mxu0 0.0
        %2046 = vmatprep.subr.mxu0 0.0
        %2047 = vmatpush1.msra.mxu0 0.0
        %2048 = vmatprep.subr.mxu0 0.0
        %2049 = vmatpush1.msra.mxu0 0.0
        %2050 = vmatprep.subr.mxu0 0.0
        %2051 = vmatpush1.msra.mxu0 0.0
        %2052 = vmatprep.subr.mxu0 0.0
        %2053 = vmatpush1.msra.mxu0 0.0
        %2054 = vmatprep.subr.mxu0 0.0
        %2055 = vmatpush1.msra.mxu0 0.0
        %2056 = vmatprep.subr.mxu0 0.0
        %2057 = vmatpush1.msra.mxu0 0.0
        %2058 = vmatprep.subr.mxu0 0.0
        %2059 = vmatpush1.msra.mxu0 0.0
        %2060 = vmatprep.subr.mxu0 0.0
        %2061 = vmatpush1.msra.mxu0 0.0
        %2062 = vmatprep.subr.mxu0 0.0
        %2063 = vmatpush1.msra.mxu0 0.0
        %2064 = vmatprep.subr.mxu0 0.0
        %2065 = vmatpush1.msra.mxu0 0.0
        %2066 = vmatprep.subr.mxu0 0.0
        %2067 = vmatpush1.msra.mxu0 0.0
        %2068 = vmatprep.subr.mxu0 0.0
        %2069 = vmatpush1.msra.mxu0 0.0
        %2070 = vmatprep.subr.mxu0 0.0
        %2071 = vmatpush1.msra.mxu0 0.0
        %2072 = vmatprep.subr.mxu0 0.0
        %2073 = vmatpush1.msra.mxu0 0.0
        %2074 = vmatprep.subr.mxu0 0.0
        %2075 = vmatpush1.msra.mxu0 0.0
        %2076 = vmatprep.subr.mxu0 0.0
        %2077 = vmatpush1.msra.mxu0 0.0
        %2078 = vmatprep.subr.mxu0 0.0
        %2079 = vmatpush1.msra.mxu0 0.0
        %2080 = vmatprep.subr.mxu0 0.0
        %2081 = vmatpush1.msra.mxu0 0.0
        %2082 = vmatprep.subr.mxu0 0.0
        %2083 = vmatpush1.msra.mxu0 0.0
        %2084 = vmatprep.subr.mxu0 0.0
        %2085 = vmatpush1.msra.mxu0 0.0
        %2086 = vmatprep.subr.mxu0 0.0
        %2087 = vmatpush1.msra.mxu0 0.0
        %2088 = vmatprep.subr.mxu0 0.0
        %2089 = vmatpush1.msra.mxu0 0.0
        %2090 = vmatprep.subr.mxu0 0.0
        %2091 = vmatpush1.msra.mxu0 0.0
        %2092 = vmatprep.subr.mxu0 0.0
        %2093 = vmatpush1.msra.mxu0 0.0
        %2094 = vmatprep.subr.mxu0 0.0
        %2095 = vmatpush1.msra.mxu0 0.0
        %2096 = vmatprep.subr.mxu0 0.0
        %2097 = vmatpush1.msra.mxu0 0.0
        %2098 = vmatprep.mubr.f32.mxu0 0.0
        %2099 = vmatmul.mubr.f32.gmra.mrb[0].mxu0 %v1984
        %v2100 = vpop.f32.mrb[0].mxu0
        %v2101 = vadd.f32 %v1982, %v2100
        %v2102 = vpop.f32.mrb[0].mxu0
        %2103 = vmatprep.mubr.f32.mxu0 0.0
        %2104 = vmatmul.mubr.f32.gmra.mrb[0].mxu0 %v1987
        %v2105 = vpop.f32.mrb[0].mxu0
        %v2106 = vadd.f32 %v1982, %v2105
        %v2107 = vpop.f32.mrb[0].mxu0
        %2108 = vmatprep.mubr.f32.mxu0 0.0
        %2109 = vmatmul.mubr.f32.gmra.mrb[0].mxu0 %v1990
        %v2110 = vpop.f32.mrb[0].mxu0
        %v2111 = vadd.f32 %v1982, %v2110
        %v2112 = vpop.f32.mrb[0].mxu0
        %2113 = vmatprep.mubr.f32.mxu0 0.0
        %2114 = vmatmul.mubr.f32.gmra.mrb[0].mxu0 %v1993
        %v2115 = vpop.f32.mrb[0].mxu0
        %v2116 = vadd.f32 %v1982, %v2115
        %v2117 = vpop.f32.mrb[0].mxu0
        %2118 = vmatprep.mubr.f32.mxu0 0.0
        %2119 = vmatmul.mubr.f32.gmra.mrb[0].mxu0 %v1996
        %v2120 = vpop.f32.mrb[0].mxu0
        %v2121 = vadd.f32 %v1982, %v2120
        %v2122 = vpop.f32.mrb[0].mxu0
        %2123 = vmatprep.mubr.f32.mxu0 0.0
        %2124 = vmatmul.mubr.f32.gmra.mrb[0].mxu0 %v1999
        %v2125 = vpop.f32.mrb[0].mxu0
        %v2126 = vadd.f32 %v1982, %v2125
        %v2127 = vpop.f32.mrb[0].mxu0
        %2128 = vmatprep.mubr.f32.mxu0 0.0
        %2129 = vmatmul.mubr.f32.gmra.mrb[0].mxu0 %v2002
        %v2130 = vpop.f32.mrb[0].mxu0
        %v2131 = vadd.f32 %v1982, %v2130
        %v2132 = vpop.f32.mrb[0].mxu0
        %2133 = vmatprep.mubr.f32.mxu0 0.0
        %2134 = vmatmul.mubr.f32.gmra.mrb[0].mxu0 %v2005
        %v2135 = vpop.f32.mrb[0].mxu0
        %v2136 = vadd.f32 %v1982, %v2135
        %v2137 = vpop.f32.mrb[0].mxu0
        %2138 = vmatprep.mubr.f32.mxu0 0.0
        %2139 = vmatmul.mubr.f32.gmra.mrb[0].mxu0 %v2008
        %v2140 = vpop.f32.mrb[0].mxu0
        %v2141 = vadd.f32 %v1982, %v2140
        %v2142 = vpop.f32.mrb[0].mxu0
        %2143 = vmatprep.mubr.f32.mxu0 0.0
        %2144 = vmatmul.mubr.f32.gmra.mrb[0].mxu0 %v2011
        %v2145 = vpop.f32.mrb[0].mxu0
        %v2146 = vadd.f32 %v1982, %v2145
        %v2147 = vpop.f32.mrb[0].mxu0
        %2148 = vmatprep.mubr.f32.mxu0 0.0
        %2149 = vmatmul.mubr.f32.gmra.mrb[0].mxu0 %v2014
        %v2150 = vpop.f32.mrb[0].mxu0
        %v2151 = vadd.f32 %v1982, %v2150
        %v2152 = vpop.f32.mrb[0].mxu0
        %2153 = vmatprep.mubr.f32.mxu0 0.0
        %2154 = vmatmul.mubr.f32.gmra.mrb[0].mxu0 %v2017
        %v2155 = vpop.f32.mrb[0].mxu0
        %v2156 = vadd.f32 %v1982, %v2155
        %v2157 = vpop.f32.mrb[0].mxu0
        %2158 = vmatprep.mubr.f32.mxu0 0.0
        %2159 = vmatmul.mubr.f32.gmra.mrb[0].mxu0 %v2020
        %v2160 = vpop.f32.mrb[0].mxu0
        %v2161 = vadd.f32 %v1982, %v2160
        %v2162 = vpop.f32.mrb[0].mxu0
        %2163 = vmatprep.mubr.f32.mxu0 0.0
        %2164 = vmatmul.mubr.f32.gmra.mrb[0].mxu0 %v2023
        %v2165 = vpop.f32.mrb[0].mxu0
        %v2166 = vadd.f32 %v1982, %v2165
        %v2167 = vpop.f32.mrb[0].mxu0
        %2168 = vmatprep.mubr.f32.mxu0 0.0
        %2169 = vmatmul.mubr.f32.gmra.mrb[0].mxu0 %v2026
        %v2170 = vpop.f32.mrb[0].mxu0
        %v2171 = vadd.f32 %v1982, %v2170
        %v2172 = vpop.f32.mrb[0].mxu0
        %2173 = vmatprep.mubr.f32.mxu0 0.0
        %2174 = vmatmul.mubr.f32.gmra.mrb[0].mxu0 %v2029
        %v2175 = vpop.f32.mrb[0].mxu0
        %v2176 = vadd.f32 %v1982, %v2175
        %v2177 = vpop.f32.mrb[0].mxu0
        %2178 = vdwg.mxu0
        %vm2179 = vcmp.ge.f32.partialorder %v2101, 0.0
        %vm2180 = vcmp.ge.f32.partialorder %v2106, 0.0
        %vm2181 = vcmp.ge.f32.partialorder %v2111, 0.0
        %vm2182 = vcmp.ge.f32.partialorder %v2116, 0.0
        %vm2183 = vcmp.ge.f32.partialorder %v2121, 0.0
        %vm2184 = vcmp.ge.f32.partialorder %v2126, 0.0
        %vm2185 = vcmp.ge.f32.partialorder %v2131, 0.0
        %vm2186 = vcmp.ge.f32.partialorder %v2136, 0.0
        %vm2187 = vcmp.ge.f32.partialorder %v2141, 0.0
        %vm2188 = vcmp.ge.f32.partialorder %v2146, 0.0
        %vm2189 = vcmp.ge.f32.partialorder %v2151, 0.0
        %vm2190 = vcmp.ge.f32.partialorder %v2156, 0.0
        %vm2191 = vcmp.ge.f32.partialorder %v2161, 0.0
        %vm2192 = vcmp.ge.f32.partialorder %v2166, 0.0
        %vm2193 = vcmp.ge.f32.partialorder %v2171, 0.0
        %vm2194 = vcmp.ge.f32.partialorder %v2176, 0.0
        %v2195 = vmul.f32 %v2101, 0.01
        %v2196 = vmul.f32 %v2106, 0.01
        %v2197 = vmul.f32 %v2111, 0.01
        %v2198 = vmul.f32 %v2116, 0.01
        %v2199 = vmul.f32 %v2121, 0.01
        %v2200 = vmul.f32 %v2126, 0.01
        %v2201 = vmul.f32 %v2131, 0.01
        %v2202 = vmul.f32 %v2136, 0.01
        %v2203 = vmul.f32 %v2141, 0.01
        %v2204 = vmul.f32 %v2146, 0.01
        %v2205 = vmul.f32 %v2151, 0.01
        %v2206 = vmul.f32 %v2156, 0.01
        %v2207 = vmul.f32 %v2161, 0.01
        %v2208 = vmul.f32 %v2166, 0.01
        %v2209 = vmul.f32 %v2171, 0.01
        %v2210 = vmul.f32 %v2176, 0.01
        %v2211 = vsel %vm2179, %v2101, %v2195
        %v2212 = vsel %vm2180, %v2106, %v2196
        %v2213 = vsel %vm2181, %v2111, %v2197
        %v2214 = vsel %vm2182, %v2116, %v2198
        %v2215 = vsel %vm2183, %v2121, %v2199
        %v2216 = vsel %vm2184, %v2126, %v2200
        %v2217 = vsel %vm2185, %v2131, %v2201
        %v2218 = vsel %vm2186, %v2136, %v2202
        %v2219 = vsel %vm2187, %v2141, %v2203
        %v2220 = vsel %vm2188, %v2146, %v2204
        %v2221 = vsel %vm2189, %v2151, %v2205
        %v2222 = vsel %vm2190, %v2156, %v2206
        %v2223 = vsel %vm2191, %v2161, %v2207
        %v2224 = vsel %vm2192, %v2166, %v2208
        %v2225 = vsel %vm2193, %v2171, %v2209
        %v2226 = vsel %vm2194, %v2176, %v2210
        %vm2227 = vcmask 261120
        %v2228 = vsel %vm2227, %v2211, 0.0
        %2229 = vadd.xlane.f32.xlu0 %v2228
        %v2230 = vpop.xlane.xlu0 %2229
        %v2231 = vsel %vm2227, %v2212, 0.0
        %2232 = vadd.xlane.f32.xlu0 %v2231
        %v2233 = vpop.xlane.xlu0 %2232
        %v2234 = vsel %vm2227, %v2213, 0.0
        %2235 = vadd.xlane.f32.xlu0 %v2234
        %v2236 = vpop.xlane.xlu0 %2235
        %v2237 = vsel %vm2227, %v2214, 0.0
        %2238 = vadd.xlane.f32.xlu0 %v2237
        %v2239 = vpop.xlane.xlu0 %2238
        %v2240 = vsel %vm2227, %v2215, 0.0
        %2241 = vadd.xlane.f32.xlu0 %v2240
        %v2242 = vpop.xlane.xlu0 %2241
        %v2243 = vsel %vm2227, %v2216, 0.0
        %2244 = vadd.xlane.f32.xlu0 %v2243
        %v2245 = vpop.xlane.xlu0 %2244
        %v2246 = vsel %vm2227, %v2217, 0.0
        %2247 = vadd.xlane.f32.xlu0 %v2246
        %v2248 = vpop.xlane.xlu0 %2247
        %v2249 = vsel %vm2227, %v2218, 0.0
        %2250 = vadd.xlane.f32.xlu0 %v2249
        %v2251 = vpop.xlane.xlu0 %2250
        %v2252 = vsel %vm2227, %v2219, 0.0
        %2253 = vadd.xlane.f32.xlu0 %v2252
        %v2254 = vpop.xlane.xlu0 %2253
        %v2255 = vsel %vm2227, %v2220, 0.0
        %2256 = vadd.xlane.f32.xlu0 %v2255
        %v2257 = vpop.xlane.xlu0 %2256
        %v2258 = vsel %vm2227, %v2221, 0.0
        %2259 = vadd.xlane.f32.xlu0 %v2258
        %v2260 = vpop.xlane.xlu0 %2259
        %v2261 = vsel %vm2227, %v2222, 0.0
        %2262 = vadd.xlane.f32.xlu0 %v2261
        %v2263 = vpop.xlane.xlu0 %2262
        %v2264 = vsel %vm2227, %v2223, 0.0
        %2265 = vadd.xlane.f32.xlu0 %v2264
        %v2266 = vpop.xlane.xlu0 %2265
        %v2267 = vsel %vm2227, %v2224, 0.0
        %2268 = vadd.xlane.f32.xlu0 %v2267
        %v2269 = vpop.xlane.xlu0 %2268
        %v2270 = vsel %vm2227, %v2225, 0.0
        %2271 = vadd.xlane.f32.xlu0 %v2270
        %v2272 = vpop.xlane.xlu0 %2271
        %v2273 = vsel %vm2227, %v2226, 0.0
        %2274 = vadd.xlane.f32.xlu0 %v2273
        %v2275 = vpop.xlane.xlu0 %2274
        %v2276 = vrcp.pop 32.0
        %v2277 = vmul.f32 %v2230, %v2276
        %v2278 = vmul.f32 %v2233, %v2276
        %v2279 = vmul.f32 %v2236, %v2276
        %v2280 = vmul.f32 %v2239, %v2276
        %v2281 = vmul.f32 %v2242, %v2276
        %v2282 = vmul.f32 %v2245, %v2276
        %v2283 = vmul.f32 %v2248, %v2276
        %v2284 = vmul.f32 %v2251, %v2276
        %v2285 = vmul.f32 %v2254, %v2276
        %v2286 = vmul.f32 %v2257, %v2276
        %v2287 = vmul.f32 %v2260, %v2276
        %v2288 = vmul.f32 %v2263, %v2276
        %v2289 = vmul.f32 %v2266, %v2276
        %v2290 = vmul.f32 %v2269, %v2276
        %v2291 = vmul.f32 %v2272, %v2276
        %v2292 = vmul.f32 %v2275, %v2276
        %v2293 = vsub.f32 %v2211, %v2277
        %v2294 = vsub.f32 %v2212, %v2278
        %v2295 = vsub.f32 %v2213, %v2279
        %v2296 = vsub.f32 %v2214, %v2280
        %v2297 = vsub.f32 %v2215, %v2281
        %v2298 = vsub.f32 %v2216, %v2282
        %v2299 = vsub.f32 %v2217, %v2283
        %v2300 = vsub.f32 %v2218, %v2284
        %v2301 = vsub.f32 %v2219, %v2285
        %v2302 = vsub.f32 %v2220, %v2286
        %v2303 = vsub.f32 %v2221, %v2287
        %v2304 = vsub.f32 %v2222, %v2288
        %v2305 = vsub.f32 %v2223, %v2289
        %v2306 = vsub.f32 %v2224, %v2290
        %v2307 = vsub.f32 %v2225, %v2291
        %v2308 = vsub.f32 %v2226, %v2292
        %v2309 = vmul.f32 %v2293, %v2293
        %v2310 = vmul.f32 %v2294, %v2294
        %v2311 = vmul.f32 %v2295, %v2295
        %v2312 = vmul.f32 %v2296, %v2296
        %v2313 = vmul.f32 %v2297, %v2297
        %v2314 = vmul.f32 %v2298, %v2298
        %v2315 = vmul.f32 %v2299, %v2299
        %v2316 = vmul.f32 %v2300, %v2300
        %v2317 = vmul.f32 %v2301, %v2301
        %v2318 = vmul.f32 %v2302, %v2302
        %v2319 = vmul.f32 %v2303, %v2303
        %v2320 = vmul.f32 %v2304, %v2304
        %v2321 = vmul.f32 %v2305, %v2305
        %v2322 = vmul.f32 %v2306, %v2306
        %v2323 = vmul.f32 %v2307, %v2307
        %v2324 = vmul.f32 %v2308, %v2308
        %v2325 = vsel %vm2227, %v2309, 0.0
        %2326 = vadd.xlane.f32.xlu0 %v2325
        %v2327 = vpop.xlane.xlu0 %2326
        %v2328 = vsel %vm2227, %v2310, 0.0
        %2329 = vadd.xlane.f32.xlu0 %v2328
        %v2330 = vpop.xlane.xlu0 %2329
        %v2331 = vsel %vm2227, %v2311, 0.0
        %2332 = vadd.xlane.f32.xlu0 %v2331
        %v2333 = vpop.xlane.xlu0 %2332
        %v2334 = vsel %vm2227, %v2312, 0.0
        %2335 = vadd.xlane.f32.xlu0 %v2334
        %v2336 = vpop.xlane.xlu0 %2335
        %v2337 = vsel %vm2227, %v2313, 0.0
        %2338 = vadd.xlane.f32.xlu0 %v2337
        %v2339 = vpop.xlane.xlu0 %2338
        %v2340 = vsel %vm2227, %v2314, 0.0
        %2341 = vadd.xlane.f32.xlu0 %v2340
        %v2342 = vpop.xlane.xlu0 %2341
        %v2343 = vsel %vm2227, %v2315, 0.0
        %2344 = vadd.xlane.f32.xlu0 %v2343
        %v2345 = vpop.xlane.xlu0 %2344
        %v2346 = vsel %vm2227, %v2316, 0.0
        %2347 = vadd.xlane.f32.xlu0 %v2346
        %v2348 = vpop.xlane.xlu0 %2347
        %v2349 = vsel %vm2227, %v2317, 0.0
        %2350 = vadd.xlane.f32.xlu0 %v2349
        %v2351 = vpop.xlane.xlu0 %2350
        %v2352 = vsel %vm2227, %v2318, 0.0
        %2353 = vadd.xlane.f32.xlu0 %v2352
        %v2354 = vpop.xlane.xlu0 %2353
        %v2355 = vsel %vm2227, %v2319, 0.0
        %2356 = vadd.xlane.f32.xlu0 %v2355
        %v2357 = vpop.xlane.xlu0 %2356
        %v2358 = vsel %vm2227, %v2320, 0.0
        %2359 = vadd.xlane.f32.xlu0 %v2358
        %v2360 = vpop.xlane.xlu0 %2359
        %v2361 = vsel %vm2227, %v2321, 0.0
        %2362 = vadd.xlane.f32.xlu0 %v2361
        %v2363 = vpop.xlane.xlu0 %2362
        %v2364 = vsel %vm2227, %v2322, 0.0
        %2365 = vadd.xlane.f32.xlu0 %v2364
        %v2366 = vpop.xlane.xlu0 %2365
        %v2367 = vsel %vm2227, %v2323, 0.0
        %2368 = vadd.xlane.f32.xlu0 %v2367
        %v2369 = vpop.xlane.xlu0 %2368
        %v2370 = vsel %vm2227, %v2324, 0.0
        %2371 = vadd.xlane.f32.xlu0 %v2370
        %v2372 = vpop.xlane.xlu0 %2371
        %v2373 = vmul.f32 %v2327, %v2276
        %v2374 = vmul.f32 %v2330, %v2276
        %v2375 = vmul.f32 %v2333, %v2276
        %v2376 = vmul.f32 %v2336, %v2276
        %v2377 = vmul.f32 %v2339, %v2276
        %v2378 = vmul.f32 %v2342, %v2276
        %v2379 = vmul.f32 %v2345, %v2276
        %v2380 = vmul.f32 %v2348, %v2276
        %v2381 = vmul.f32 %v2351, %v2276
        %v2382 = vmul.f32 %v2354, %v2276
        %v2383 = vmul.f32 %v2357, %v2276
        %v2384 = vmul.f32 %v2360, %v2276
        %v2385 = vmul.f32 %v2363, %v2276
        %v2386 = vmul.f32 %v2366, %v2276
        %v2387 = vmul.f32 %v2369, %v2276
        %v2388 = vmul.f32 %v2372, %v2276
        %v2389 = vadd.f32 %v2373, 1e-06
        %v2390 = vadd.f32 %v2374, 1e-06
        %v2391 = vadd.f32 %v2375, 1e-06
        %v2392 = vadd.f32 %v2376, 1e-06
        %v2393 = vadd.f32 %v2377, 1e-06
        %v2394 = vadd.f32 %v2378, 1e-06
        %v2395 = vadd.f32 %v2379, 1e-06
        %v2396 = vadd.f32 %v2380, 1e-06
        %v2397 = vadd.f32 %v2381, 1e-06
        %v2398 = vadd.f32 %v2382, 1e-06
        %v2399 = vadd.f32 %v2383, 1e-06
        %v2400 = vadd.f32 %v2384, 1e-06
        %v2401 = vadd.f32 %v2385, 1e-06
        %v2402 = vadd.f32 %v2386, 1e-06
        %v2403 = vadd.f32 %v2387, 1e-06
        %v2404 = vadd.f32 %v2388, 1e-06
        %v2405 = vrsqrt.pop %v2389
        %v2406 = vrsqrt.pop %v2390
        %v2407 = vrsqrt.pop %v2391
        %v2408 = vrsqrt.pop %v2392
        %v2409 = vrsqrt.pop %v2393
        %v2410 = vrsqrt.pop %v2394
        %v2411 = vrsqrt.pop %v2395
        %v2412 = vrsqrt.pop %v2396
        %v2413 = vrsqrt.pop %v2397
        %v2414 = vrsqrt.pop %v2398
        %v2415 = vrsqrt.pop %v2399
        %v2416 = vrsqrt.pop %v2400
        %v2417 = vrsqrt.pop %v2401
        %v2418 = vrsqrt.pop %v2402
        %v2419 = vrsqrt.pop %v2403
        %v2420 = vrsqrt.pop %v2404
        %v2421 = vmul.f32 %v2293, %v2405
        %v2422 = vmul.f32 %v2294, %v2406
        %v2423 = vmul.f32 %v2295, %v2407
        %v2424 = vmul.f32 %v2296, %v2408
        %v2425 = vmul.f32 %v2297, %v2409
        %v2426 = vmul.f32 %v2298, %v2410
        %v2427 = vmul.f32 %v2299, %v2411
        %v2428 = vmul.f32 %v2300, %v2412
        %v2429 = vmul.f32 %v2301, %v2413
        %v2430 = vmul.f32 %v2302, %v2414
        %v2431 = vmul.f32 %v2303, %v2415
        %v2432 = vmul.f32 %v2304, %v2416
        %v2433 = vmul.f32 %v2305, %v2417
        %v2434 = vmul.f32 %v2306, %v2418
        %v2435 = vmul.f32 %v2307, %v2419
        %v2436 = vmul.f32 %v2308, %v2420
        %v2437 = vlaneseq
        %v2438 = vshrl.u32 %v2437, 7
        %v2439 = vsub.s32 6, %v2438
        %v2440 = vrot.slane %v297, %v2439
        %v2441 = vmul.f32 %v2421, %v2440
        %v2442 = vmul.f32 %v2422, %v2440
        %v2443 = vmul.f32 %v2423, %v2440
        %v2444 = vmul.f32 %v2424, %v2440
        %v2445 = vmul.f32 %v2425, %v2440
        %v2446 = vmul.f32 %v2426, %v2440
        %v2447 = vmul.f32 %v2427, %v2440
        %v2448 = vmul.f32 %v2428, %v2440
        %v2449 = vmul.f32 %v2429, %v2440
        %v2450 = vmul.f32 %v2430, %v2440
        %v2451 = vmul.f32 %v2431, %v2440
        %v2452 = vmul.f32 %v2432, %v2440
        %v2453 = vmul.f32 %v2433, %v2440
        %v2454 = vmul.f32 %v2434, %v2440
        %v2455 = vmul.f32 %v2435, %v2440
        %v2456 = vmul.f32 %v2436, %v2440
        %v2457 = vlaneseq
        %v2458 = vshrl.u32 %v2457, 7
        %v2459 = vsub.s32 7, %v2458
        %v2460 = vrot.slane %v297, %v2459
        %v2461 = vadd.f32 %v2441, %v2460
        %v2462 = vadd.f32 %v2442, %v2460
        %v2463 = vadd.f32 %v2443, %v2460
        %v2464 = vadd.f32 %v2444, %v2460
        %v2465 = vadd.f32 %v2445, %v2460
        %v2466 = vadd.f32 %v2446, %v2460
        %v2467 = vadd.f32 %v2447, %v2460
        %v2468 = vadd.f32 %v2448, %v2460
        %v2469 = vadd.f32 %v2449, %v2460
        %v2470 = vadd.f32 %v2450, %v2460
        %v2471 = vadd.f32 %v2451, %v2460
        %v2472 = vadd.f32 %v2452, %v2460
        %v2473 = vadd.f32 %v2453, %v2460
        %v2474 = vadd.f32 %v2454, %v2460
        %v2475 = vadd.f32 %v2455, %v2460
        %v2476 = vadd.f32 %v2456, %v2460
        %v2477 = vld [vmem:[%s5] sm:$0xff]
        %v2478 = vld [vmem:[%s5 + $0x8] sm:$0xff]
        %v2479 = vld [vmem:[%s5 + $0x10] sm:$0xff]
        %v2480 = vld [vmem:[%s5 + $0x18] sm:$0xff]
        %v2481 = vlaneseq
        %v2482 = vshrl.u32 %v2481, 7
        %v2483 = vsub.s32 0, %v2482
        %v2484 = vrot.slane %v298, %v2483
        %v2486 = vsel %vm2227, %v2461, 0
        %v2489 = vsel %vm2227, %v2462, 0
        %v2492 = vsel %vm2227, %v2463, 0
        %v2495 = vsel %vm2227, %v2464, 0
        %v2498 = vsel %vm2227, %v2465, 0
        %v2501 = vsel %vm2227, %v2466, 0
        %v2504 = vsel %vm2227, %v2467, 0
        %v2507 = vsel %vm2227, %v2468, 0
        %v2510 = vsel %vm2227, %v2469, 0
        %v2513 = vsel %vm2227, %v2470, 0
        %v2516 = vsel %vm2227, %v2471, 0
        %v2519 = vsel %vm2227, %v2472, 0
        %v2522 = vsel %vm2227, %v2473, 0
        %v2525 = vsel %vm2227, %v2474, 0
        %v2528 = vsel %vm2227, %v2475, 0
        %v2531 = vsel %vm2227, %v2476, 0
        %2533 = vmatprep.subr.mxu0 0.0
        %2534 = vmatpush1.msra.mxu0 %v2477
        %2535 = vmatprep.subr.mxu0 0.0
        %2536 = vmatpush1.msra.mxu0 %v2478
        %2537 = vmatprep.subr.mxu0 0.0
        %2538 = vmatpush1.msra.mxu0 %v2479
        %2539 = vmatprep.subr.mxu0 0.0
        %2540 = vmatpush1.msra.mxu0 %v2480
        %2541 = vmatprep.subr.mxu0 0.0
        %2542 = vmatpush1.msra.mxu0 0.0
        %2543 = vmatprep.subr.mxu0 0.0
        %2544 = vmatpush1.msra.mxu0 0.0
        %2545 = vmatprep.subr.mxu0 0.0
        %2546 = vmatpush1.msra.mxu0 0.0
        %2547 = vmatprep.subr.mxu0 0.0
        %2548 = vmatpush1.msra.mxu0 0.0
        %2549 = vmatprep.subr.mxu0 0.0
        %2550 = vmatpush1.msra.mxu0 0.0
        %2551 = vmatprep.subr.mxu0 0.0
        %2552 = vmatpush1.msra.mxu0 0.0
        %2553 = vmatprep.subr.mxu0 0.0
        %2554 = vmatpush1.msra.mxu0 0.0
        %2555 = vmatprep.subr.mxu0 0.0
        %2556 = vmatpush1.msra.mxu0 0.0
        %2557 = vmatprep.subr.mxu0 0.0
        %2558 = vmatpush1.msra.mxu0 0.0
        %2559 = vmatprep.subr.mxu0 0.0
        %2560 = vmatpush1.msra.mxu0 0.0
        %2561 = vmatprep.subr.mxu0 0.0
        %2562 = vmatpush1.msra.mxu0 0.0
        %2563 = vmatprep.subr.mxu0 0.0
        %2564 = vmatpush1.msra.mxu0 0.0
        %2565 = vmatprep.subr.mxu0 0.0
        %2566 = vmatpush1.msra.mxu0 0.0
        %2567 = vmatprep.subr.mxu0 0.0
        %2568 = vmatpush1.msra.mxu0 0.0
        %2569 = vmatprep.subr.mxu0 0.0
        %2570 = vmatpush1.msra.mxu0 0.0
        %2571 = vmatprep.subr.mxu0 0.0
        %2572 = vmatpush1.msra.mxu0 0.0
        %2573 = vmatprep.subr.mxu0 0.0
        %2574 = vmatpush1.msra.mxu0 0.0
        %2575 = vmatprep.subr.mxu0 0.0
        %2576 = vmatpush1.msra.mxu0 0.0
        %2577 = vmatprep.subr.mxu0 0.0
        %2578 = vmatpush1.msra.mxu0 0.0
        %2579 = vmatprep.subr.mxu0 0.0
        %2580 = vmatpush1.msra.mxu0 0.0
        %2581 = vmatprep.subr.mxu0 0.0
        %2582 = vmatpush1.msra.mxu0 0.0
        %2583 = vmatprep.subr.mxu0 0.0
        %2584 = vmatpush1.msra.mxu0 0.0
        %2585 = vmatprep.subr.mxu0 0.0
        %2586 = vmatpush1.msra.mxu0 0.0
        %2587 = vmatprep.subr.mxu0 0.0
        %2588 = vmatpush1.msra.mxu0 0.0
        %2589 = vmatprep.subr.mxu0 0.0
        %2590 = vmatpush1.msra.mxu0 0.0
        %2591 = vmatprep.subr.mxu0 0.0
        %2592 = vmatpush1.msra.mxu0 0.0
        %2593 = vmatprep.subr.mxu0 0.0
        %2594 = vmatpush1.msra.mxu0 0.0
        %2595 = vmatprep.subr.mxu0 0.0
        %2596 = vmatpush1.msra.mxu0 0.0
        %2597 = vmatprep.mubr.f32.mxu0 0.0
        %2598 = vmatmul.mubr.f32.gmra.mrb[0].mxu0 %v2486
        %v2599 = vpop.f32.mrb[0].mxu0
        %v2600 = vadd.f32 %v2484, %v2599
        %v2601 = vpop.f32.mrb[0].mxu0
        %2602 = vmatprep.mubr.f32.mxu0 0.0
        %2603 = vmatmul.mubr.f32.gmra.mrb[0].mxu0 %v2489
        %v2604 = vpop.f32.mrb[0].mxu0
        %v2605 = vadd.f32 %v2484, %v2604
        %v2606 = vpop.f32.mrb[0].mxu0
        %2607 = vmatprep.mubr.f32.mxu0 0.0
        %2608 = vmatmul.mubr.f32.gmra.mrb[0].mxu0 %v2492
        %v2609 = vpop.f32.mrb[0].mxu0
        %v2610 = vadd.f32 %v2484, %v2609
        %v2611 = vpop.f32.mrb[0].mxu0
        %2612 = vmatprep.mubr.f32.mxu0 0.0
        %2613 = vmatmul.mubr.f32.gmra.mrb[0].mxu0 %v2495
        %v2614 = vpop.f32.mrb[0].mxu0
        %v2615 = vadd.f32 %v2484, %v2614
        %v2616 = vpop.f32.mrb[0].mxu0
        %2617 = vmatprep.mubr.f32.mxu0 0.0
        %2618 = vmatmul.mubr.f32.gmra.mrb[0].mxu0 %v2498
        %v2619 = vpop.f32.mrb[0].mxu0
        %v2620 = vadd.f32 %v2484, %v2619
        %v2621 = vpop.f32.mrb[0].mxu0
        %2622 = vmatprep.mubr.f32.mxu0 0.0
        %2623 = vmatmul.mubr.f32.gmra.mrb[0].mxu0 %v2501
        %v2624 = vpop.f32.mrb[0].mxu0
        %v2625 = vadd.f32 %v2484, %v2624
        %v2626 = vpop.f32.mrb[0].mxu0
        %2627 = vmatprep.mubr.f32.mxu0 0.0
        %2628 = vmatmul.mubr.f32.gmra.mrb[0].mxu0 %v2504
        %v2629 = vpop.f32.mrb[0].mxu0
        %v2630 = vadd.f32 %v2484, %v2629
        %v2631 = vpop.f32.mrb[0].mxu0
        %2632 = vmatprep.mubr.f32.mxu0 0.0
        %2633 = vmatmul.mubr.f32.gmra.mrb[0].mxu0 %v2507
        %v2634 = vpop.f32.mrb[0].mxu0
        %v2635 = vadd.f32 %v2484, %v2634
        %v2636 = vpop.f32.mrb[0].mxu0
        %2637 = vmatprep.mubr.f32.mxu0 0.0
        %2638 = vmatmul.mubr.f32.gmra.mrb[0].mxu0 %v2510
        %v2639 = vpop.f32.mrb[0].mxu0
        %v2640 = vadd.f32 %v2484, %v2639
        %v2641 = vpop.f32.mrb[0].mxu0
        %2642 = vmatprep.mubr.f32.mxu0 0.0
        %2643 = vmatmul.mubr.f32.gmra.mrb[0].mxu0 %v2513
        %v2644 = vpop.f32.mrb[0].mxu0
        %v2645 = vadd.f32 %v2484, %v2644
        %v2646 = vpop.f32.mrb[0].mxu0
        %2647 = vmatprep.mubr.f32.mxu0 0.0
        %2648 = vmatmul.mubr.f32.gmra.mrb[0].mxu0 %v2516
        %v2649 = vpop.f32.mrb[0].mxu0
        %v2650 = vadd.f32 %v2484, %v2649
        %v2651 = vpop.f32.mrb[0].mxu0
        %2652 = vmatprep.mubr.f32.mxu0 0.0
        %2653 = vmatmul.mubr.f32.gmra.mrb[0].mxu0 %v2519
        %v2654 = vpop.f32.mrb[0].mxu0
        %v2655 = vadd.f32 %v2484, %v2654
        %v2656 = vpop.f32.mrb[0].mxu0
        %2657 = vmatprep.mubr.f32.mxu0 0.0
        %2658 = vmatmul.mubr.f32.gmra.mrb[0].mxu0 %v2522
        %v2659 = vpop.f32.mrb[0].mxu0
        %v2660 = vadd.f32 %v2484, %v2659
        %v2661 = vpop.f32.mrb[0].mxu0
        %2662 = vmatprep.mubr.f32.mxu0 0.0
        %2663 = vmatmul.mubr.f32.gmra.mrb[0].mxu0 %v2525
        %v2664 = vpop.f32.mrb[0].mxu0
        %v2665 = vadd.f32 %v2484, %v2664
        %v2666 = vpop.f32.mrb[0].mxu0
        %2667 = vmatprep.mubr.f32.mxu0 0.0
        %2668 = vmatmul.mubr.f32.gmra.mrb[0].mxu0 %v2528
        %v2669 = vpop.f32.mrb[0].mxu0
        %v2670 = vadd.f32 %v2484, %v2669
        %v2671 = vpop.f32.mrb[0].mxu0
        %2672 = vmatprep.mubr.f32.mxu0 0.0
        %2673 = vmatmul.mubr.f32.gmra.mrb[0].mxu0 %v2531
        %v2674 = vpop.f32.mrb[0].mxu0
        %v2675 = vadd.f32 %v2484, %v2674
        %v2676 = vpop.f32.mrb[0].mxu0
        %2677 = vdwg.mxu0
        %vm2678 = vcmask 130048
        %v2679 = vsel %vm2678, %v2600, 0.0
        %v2680 = vrot.slane %v2679, 4
        %v2681 = vadd.f32 %v2679, %v2680
        %v2682 = vrot.slane %v2681, 2
        %v2683 = vadd.f32 %v2681, %v2682
        %v2684 = vrot.slane %v2683, 1
        %v2685 = vadd.f32 %v2683, %v2684
        %v2686 = vsel %vm2678, %v2605, 0.0
        %v2687 = vrot.slane %v2686, 4
        %v2688 = vadd.f32 %v2686, %v2687
        %v2689 = vrot.slane %v2688, 2
        %v2690 = vadd.f32 %v2688, %v2689
        %v2691 = vrot.slane %v2690, 1
        %v2692 = vadd.f32 %v2690, %v2691
        %v2693 = vsel %vm2678, %v2610, 0.0
        %v2694 = vrot.slane %v2693, 4
        %v2695 = vadd.f32 %v2693, %v2694
        %v2696 = vrot.slane %v2695, 2
        %v2697 = vadd.f32 %v2695, %v2696
        %v2698 = vrot.slane %v2697, 1
        %v2699 = vadd.f32 %v2697, %v2698
        %v2700 = vsel %vm2678, %v2615, 0.0
        %v2701 = vrot.slane %v2700, 4
        %v2702 = vadd.f32 %v2700, %v2701
        %v2703 = vrot.slane %v2702, 2
        %v2704 = vadd.f32 %v2702, %v2703
        %v2705 = vrot.slane %v2704, 1
        %v2706 = vadd.f32 %v2704, %v2705
        %v2707 = vsel %vm2678, %v2620, 0.0
        %v2708 = vrot.slane %v2707, 4
        %v2709 = vadd.f32 %v2707, %v2708
        %v2710 = vrot.slane %v2709, 2
        %v2711 = vadd.f32 %v2709, %v2710
        %v2712 = vrot.slane %v2711, 1
        %v2713 = vadd.f32 %v2711, %v2712
        %v2714 = vsel %vm2678, %v2625, 0.0
        %v2715 = vrot.slane %v2714, 4
        %v2716 = vadd.f32 %v2714, %v2715
        %v2717 = vrot.slane %v2716, 2
        %v2718 = vadd.f32 %v2716, %v2717
        %v2719 = vrot.slane %v2718, 1
        %v2720 = vadd.f32 %v2718, %v2719
        %v2721 = vsel %vm2678, %v2630, 0.0
        %v2722 = vrot.slane %v2721, 4
        %v2723 = vadd.f32 %v2721, %v2722
        %v2724 = vrot.slane %v2723, 2
        %v2725 = vadd.f32 %v2723, %v2724
        %v2726 = vrot.slane %v2725, 1
        %v2727 = vadd.f32 %v2725, %v2726
        %v2728 = vsel %vm2678, %v2635, 0.0
        %v2729 = vrot.slane %v2728, 4
        %v2730 = vadd.f32 %v2728, %v2729
        %v2731 = vrot.slane %v2730, 2
        %v2732 = vadd.f32 %v2730, %v2731
        %v2733 = vrot.slane %v2732, 1
        %v2734 = vadd.f32 %v2732, %v2733
        %v2735 = vsel %vm2678, %v2640, 0.0
        %v2736 = vrot.slane %v2735, 4
        %v2737 = vadd.f32 %v2735, %v2736
        %v2738 = vrot.slane %v2737, 2
        %v2739 = vadd.f32 %v2737, %v2738
        %v2740 = vrot.slane %v2739, 1
        %v2741 = vadd.f32 %v2739, %v2740
        %v2742 = vsel %vm2678, %v2645, 0.0
        %v2743 = vrot.slane %v2742, 4
        %v2744 = vadd.f32 %v2742, %v2743
        %v2745 = vrot.slane %v2744, 2
        %v2746 = vadd.f32 %v2744, %v2745
        %v2747 = vrot.slane %v2746, 1
        %v2748 = vadd.f32 %v2746, %v2747
        %v2749 = vsel %vm2678, %v2650, 0.0
        %v2750 = vrot.slane %v2749, 4
        %v2751 = vadd.f32 %v2749, %v2750
        %v2752 = vrot.slane %v2751, 2
        %v2753 = vadd.f32 %v2751, %v2752
        %v2754 = vrot.slane %v2753, 1
        %v2755 = vadd.f32 %v2753, %v2754
        %v2756 = vsel %vm2678, %v2655, 0.0
        %v2757 = vrot.slane %v2756, 4
        %v2758 = vadd.f32 %v2756, %v2757
        %v2759 = vrot.slane %v2758, 2
        %v2760 = vadd.f32 %v2758, %v2759
        %v2761 = vrot.slane %v2760, 1
        %v2762 = vadd.f32 %v2760, %v2761
        %v2763 = vsel %vm2678, %v2660, 0.0
        %v2764 = vrot.slane %v2763, 4
        %v2765 = vadd.f32 %v2763, %v2764
        %v2766 = vrot.slane %v2765, 2
        %v2767 = vadd.f32 %v2765, %v2766
        %v2768 = vrot.slane %v2767, 1
        %v2769 = vadd.f32 %v2767, %v2768
        %v2770 = vsel %vm2678, %v2665, 0.0
        %v2771 = vrot.slane %v2770, 4
        %v2772 = vadd.f32 %v2770, %v2771
        %v2773 = vrot.slane %v2772, 2
        %v2774 = vadd.f32 %v2772, %v2773
        %v2775 = vrot.slane %v2774, 1
        %v2776 = vadd.f32 %v2774, %v2775
        %v2777 = vsel %vm2678, %v2670, 0.0
        %v2778 = vrot.slane %v2777, 4
        %v2779 = vadd.f32 %v2777, %v2778
        %v2780 = vrot.slane %v2779, 2
        %v2781 = vadd.f32 %v2779, %v2780
        %v2782 = vrot.slane %v2781, 1
        %v2783 = vadd.f32 %v2781, %v2782
        %v2784 = vsel %vm2678, %v2675, 0.0
        %v2785 = vrot.slane %v2784, 4
        %v2786 = vadd.f32 %v2784, %v2785
        %v2787 = vrot.slane %v2786, 2
        %v2788 = vadd.f32 %v2786, %v2787
        %v2789 = vrot.slane %v2788, 1
        %v2790 = vadd.f32 %v2788, %v2789
        %v2791 = vld [vmem:[%s6] sm:$0xff]
        %v2792 = vld [vmem:[%s6 + $0x8] sm:$0xff]
        %v2793 = vlaneseq
        %v2794 = vshrl.u32 %v2793, 7
        %v2795 = vsub.s32 1, %v2794
        %v2796 = vrot.slane %v298, %v2795
        %vm2813 = vcmask 1041409
        %v2814 = vsel %vm2813, %v2692, %v2685
        %vm2815 = vcmask 1042434
        %v2816 = vsel %vm2815, %v2699, %v2814
        %vm2817 = vcmask 1043459
        %v2818 = vsel %vm2817, %v2706, %v2816
        %vm2819 = vcmask 1044484
        %v2820 = vsel %vm2819, %v2713, %v2818
        %vm2821 = vcmask 1045509
        %v2822 = vsel %vm2821, %v2720, %v2820
        %vm2823 = vcmask 1046534
        %v2824 = vsel %vm2823, %v2727, %v2822
        %vm2825 = vcmask 1047559
        %v2826 = vsel %vm2825, %v2734, %v2824
        %v2827 = vsel %vm2813, %v2748, %v2741
        %v2828 = vsel %vm2815, %v2755, %v2827
        %v2829 = vsel %vm2817, %v2762, %v2828
        %v2830 = vsel %vm2819, %v2769, %v2829
        %v2831 = vsel %vm2821, %v2776, %v2830
        %v2832 = vsel %vm2823, %v2783, %v2831
        %v2833 = vsel %vm2825, %v2790, %v2832
        %v2834 = vsel %vm2678, %v2826, 0
        %v2836 = vsel %vm2678, %v2833, 0
        %2838 = vmatprep.subr.mxu0 0.0
        %2839 = vmatpush1.msra.mxu0 %v2791
        %2840 = vmatprep.subr.mxu0 0.0
        %2841 = vmatpush1.msra.mxu0 %v2792
        %2842 = vmatprep.subr.mxu0 0.0
        %2843 = vmatpush1.msra.mxu0 0.0
        %2844 = vmatprep.subr.mxu0 0.0
        %2845 = vmatpush1.msra.mxu0 0.0
        %2846 = vmatprep.subr.mxu0 0.0
        %2847 = vmatpush1.msra.mxu0 0.0
        %2848 = vmatprep.subr.mxu0 0.0
        %2849 = vmatpush1.msra.mxu0 0.0
        %2850 = vmatprep.subr.mxu0 0.0
        %2851 = vmatpush1.msra.mxu0 0.0
        %2852 = vmatprep.subr.mxu0 0.0
        %2853 = vmatpush1.msra.mxu0 0.0
        %2854 = vmatprep.subr.mxu0 0.0
        %2855 = vmatpush1.msra.mxu0 0.0
        %2856 = vmatprep.subr.mxu0 0.0
        %2857 = vmatpush1.msra.mxu0 0.0
        %2858 = vmatprep.subr.mxu0 0.0
        %2859 = vmatpush1.msra.mxu0 0.0
        %2860 = vmatprep.subr.mxu0 0.0
        %2861 = vmatpush1.msra.mxu0 0.0
        %2862 = vmatprep.subr.mxu0 0.0
        %2863 = vmatpush1.msra.mxu0 0.0
        %2864 = vmatprep.subr.mxu0 0.0
        %2865 = vmatpush1.msra.mxu0 0.0
        %2866 = vmatprep.subr.mxu0 0.0
        %2867 = vmatpush1.msra.mxu0 0.0
        %2868 = vmatprep.subr.mxu0 0.0
        %2869 = vmatpush1.msra.mxu0 0.0
        %2870 = vmatprep.subr.mxu0 0.0
        %2871 = vmatpush1.msra.mxu0 0.0
        %2872 = vmatprep.subr.mxu0 0.0
        %2873 = vmatpush1.msra.mxu0 0.0
        %2874 = vmatprep.subr.mxu0 0.0
        %2875 = vmatpush1.msra.mxu0 0.0
        %2876 = vmatprep.subr.mxu0 0.0
        %2877 = vmatpush1.msra.mxu0 0.0
        %2878 = vmatprep.subr.mxu0 0.0
        %2879 = vmatpush1.msra.mxu0 0.0
        %2880 = vmatprep.subr.mxu0 0.0
        %2881 = vmatpush1.msra.mxu0 0.0
        %2882 = vmatprep.subr.mxu0 0.0
        %2883 = vmatpush1.msra.mxu0 0.0
        %2884 = vmatprep.subr.mxu0 0.0
        %2885 = vmatpush1.msra.mxu0 0.0
        %2886 = vmatprep.subr.mxu0 0.0
        %2887 = vmatpush1.msra.mxu0 0.0
        %2888 = vmatprep.subr.mxu0 0.0
        %2889 = vmatpush1.msra.mxu0 0.0
        %2890 = vmatprep.subr.mxu0 0.0
        %2891 = vmatpush1.msra.mxu0 0.0
        %2892 = vmatprep.subr.mxu0 0.0
        %2893 = vmatpush1.msra.mxu0 0.0
        %2894 = vmatprep.subr.mxu0 0.0
        %2895 = vmatpush1.msra.mxu0 0.0
        %2896 = vmatprep.subr.mxu0 0.0
        %2897 = vmatpush1.msra.mxu0 0.0
        %2898 = vmatprep.subr.mxu0 0.0
        %2899 = vmatpush1.msra.mxu0 0.0
        %2900 = vmatprep.subr.mxu0 0.0
        %2901 = vmatpush1.msra.mxu0 0.0
        %2902 = vmatprep.mubr.f32.mxu0 0.0
        %2903 = vmatmul.mubr.f32.gmra.mrb[0].mxu0 %v2834
        %v2904 = vpop.f32.mrb[0].mxu0
        %v2905 = vadd.f32 %v2796, %v2904
        %v2906 = vpop.f32.mrb[0].mxu0
        %2907 = vmatprep.mubr.f32.mxu0 0.0
        %2908 = vmatmul.mubr.f32.gmra.mrb[0].mxu0 %v2836
        %v2909 = vpop.f32.mrb[0].mxu0
        %v2910 = vadd.f32 %v2796, %v2909
        %v2911 = vpop.f32.mrb[0].mxu0
        %2912 = vdwg.mxu0
        %2913 = vst [vmem:[%s272] sm:$0xff] %v2905
        %2914 = vst [vmem:[%s272 + $0x8] sm:$0xff] %v2910
        %s2915 = sand.u32 %s181, 1
        %s2916 = scalar_lea.sflag [#allocation3], %s2915
        %s2917 = sand.u32 %s181, 1
        %s2918 = smul.addr %s2917, 16
        %s2919 = scalar_lea.vmem [#allocation2], %s2918
        // Predicated region
        $region49: #{tpu_custom_call.1} parent=47 // pred_check
          %p2920 = pneg %p191
        $region50: #{tpu_custom_call.1} parent=47 // pred_check_branch
          %2922 = sbr.rel (%p2920) target = $region52
        $region51: #{tpu_custom_call.1} parent=47 // pred_region
          %s2923 = smul.u32 2, %s21
          %s2925 = ssub.s32 256, 256
          %2926 = vsyncadd %s2916, %s2925
          %s2927 = smul.addr %s2923, 128
          %s2928 = scalar_lea.hbm %s7, %s2927
          %s2929 = sshll.u32 %s2919, 4
          %s2930 = int_to_ptr.vmem [resolvable:$true] %s2929
          %2935 = dma.vmem_to_hbm [thread:$0]  %s2930, 256, %s2928, %s2916, 128, 128, 8
        $region52: #{tpu_custom_call.1} parent=47 // pred_fallthru
          _
      $region48: #{tpu_custom_call.1} parent=5 // pred_fallthru
        _
      %p2936 = scmp.le.s32.totalorder 2, %s16
      // Predicated region
      $region53: #{tpu_custom_call.1} parent=5 // pred_check
        %p2937 = pneg %p2936
      $region54: #{tpu_custom_call.1} parent=5 // pred_check_branch
        %2939 = sbr.rel (%p2937) target = $region56
      $region55: #{tpu_custom_call.1} parent=5 // pred_region
        %s2940 = ssub.s32 %s16, 2
        // Predicated region
        $region57: #{tpu_custom_call.1} parent=55 // pred_check
          %p2941 = pneg %p197
        $region58: #{tpu_custom_call.1} parent=55 // pred_check_branch
          %2943 = sbr.rel (%p2941) target = $region60
        $region59: #{tpu_custom_call.1} parent=55 // pred_region
          %s2944 = sand.u32 %s182, 1
          %s2945 = scalar_lea.sflag [#allocation3], %s2944
          %s2946 = sand.u32 %s182, 1
          %s2947 = smul.addr %s2946, 16
          %s2948 = scalar_lea.vmem [#allocation2], %s2947
          %2949 = dma.done %s2945, 256
        $region60: #{tpu_custom_call.1} parent=55 // pred_fallthru
          _
      $region56: #{tpu_custom_call.1} parent=5 // pred_fallthru
        _
    $region6: #{tpu_custom_call.1} parent=1 // loop_footer
      %s20 = sadd.s32 1, %s16
    $region7: #{tpu_custom_call.1} parent=1 // loop_footer_branch
      %15 = sbr.rel target = $region3
    $region8: #{tpu_custom_call.1} parent=1 // loop_exit
      _
    %2950 = vsyncpa [#allocation3], 1
    %s2951 = scalar_lea.sflag [#allocation3], 1
    %2952 = vsyncpa %s2951, 1

</llo_original>
